<compile_context>
chip_gen: v6e
topology: v6e:2x2x1
jax: 0.10.0
libtpu: 0.0.40
codegen_flags: <defaults>
</compile_context>

<pallas_src>
import functools

import jax
import jax.numpy as jnp
from jax import lax
from jax.experimental import pallas as pl
from jax.experimental.pallas import tpu as pltpu

EPS = 1e-5  # nn.InstanceNorm2d default (affine=False, biased variance)


def _resnet_block_kernel(x_ref, w1_ref, b1_ref, w2_ref, b2_ref, o_ref, pad_ref,
                         *, compute_dtype):
    # x_ref  : (1, H, W, C)   input (residual source, pad done in-kernel)
    # w*_ref : (9*C, C)       conv weights, HWIO flattened to (kh, kw, cin) rows
    # b*_ref : (1, C)         conv biases
    # o_ref  : (1, H, W, C)
    # pad_ref: (H+2, W+2, C)  f32 VMEM scratch, reused for both reflection pads
    _, H, W, C = x_ref.shape
    HW = H * W

    def reflect_pad_into(val_hwc):
        # ReflectionPad2d(1): write interior, then reflect rows/cols in place.
        pad_ref[1:H + 1, 1:W + 1, :] = val_hwc
        # top / bottom padded rows reflect original rows 1 and H-2
        pad_ref[0:1, 1:W + 1, :] = pad_ref[2:3, 1:W + 1, :]
        pad_ref[H + 1:H + 2, 1:W + 1, :] = pad_ref[H - 1:H, 1:W + 1, :]
        # left / right padded columns (incl. corners) reflect padded cols 2, W-1
        pad_ref[:, 0:1, :] = pad_ref[:, 2:3, :]
        pad_ref[:, W + 1:W + 2, :] = pad_ref[:, W - 1:W, :]

    def conv3x3(w_flat, b):
        # im2col: single deep matmul (H*W, 9C) @ (9C, C), f32 accumulation.
        pad = pad_ref[...]
        cols = [pad[kh:kh + H, kw:kw + W, :].reshape(HW, C)
                for kh in range(3) for kw in range(3)]
        patches = jnp.concatenate(cols, axis=-1).astype(compute_dtype)
        y = jnp.dot(patches, w_flat, preferred_element_type=jnp.float32)
        return y + b

    def instance_norm(y):
        # fused single-pass stats: biased var = E[y^2] - mu^2 (all f32)
        mu = jnp.mean(y, axis=0, keepdims=True)
        m2 = jnp.mean(y * y, axis=0, keepdims=True)
        var = m2 - mu * mu
        return (y - mu) * lax.rsqrt(var + EPS)

    x = x_ref[0].astype(jnp.float32)                       # (H, W, C)
    w1 = w1_ref[...]
    w2 = w2_ref[...]
    b1 = b1_ref[...].astype(jnp.float32)                   # (1, C)
    b2 = b2_ref[...].astype(jnp.float32)

    # --- block 1: reflection pad -> conv3x3 -> instance norm -> ReLU ---
    reflect_pad_into(x)
    y1 = jnp.maximum(instance_norm(conv3x3(w1, b1)), 0.0)   # (H*W, C)

    # --- block 2: reflection pad -> conv3x3 -> instance norm ---
    reflect_pad_into(y1.reshape(H, W, C))
    y2 = instance_norm(conv3x3(w2, b2))                     # (H*W, C)

    # --- residual add ---
    out = (y2 + x.reshape(HW, C)).reshape(1, H, W, C)
    o_ref[...] = out.astype(o_ref.dtype)


def resnet_block(x_nchw, w1, b1, w2, b2, *, compute_dtype=jnp.float32):
    """ResnetBlock forward. x_nchw: (N,C,H,W); w*: (3,3,C,C) HWIO; b*: (C,)."""
    x = jnp.transpose(x_nchw, (0, 2, 3, 1))  # NCHW -> NHWC (C = lane dim)
    N, H, W, C = x.shape

    # Flatten HWIO (3,3,C,C) -> (9C, C); row order (kh, kw, cin) matches im2col.
    w1f = w1.reshape(9 * C, C).astype(compute_dtype)
    w2f = w2.reshape(9 * C, C).astype(compute_dtype)

    kernel = functools.partial(_resnet_block_kernel, compute_dtype=compute_dtype)

    flops = int(N * 2 * (2 * H * W * (9 * C) * C))           # two 3x3 convs
    bytes_accessed = int(4 * (2 * N * H * W * C) + 2 * 9 * C * C * jnp.dtype(compute_dtype).itemsize + 2 * 4 * C)
    cost = pl.CostEstimate(flops=flops, transcendentals=int(2 * N * C),
                           bytes_accessed=bytes_accessed)

    out = pl.pallas_call(
        kernel,
        out_shape=jax.ShapeDtypeStruct((N, H, W, C), x.dtype),
        grid_spec=pltpu.PrefetchScalarGridSpec(
            num_scalar_prefetch=0,
            grid=(N,),
            in_specs=[
                pl.BlockSpec((1, H, W, C), lambda n: (n, 0, 0, 0)),
                pl.BlockSpec((9 * C, C), lambda n: (0, 0)),
                pl.BlockSpec((1, C), lambda n: (0, 0)),
                pl.BlockSpec((9 * C, C), lambda n: (0, 0)),
                pl.BlockSpec((1, C), lambda n: (0, 0)),
            ],
            out_specs=pl.BlockSpec((1, H, W, C), lambda n: (n, 0, 0, 0)),
            scratch_shapes=[pltpu.VMEM((H + 2, W + 2, C), jnp.float32)],
        ),
        compiler_params=pltpu.CompilerParams(
            dimension_semantics=("parallel",),
            vmem_limit_bytes=64 * 1024 * 1024,
        ),
        cost_estimate=cost,
    )(x, w1f, b1.reshape(1, C), w2f, b2.reshape(1, C))

    return jnp.transpose(out, (0, 3, 1, 2))  # NHWC -> NCHW


def _reference(x_nchw, w1, b1, w2, b2):
    """Pure-JAX reference (NHWC conv + instance norm), for validation."""
    x = jnp.transpose(x_nchw, (0, 2, 3, 1))
    dn = lax.conv_dimension_numbers(x.shape, w1.shape, ("NHWC", "HWIO", "NHWC"))

    def conv_in(inp, w, b):
        p = jnp.pad(inp, ((0, 0), (1, 1), (1, 1), (0, 0)), mode="reflect")
        y = lax.conv_general_dilated(p, w, (1, 1), "VALID", dimension_numbers=dn)
        y = y + b.reshape(1, 1, 1, -1)
        mu = jnp.mean(y, axis=(1, 2), keepdims=True)
        var = jnp.mean((y - mu) ** 2, axis=(1, 2), keepdims=True)
        return (y - mu) / jnp.sqrt(var + EPS)

    y = jnp.maximum(conv_in(x, w1, b1), 0.0)
    y = conv_in(y, w2, b2)
    return jnp.transpose(y + x, (0, 3, 1, 2))


if __name__ == "__main__":
    N, C, H, W = 2, 4, 16, 16
    key = jax.random.PRNGKey(0)
    kx, kw1, kb1, kw2, kb2 = jax.random.split(key, 5)

    x = jax.random.normal(kx, (N, C, H, W), jnp.float32)          # NCHW input
    # Deterministic synthetic parameters (Conv2d(dim, dim, 3, 1) x 2), HWIO layout.
    w1 = jax.random.normal(kw1, (3, 3, C, C), jnp.float32) * 0.2
    b1 = jax.random.normal(kb1, (C,), jnp.float32) * 0.1
    w2 = jax.random.normal(kw2, (3, 3, C, C), jnp.float32) * 0.2
    b2 = jax.random.normal(kb2, (C,), jnp.float32) * 0.1

    ref = jax.block_until_ready(_reference(x, w1, b1, w2, b2))

    # f32 MXU operands: tight check
    out = jax.block_until_ready(resnet_block(x, w1, b1, w2, b2))
    assert out.shape == (N, C, H, W)
    assert jnp.allclose(out, ref, rtol=1e-3, atol=1e-3), (
        f"f32 max abs err = {jnp.max(jnp.abs(out - ref))}")

    # bf16 MXU operands (f32 accumulation): loose check
    out_bf16 = jax.block_until_ready(
        resnet_block(x, w1, b1, w2, b2, compute_dtype=jnp.bfloat16))
    assert jnp.allclose(out_bf16, ref, rtol=1e-1, atol=1e-1), (
        f"bf16 max abs err = {jnp.max(jnp.abs(out_bf16 - ref))}")

    print("KERNEL_OK")
</pallas_src>

<mosaic_0001>
module attributes {stable_mosaic.version = 11 : i64} {
  func.func @_resnet_block_kernel(%arg0: i32, %arg1: memref<1x16x16x4xf32, #tpu.memory_space<vmem>>, %arg2: memref<36x4xf32, #tpu.memory_space<vmem>>, %arg3: memref<1x4xf32, #tpu.memory_space<vmem>>, %arg4: memref<36x4xf32, #tpu.memory_space<vmem>>, %arg5: memref<1x4xf32, #tpu.memory_space<vmem>>, %arg6: memref<1x16x16x4xf32, #tpu.memory_space<vmem>>, %arg7: memref<18x18x4xf32, #tpu.memory_space<vmem>>) attributes {dimension_semantics = [#tpu.dimension_semantics<parallel>], iteration_bounds = array<i64: 2>, scalar_prefetch = 0 : i64, scratch_operands = 1 : i64, tpu.core_type = #tpu.core_type<tc>, window_params = [{transform_indices = @transform_0, window_bounds = array<i64: 1, 16, 16, 4>}, {pipeline_mode = #tpu.pipeline_mode<synchronous>, transform_indices = @transform_1, window_bounds = array<i64: 36, 4>}, {pipeline_mode = #tpu.pipeline_mode<synchronous>, transform_indices = @transform_2, window_bounds = array<i64: 1, 4>}, {pipeline_mode = #tpu.pipeline_mode<synchronous>, transform_indices = @transform_3, window_bounds = array<i64: 36, 4>}, {pipeline_mode = #tpu.pipeline_mode<synchronous>, transform_indices = @transform_4, window_bounds = array<i64: 1, 4>}, {transform_indices = @transform_5, window_bounds = array<i64: 1, 16, 16, 4>}]} {
    %c0 = arith.constant 0 : index
    %c0_0 = arith.constant 0 : index
    %c0_1 = arith.constant 0 : index
    %c0_2 = arith.constant 0 : index
    %0 = vector.load %arg1[%c0, %c0_0, %c0_1, %c0_2] : memref<1x16x16x4xf32, #tpu.memory_space<vmem>>, vector<1x16x16x4xf32>
    %1 = vector.shape_cast %0 : vector<1x16x16x4xf32> to vector<16x16x4xf32>
    %c0_3 = arith.constant 0 : index
    %c0_4 = arith.constant 0 : index
    %2 = vector.load %arg2[%c0_3, %c0_4] : memref<36x4xf32, #tpu.memory_space<vmem>>, vector<36x4xf32>
    %c0_5 = arith.constant 0 : index
    %c0_6 = arith.constant 0 : index
    %3 = vector.load %arg4[%c0_5, %c0_6] : memref<36x4xf32, #tpu.memory_space<vmem>>, vector<36x4xf32>
    %c0_7 = arith.constant 0 : index
    %c0_8 = arith.constant 0 : index
    %4 = vector.load %arg3[%c0_7, %c0_8] : memref<1x4xf32, #tpu.memory_space<vmem>>, vector<1x4xf32>
    %c0_9 = arith.constant 0 : index
    %c0_10 = arith.constant 0 : index
    %5 = vector.load %arg5[%c0_9, %c0_10] : memref<1x4xf32, #tpu.memory_space<vmem>>, vector<1x4xf32>
    %c1 = arith.constant 1 : index
    %c1_11 = arith.constant 1 : index
    %c0_12 = arith.constant 0 : index
    %6 = vector.load %arg7[%c1, %c1_11, %c0_12] : memref<18x18x4xf32, #tpu.memory_space<vmem>>, vector<16x16x4xf32>
    tpu.vector_store %arg7[%c1, %c1_11, %c0_12], %1 {strides = array<i32>} : memref<18x18x4xf32, #tpu.memory_space<vmem>>, vector<16x16x4xf32>,
    %c2 = arith.constant 2 : index
    %c1_13 = arith.constant 1 : index
    %c0_14 = arith.constant 0 : index
    %7 = vector.load %arg7[%c2, %c1_13, %c0_14] : memref<18x18x4xf32, #tpu.memory_space<vmem>>, vector<1x16x4xf32>
    %c0_15 = arith.constant 0 : index
    %c1_16 = arith.constant 1 : index
    %c0_17 = arith.constant 0 : index
    %8 = vector.load %arg7[%c0_15, %c1_16, %c0_17] : memref<18x18x4xf32, #tpu.memory_space<vmem>>, vector<1x16x4xf32>
    tpu.vector_store %arg7[%c0_15, %c1_16, %c0_17], %7 {strides = array<i32>} : memref<18x18x4xf32, #tpu.memory_space<vmem>>, vector<1x16x4xf32>,
    %c15 = arith.constant 15 : index
    %c1_18 = arith.constant 1 : index
    %c0_19 = arith.constant 0 : index
    %9 = vector.load %arg7[%c15, %c1_18, %c0_19] : memref<18x18x4xf32, #tpu.memory_space<vmem>>, vector<1x16x4xf32>
    %c17 = arith.constant 17 : index
    %c1_20 = arith.constant 1 : index
    %c0_21 = arith.constant 0 : index
    %10 = vector.load %arg7[%c17, %c1_20, %c0_21] : memref<18x18x4xf32, #tpu.memory_space<vmem>>, vector<1x16x4xf32>
    tpu.vector_store %arg7[%c17, %c1_20, %c0_21], %9 {strides = array<i32>} : memref<18x18x4xf32, #tpu.memory_space<vmem>>, vector<1x16x4xf32>,
    %c0_22 = arith.constant 0 : index
    %c2_23 = arith.constant 2 : index
    %c0_24 = arith.constant 0 : index
    %11 = vector.load %arg7[%c0_22, %c2_23, %c0_24] : memref<18x18x4xf32, #tpu.memory_space<vmem>>, vector<18x1x4xf32>
    %c0_25 = arith.constant 0 : index
    %c0_26 = arith.constant 0 : index
    %c0_27 = arith.constant 0 : index
    %12 = vector.load %arg7[%c0_25, %c0_26, %c0_27] : memref<18x18x4xf32, #tpu.memory_space<vmem>>, vector<18x1x4xf32>
    tpu.vector_store %arg7[%c0_25, %c0_26, %c0_27], %11 {strides = array<i32>} : memref<18x18x4xf32, #tpu.memory_space<vmem>>, vector<18x1x4xf32>,
    %c0_28 = arith.constant 0 : index
    %c15_29 = arith.constant 15 : index
    %c0_30 = arith.constant 0 : index
    %13 = vector.load %arg7[%c0_28, %c15_29, %c0_30] : memref<18x18x4xf32, #tpu.memory_space<vmem>>, vector<18x1x4xf32>
    %c0_31 = arith.constant 0 : index
    %c17_32 = arith.constant 17 : index
    %c0_33 = arith.constant 0 : index
    %14 = vector.load %arg7[%c0_31, %c17_32, %c0_33] : memref<18x18x4xf32, #tpu.memory_space<vmem>>, vector<18x1x4xf32>
    tpu.vector_store %arg7[%c0_31, %c17_32, %c0_33], %13 {strides = array<i32>} : memref<18x18x4xf32, #tpu.memory_space<vmem>>, vector<18x1x4xf32>,
    %c0_34 = arith.constant 0 : index
    %c0_35 = arith.constant 0 : index
    %c0_36 = arith.constant 0 : index
    %15 = vector.load %arg7[%c0_34, %c0_35, %c0_36] : memref<18x18x4xf32, #tpu.memory_space<vmem>>, vector<18x18x4xf32>
    %16 = vector.extract_strided_slice %15 {offsets = [0, 0, 0], sizes = [16, 16, 4], strides = [1, 1, 1]} : vector<18x18x4xf32> to vector<16x16x4xf32>
    %17 = vector.shape_cast %16 : vector<16x16x4xf32> to vector<256x4xf32>
    %18 = vector.extract_strided_slice %15 {offsets = [0, 1, 0], sizes = [16, 16, 4], strides = [1, 1, 1]} : vector<18x18x4xf32> to vector<16x16x4xf32>
    %19 = vector.shape_cast %18 : vector<16x16x4xf32> to vector<256x4xf32>
    %20 = vector.extract_strided_slice %15 {offsets = [0, 2, 0], sizes = [16, 16, 4], strides = [1, 1, 1]} : vector<18x18x4xf32> to vector<16x16x4xf32>
    %21 = vector.shape_cast %20 : vector<16x16x4xf32> to vector<256x4xf32>
    %22 = vector.extract_strided_slice %15 {offsets = [1, 0, 0], sizes = [16, 16, 4], strides = [1, 1, 1]} : vector<18x18x4xf32> to vector<16x16x4xf32>
    %23 = vector.shape_cast %22 : vector<16x16x4xf32> to vector<256x4xf32>
    %24 = vector.extract_strided_slice %15 {offsets = [1, 1, 0], sizes = [16, 16, 4], strides = [1, 1, 1]} : vector<18x18x4xf32> to vector<16x16x4xf32>
    %25 = vector.shape_cast %24 : vector<16x16x4xf32> to vector<256x4xf32>
    %26 = vector.extract_strided_slice %15 {offsets = [1, 2, 0], sizes = [16, 16, 4], strides = [1, 1, 1]} : vector<18x18x4xf32> to vector<16x16x4xf32>
    %27 = vector.shape_cast %26 : vector<16x16x4xf32> to vector<256x4xf32>
    %28 = vector.extract_strided_slice %15 {offsets = [2, 0, 0], sizes = [16, 16, 4], strides = [1, 1, 1]} : vector<18x18x4xf32> to vector<16x16x4xf32>
    %29 = vector.shape_cast %28 : vector<16x16x4xf32> to vector<256x4xf32>
    %30 = vector.extract_strided_slice %15 {offsets = [2, 1, 0], sizes = [16, 16, 4], strides = [1, 1, 1]} : vector<18x18x4xf32> to vector<16x16x4xf32>
    %31 = vector.shape_cast %30 : vector<16x16x4xf32> to vector<256x4xf32>
    %32 = vector.extract_strided_slice %15 {offsets = [2, 2, 0], sizes = [16, 16, 4], strides = [1, 1, 1]} : vector<18x18x4xf32> to vector<16x16x4xf32>
    %33 = vector.shape_cast %32 : vector<16x16x4xf32> to vector<256x4xf32>
    %34 = tpu.concatenate %17, %19, %21, %23, %25, %27, %29, %31, %33 in 1 : vector<256x4xf32>, vector<256x4xf32>, vector<256x4xf32>, vector<256x4xf32>, vector<256x4xf32>, vector<256x4xf32>, vector<256x4xf32>, vector<256x4xf32>, vector<256x4xf32> -> vector<256x36xf32>
    %cst = arith.constant dense<0.000000e+00> : vector<256x4xf32>
    %35 = tpu.matmul %34, %2, %cst {dimension_numbers = #tpu.dot_dimension_numbers<[1], [0], [0], [1], [0, 0, 1, 1], [], []>} : vector<256x36xf32>, vector<36x4xf32>, vector<256x4xf32> -> vector<256x4xf32>
    %36 = vector.broadcast %4 : vector<1x4xf32> to vector<256x4xf32>
    %37 = arith.addf %35, %36 : vector<256x4xf32>
    %cst_37 = arith.constant dense<0.000000e+00> : vector<4xf32>
    %38 = vector.multi_reduction <add>, %37, %cst_37 [0] : vector<256x4xf32> to vector<4xf32>
    %39 = vector.shape_cast %38 : vector<4xf32> to vector<1x4xf32>
    %cst_38 = arith.constant 2.560000e+02 : f32
    %40 = vector.broadcast %cst_38 : f32 to vector<1x4xf32>
    %41 = arith.divf %39, %40 : vector<1x4xf32>
    %42 = arith.mulf %37, %37 : vector<256x4xf32>
    %cst_39 = arith.constant dense<0.000000e+00> : vector<4xf32>
    %43 = vector.multi_reduction <add>, %42, %cst_39 [0] : vector<256x4xf32> to vector<4xf32>
    %44 = vector.shape_cast %43 : vector<4xf32> to vector<1x4xf32>
    %cst_40 = arith.constant 2.560000e+02 : f32
    %45 = vector.broadcast %cst_40 : f32 to vector<1x4xf32>
    %46 = arith.divf %44, %45 : vector<1x4xf32>
    %47 = arith.mulf %41, %41 : vector<1x4xf32>
    %48 = arith.subf %46, %47 : vector<1x4xf32>
    %49 = vector.broadcast %41 : vector<1x4xf32> to vector<256x4xf32>
    %50 = arith.subf %37, %49 : vector<256x4xf32>
    %cst_41 = arith.constant 9.99999974E-6 : f32
    %51 = vector.broadcast %cst_41 : f32 to vector<1x4xf32>
    %52 = arith.addf %48, %51 : vector<1x4xf32>
    %53 = math.rsqrt %52 : vector<1x4xf32>
    %54 = vector.broadcast %53 : vector<1x4xf32> to vector<256x4xf32>
    %55 = arith.mulf %50, %54 : vector<256x4xf32>
    %cst_42 = arith.constant 0.000000e+00 : f32
    %56 = vector.broadcast %cst_42 : f32 to vector<256x4xf32>
    %57 = arith.maximumf %55, %56 : vector<256x4xf32>
    %58 = vector.shape_cast %57 : vector<256x4xf32> to vector<16x16x4xf32>
    %c1_43 = arith.constant 1 : index
    %c1_44 = arith.constant 1 : index
    %c0_45 = arith.constant 0 : index
    %59 = vector.load %arg7[%c1_43, %c1_44, %c0_45] : memref<18x18x4xf32, #tpu.memory_space<vmem>>, vector<16x16x4xf32>
    tpu.vector_store %arg7[%c1_43, %c1_44, %c0_45], %58 {strides = array<i32>} : memref<18x18x4xf32, #tpu.memory_space<vmem>>, vector<16x16x4xf32>,
    %c2_46 = arith.constant 2 : index
    %c1_47 = arith.constant 1 : index
    %c0_48 = arith.constant 0 : index
    %60 = vector.load %arg7[%c2_46, %c1_47, %c0_48] : memref<18x18x4xf32, #tpu.memory_space<vmem>>, vector<1x16x4xf32>
    %c0_49 = arith.constant 0 : index
    %c1_50 = arith.constant 1 : index
    %c0_51 = arith.constant 0 : index
    %61 = vector.load %arg7[%c0_49, %c1_50, %c0_51] : memref<18x18x4xf32, #tpu.memory_space<vmem>>, vector<1x16x4xf32>
    tpu.vector_store %arg7[%c0_49, %c1_50, %c0_51], %60 {strides = array<i32>} : memref<18x18x4xf32, #tpu.memory_space<vmem>>, vector<1x16x4xf32>,
    %c15_52 = arith.constant 15 : index
    %c1_53 = arith.constant 1 : index
    %c0_54 = arith.constant 0 : index
    %62 = vector.load %arg7[%c15_52, %c1_53, %c0_54] : memref<18x18x4xf32, #tpu.memory_space<vmem>>, vector<1x16x4xf32>
    %c17_55 = arith.constant 17 : index
    %c1_56 = arith.constant 1 : index
    %c0_57 = arith.constant 0 : index
    %63 = vector.load %arg7[%c17_55, %c1_56, %c0_57] : memref<18x18x4xf32, #tpu.memory_space<vmem>>, vector<1x16x4xf32>
    tpu.vector_store %arg7[%c17_55, %c1_56, %c0_57], %62 {strides = array<i32>} : memref<18x18x4xf32, #tpu.memory_space<vmem>>, vector<1x16x4xf32>,
    %c0_58 = arith.constant 0 : index
    %c2_59 = arith.constant 2 : index
    %c0_60 = arith.constant 0 : index
    %64 = vector.load %arg7[%c0_58, %c2_59, %c0_60] : memref<18x18x4xf32, #tpu.memory_space<vmem>>, vector<18x1x4xf32>
    %c0_61 = arith.constant 0 : index
    %c0_62 = arith.constant 0 : index
    %c0_63 = arith.constant 0 : index
    %65 = vector.load %arg7[%c0_61, %c0_62, %c0_63] : memref<18x18x4xf32, #tpu.memory_space<vmem>>, vector<18x1x4xf32>
    tpu.vector_store %arg7[%c0_61, %c0_62, %c0_63], %64 {strides = array<i32>} : memref<18x18x4xf32, #tpu.memory_space<vmem>>, vector<18x1x4xf32>,
    %c0_64 = arith.constant 0 : index
    %c15_65 = arith.constant 15 : index
    %c0_66 = arith.constant 0 : index
    %66 = vector.load %arg7[%c0_64, %c15_65, %c0_66] : memref<18x18x4xf32, #tpu.memory_space<vmem>>, vector<18x1x4xf32>
    %c0_67 = arith.constant 0 : index
    %c17_68 = arith.constant 17 : index
    %c0_69 = arith.constant 0 : index
    %67 = vector.load %arg7[%c0_67, %c17_68, %c0_69] : memref<18x18x4xf32, #tpu.memory_space<vmem>>, vector<18x1x4xf32>
    tpu.vector_store %arg7[%c0_67, %c17_68, %c0_69], %66 {strides = array<i32>} : memref<18x18x4xf32, #tpu.memory_space<vmem>>, vector<18x1x4xf32>,
    %c0_70 = arith.constant 0 : index
    %c0_71 = arith.constant 0 : index
    %c0_72 = arith.constant 0 : index
    %68 = vector.load %arg7[%c0_70, %c0_71, %c0_72] : memref<18x18x4xf32, #tpu.memory_space<vmem>>, vector<18x18x4xf32>
    %69 = vector.extract_strided_slice %68 {offsets = [0, 0, 0], sizes = [16, 16, 4], strides = [1, 1, 1]} : vector<18x18x4xf32> to vector<16x16x4xf32>
    %70 = vector.shape_cast %69 : vector<16x16x4xf32> to vector<256x4xf32>
    %71 = vector.extract_strided_slice %68 {offsets = [0, 1, 0], sizes = [16, 16, 4], strides = [1, 1, 1]} : vector<18x18x4xf32> to vector<16x16x4xf32>
    %72 = vector.shape_cast %71 : vector<16x16x4xf32> to vector<256x4xf32>
    %73 = vector.extract_strided_slice %68 {offsets = [0, 2, 0], sizes = [16, 16, 4], strides = [1, 1, 1]} : vector<18x18x4xf32> to vector<16x16x4xf32>
    %74 = vector.shape_cast %73 : vector<16x16x4xf32> to vector<256x4xf32>
    %75 = vector.extract_strided_slice %68 {offsets = [1, 0, 0], sizes = [16, 16, 4], strides = [1, 1, 1]} : vector<18x18x4xf32> to vector<16x16x4xf32>
    %76 = vector.shape_cast %75 : vector<16x16x4xf32> to vector<256x4xf32>
    %77 = vector.extract_strided_slice %68 {offsets = [1, 1, 0], sizes = [16, 16, 4], strides = [1, 1, 1]} : vector<18x18x4xf32> to vector<16x16x4xf32>
    %78 = vector.shape_cast %77 : vector<16x16x4xf32> to vector<256x4xf32>
    %79 = vector.extract_strided_slice %68 {offsets = [1, 2, 0], sizes = [16, 16, 4], strides = [1, 1, 1]} : vector<18x18x4xf32> to vector<16x16x4xf32>
    %80 = vector.shape_cast %79 : vector<16x16x4xf32> to vector<256x4xf32>
    %81 = vector.extract_strided_slice %68 {offsets = [2, 0, 0], sizes = [16, 16, 4], strides = [1, 1, 1]} : vector<18x18x4xf32> to vector<16x16x4xf32>
    %82 = vector.shape_cast %81 : vector<16x16x4xf32> to vector<256x4xf32>
    %83 = vector.extract_strided_slice %68 {offsets = [2, 1, 0], sizes = [16, 16, 4], strides = [1, 1, 1]} : vector<18x18x4xf32> to vector<16x16x4xf32>
    %84 = vector.shape_cast %83 : vector<16x16x4xf32> to vector<256x4xf32>
    %85 = vector.extract_strided_slice %68 {offsets = [2, 2, 0], sizes = [16, 16, 4], strides = [1, 1, 1]} : vector<18x18x4xf32> to vector<16x16x4xf32>
    %86 = vector.shape_cast %85 : vector<16x16x4xf32> to vector<256x4xf32>
    %87 = tpu.concatenate %70, %72, %74, %76, %78, %80, %82, %84, %86 in 1 : vector<256x4xf32>, vector<256x4xf32>, vector<256x4xf32>, vector<256x4xf32>, vector<256x4xf32>, vector<256x4xf32>, vector<256x4xf32>, vector<256x4xf32>, vector<256x4xf32> -> vector<256x36xf32>
    %cst_73 = arith.constant dense<0.000000e+00> : vector<256x4xf32>
    %88 = tpu.matmul %87, %3, %cst_73 {dimension_numbers = #tpu.dot_dimension_numbers<[1], [0], [0], [1], [0, 0, 1, 1], [], []>} : vector<256x36xf32>, vector<36x4xf32>, vector<256x4xf32> -> vector<256x4xf32>
    %89 = vector.broadcast %5 : vector<1x4xf32> to vector<256x4xf32>
    %90 = arith.addf %88, %89 : vector<256x4xf32>
    %cst_74 = arith.constant dense<0.000000e+00> : vector<4xf32>
    %91 = vector.multi_reduction <add>, %90, %cst_74 [0] : vector<256x4xf32> to vector<4xf32>
    %92 = vector.shape_cast %91 : vector<4xf32> to vector<1x4xf32>
    %cst_75 = arith.constant 2.560000e+02 : f32
    %93 = vector.broadcast %cst_75 : f32 to vector<1x4xf32>
    %94 = arith.divf %92, %93 : vector<1x4xf32>
    %95 = arith.mulf %90, %90 : vector<256x4xf32>
    %cst_76 = arith.constant dense<0.000000e+00> : vector<4xf32>
    %96 = vector.multi_reduction <add>, %95, %cst_76 [0] : vector<256x4xf32> to vector<4xf32>
    %97 = vector.shape_cast %96 : vector<4xf32> to vector<1x4xf32>
    %cst_77 = arith.constant 2.560000e+02 : f32
    %98 = vector.broadcast %cst_77 : f32 to vector<1x4xf32>
    %99 = arith.divf %97, %98 : vector<1x4xf32>
    %100 = arith.mulf %94, %94 : vector<1x4xf32>
    %101 = arith.subf %99, %100 : vector<1x4xf32>
    %102 = vector.broadcast %94 : vector<1x4xf32> to vector<256x4xf32>
    %103 = arith.subf %90, %102 : vector<256x4xf32>
    %cst_78 = arith.constant 9.99999974E-6 : f32
    %104 = vector.broadcast %cst_78 : f32 to vector<1x4xf32>
    %105 = arith.addf %101, %104 : vector<1x4xf32>
    %106 = math.rsqrt %105 : vector<1x4xf32>
    %107 = vector.broadcast %106 : vector<1x4xf32> to vector<256x4xf32>
    %108 = arith.mulf %103, %107 : vector<256x4xf32>
    %109 = vector.shape_cast %1 : vector<16x16x4xf32> to vector<256x4xf32>
    %110 = arith.addf %108, %109 : vector<256x4xf32>
    %111 = vector.shape_cast %110 : vector<256x4xf32> to vector<1x16x16x4xf32>
    %c0_79 = arith.constant 0 : index
    %c0_80 = arith.constant 0 : index
    %c0_81 = arith.constant 0 : index
    %c0_82 = arith.constant 0 : index
    %112 = vector.load %arg6[%c0_79, %c0_80, %c0_81, %c0_82] : memref<1x16x16x4xf32, #tpu.memory_space<vmem>>, vector<1x16x16x4xf32>
    tpu.vector_store %arg6[%c0_79, %c0_80, %c0_81, %c0_82], %111 {strides = array<i32>} : memref<1x16x16x4xf32, #tpu.memory_space<vmem>>, vector<1x16x16x4xf32>,
    return
  }
  func.func @transform_0(%arg0: i32) -> (i32, i32, i32, i32) {
    %c0_i32 = arith.constant 0 : i32
    %c0_i32_0 = arith.constant 0 : i32
    %c0_i32_1 = arith.constant 0 : i32
    %c0_i32_2 = arith.constant 0 : i32
    return %arg0, %c0_i32, %c0_i32_0, %c0_i32_1 : i32, i32, i32, i32
  }
  func.func @transform_1(%arg0: i32) -> (i32, i32) {
    %c0_i32 = arith.constant 0 : i32
    %c0_i32_0 = arith.constant 0 : i32
    %c0_i32_1 = arith.constant 0 : i32
    return %c0_i32, %c0_i32_0 : i32, i32
  }
  func.func @transform_2(%arg0: i32) -> (i32, i32) {
    %c0_i32 = arith.constant 0 : i32
    %c0_i32_0 = arith.constant 0 : i32
    %c0_i32_1 = arith.constant 0 : i32
    return %c0_i32, %c0_i32_0 : i32, i32
  }
  func.func @transform_3(%arg0: i32) -> (i32, i32) {
    %c0_i32 = arith.constant 0 : i32
    %c0_i32_0 = arith.constant 0 : i32
    %c0_i32_1 = arith.constant 0 : i32
    return %c0_i32, %c0_i32_0 : i32, i32
  }
  func.func @transform_4(%arg0: i32) -> (i32, i32) {
    %c0_i32 = arith.constant 0 : i32
    %c0_i32_0 = arith.constant 0 : i32
    %c0_i32_1 = arith.constant 0 : i32
    return %c0_i32, %c0_i32_0 : i32, i32
  }
  func.func @transform_5(%arg0: i32) -> (i32, i32, i32, i32) {
    %c0_i32 = arith.constant 0 : i32
    %c0_i32_0 = arith.constant 0 : i32
    %c0_i32_1 = arith.constant 0 : i32
    %c0_i32_2 = arith.constant 0 : i32
    return %arg0, %c0_i32, %c0_i32_0, %c0_i32_1 : i32, i32, i32, i32
  }
}

</mosaic_0001>

<llo_original>
// kernel: tpu_custom_call.1
$region0: #{tpu_custom_call.1}
  #allocation0 [shape = 'u32[]', space=smem, size = 0x4, offset = 0x4, fixed_abs, tag = 'smem constant byte address 0x4 - core index']
  #allocation1 [shape = 'u32[144,128]{1,0:T(1,128)}', space=vmem, size = 0x12000, scoped, tag = 'internal scratch']
  #allocation2 [shape = 'f32[18,18,4]{2,1,0:T(8,128)}', space=vmem, size = 0x36000, scoped, tag = 'scratch operand']
  %s0 = inlined_call_operand.vmem [shape: f32[2,16,16,4], index: 0, kind: input, shape index: {}]
  %s1 = inlined_call_operand.vmem [shape: f32[36,4], index: 1, kind: input, shape index: {}]
  %s2 = inlined_call_operand.vmem [shape: f32[1,4], index: 2, kind: input, shape index: {}]
  %s3 = inlined_call_operand.vmem [shape: f32[36,4], index: 3, kind: input, shape index: {}]
  %s4 = inlined_call_operand.vmem [shape: f32[1,4], index: 4, kind: input, shape index: {}]
  %s5 = inlined_call_operand.vmem [shape: f32[2,16,16,4], index: 5, kind: output, shape index: {}]
  %s6 = sld [smem:[#allocation0]]
  $region53: #{tpu_custom_call.1} parent=0
    _
  %s8 = ssub.s32 1, %s6
  %s9 = scalar_select 0, %s8, %s6
  loop: start=0, step=1, limit=4
  $region2: #{tpu_custom_call.1} parent=0 // loop_pre_header
    _
  $region3: #{tpu_custom_call.1} parent=0 // loop_header
    %s11 = sphi 0, %s15
    %p12 = scmp.ge.s32.totalorder %s11, 4
    %s21 = sphi 0, %s23
    %s24 = sphi 0, %s21
    %s25 = sphi 0, %s24
    %s41 = sphi 0, %s25
    %s45 = sphi 0, %s45
    %s47 = sphi 0, %s45
    %s48 = sphi 0, %s47
    %s62 = sphi 0, %s48
    %s66 = sphi 0, %s66
    %s68 = sphi 0, %s66
    %s69 = sphi 0, %s68
    %s83 = sphi 0, %s69
    %s87 = sphi 0, %s87
    %s89 = sphi 0, %s87
    %s90 = sphi 0, %s89
    %s104 = sphi 0, %s90
    %s108 = sphi 0, %s108
    %s110 = sphi 0, %s108
    %s111 = sphi 0, %s110
    %s125 = sphi 0, %s111
    %s131 = sphi 0, %s133
    %s134 = sphi 0, %s131
    %s135 = sphi 0, %s134
    %s151 = sphi 0, %s135
  $region4: #{tpu_custom_call.1} parent=0 // loop_header_branch
    %14 = sbr.rel (%p12) target = $region8
  $region5: #{tpu_custom_call.1} parent=0 // loop_body
    %s16 = ssub.s32 %s11, 1
    %s17 = ssub.s32 %s11, 2
    %s18 = sadd.s32 %s11, 1
    %s19 = ssub.s32 %s11, %s18
    %p20 = scmp.eq.s32.totalorder %s19, 0
    %s22 = sadd.s32 %s21, 1
    %s23 = scalar_select %p20, %s21, %s22
    %p26 = pneg %p20
    %p27 = scmp.eq.s32.totalorder %s11, 1
    %p28 = por %p26, %p27
    %p29 = scmp.ne.s32.totalorder %s21, %s24
    %p30 = scmp.eq.s32.totalorder %s11, 0
    %p31 = por %p29, %p30
    %p32 = scmp.ne.s32.totalorder %s21, %s24
    %p33 = scmp.eq.s32.totalorder %s16, 1
    %p34 = por %p32, %p33
    %p35 = scmp.ne.s32.totalorder %s24, %s25
    %p36 = scmp.eq.s32.totalorder %s16, 0
    %p37 = por %p35, %p36
    %p38 = scmp.ne.s32.totalorder %s24, %s25
    %p39 = scmp.eq.s32.totalorder %s17, 1
    %p40 = por %p38, %p39
    %p42 = scmp.ne.s32.totalorder %s25, %s41
    %p43 = scmp.eq.s32.totalorder %s17, 0
    %p44 = por %p42, %p43
    %s46 = sadd.s32 %s45, 1
    %p49 = scmp.eq.s32.totalorder %s11, 1
    %p50 = scmp.ne.s32.totalorder %s45, %s47
    %p51 = scmp.eq.s32.totalorder %s11, 0
    %p52 = por %p50, %p51
    %p53 = scmp.ne.s32.totalorder %s45, %s47
    %p54 = scmp.eq.s32.totalorder %s16, 1
    %p55 = por %p53, %p54
    %p56 = scmp.ne.s32.totalorder %s47, %s48
    %p57 = scmp.eq.s32.totalorder %s16, 0
    %p58 = por %p56, %p57
    %p59 = scmp.ne.s32.totalorder %s47, %s48
    %p60 = scmp.eq.s32.totalorder %s17, 1
    %p61 = por %p59, %p60
    %p63 = scmp.ne.s32.totalorder %s48, %s62
    %p64 = scmp.eq.s32.totalorder %s17, 0
    %p65 = por %p63, %p64
    %s67 = sadd.s32 %s66, 1
    %p70 = scmp.eq.s32.totalorder %s11, 1
    %p71 = scmp.ne.s32.totalorder %s66, %s68
    %p72 = scmp.eq.s32.totalorder %s11, 0
    %p73 = por %p71, %p72
    %p74 = scmp.ne.s32.totalorder %s66, %s68
    %p75 = scmp.eq.s32.totalorder %s16, 1
    %p76 = por %p74, %p75
    %p77 = scmp.ne.s32.totalorder %s68, %s69
    %p78 = scmp.eq.s32.totalorder %s16, 0
    %p79 = por %p77, %p78
    %p80 = scmp.ne.s32.totalorder %s68, %s69
    %p81 = scmp.eq.s32.totalorder %s17, 1
    %p82 = por %p80, %p81
    %p84 = scmp.ne.s32.totalorder %s69, %s83
    %p85 = scmp.eq.s32.totalorder %s17, 0
    %p86 = por %p84, %p85
    %s88 = sadd.s32 %s87, 1
    %p91 = scmp.eq.s32.totalorder %s11, 1
    %p92 = scmp.ne.s32.totalorder %s87, %s89
    %p93 = scmp.eq.s32.totalorder %s11, 0
    %p94 = por %p92, %p93
    %p95 = scmp.ne.s32.totalorder %s87, %s89
    %p96 = scmp.eq.s32.totalorder %s16, 1
    %p97 = por %p95, %p96
    %p98 = scmp.ne.s32.totalorder %s89, %s90
    %p99 = scmp.eq.s32.totalorder %s16, 0
    %p100 = por %p98, %p99
    %p101 = scmp.ne.s32.totalorder %s89, %s90
    %p102 = scmp.eq.s32.totalorder %s17, 1
    %p103 = por %p101, %p102
    %p105 = scmp.ne.s32.totalorder %s90, %s104
    %p106 = scmp.eq.s32.totalorder %s17, 0
    %p107 = por %p105, %p106
    %s109 = sadd.s32 %s108, 1
    %p112 = scmp.eq.s32.totalorder %s11, 1
    %p113 = scmp.ne.s32.totalorder %s108, %s110
    %p114 = scmp.eq.s32.totalorder %s11, 0
    %p115 = por %p113, %p114
    %p116 = scmp.ne.s32.totalorder %s108, %s110
    %p117 = scmp.eq.s32.totalorder %s16, 1
    %p118 = por %p116, %p117
    %p119 = scmp.ne.s32.totalorder %s110, %s111
    %p120 = scmp.eq.s32.totalorder %s16, 0
    %p121 = por %p119, %p120
    %p122 = scmp.ne.s32.totalorder %s110, %s111
    %p123 = scmp.eq.s32.totalorder %s17, 1
    %p124 = por %p122, %p123
    %p126 = scmp.ne.s32.totalorder %s111, %s125
    %p127 = scmp.eq.s32.totalorder %s17, 0
    %p128 = por %p126, %p127
    %s129 = ssub.s32 %s11, %s18
    %p130 = scmp.eq.s32.totalorder %s129, 0
    %s132 = sadd.s32 %s131, 1
    %s133 = scalar_select %p130, %s131, %s132
    %p136 = pneg %p130
    %p137 = scmp.eq.s32.totalorder %s11, 1
    %p138 = por %p136, %p137
    %p139 = scmp.ne.s32.totalorder %s131, %s134
    %p140 = scmp.eq.s32.totalorder %s11, 0
    %p141 = por %p139, %p140
    %p142 = scmp.ne.s32.totalorder %s131, %s134
    %p143 = scmp.eq.s32.totalorder %s16, 1
    %p144 = por %p142, %p143
    %p145 = scmp.ne.s32.totalorder %s134, %s135
    %p146 = scmp.eq.s32.totalorder %s16, 0
    %p147 = por %p145, %p146
    %p148 = scmp.ne.s32.totalorder %s134, %s135
    %p149 = scmp.eq.s32.totalorder %s17, 1
    %p150 = por %p148, %p149
    %p152 = scmp.ne.s32.totalorder %s135, %s151
    %p153 = scmp.eq.s32.totalorder %s17, 0
    %p154 = por %p152, %p153
    %p155 = scmp.le.s32.totalorder 1, %s11
    %p156 = scmp.lt.s32.totalorder %s11, 3
    %p157 = pnand %p155, %p156
    %p158 = pneg %p157
    // Predicated region
    $region9: #{tpu_custom_call.1} parent=5 // pred_check
      _
    $region10: #{tpu_custom_call.1} parent=5 // pred_check_branch
      %160 = sbr.rel (%p157) target = $region12
    $region11: #{tpu_custom_call.1} parent=5 // pred_region
      %s161 = ssub.s32 %s11, 1
      // Predicated region
      $region13: #{tpu_custom_call.1} parent=11 // pred_check
        %p162 = pneg %p58
      $region14: #{tpu_custom_call.1} parent=11 // pred_check_branch
        %164 = sbr.rel (%p162) target = $region16
      $region15: #{tpu_custom_call.1} parent=11 // pred_region
        _
      $region16: #{tpu_custom_call.1} parent=11 // pred_fallthru
        _
      // Predicated region
      $region17: #{tpu_custom_call.1} parent=11 // pred_check
        %p165 = pneg %p79
      $region18: #{tpu_custom_call.1} parent=11 // pred_check_branch
        %167 = sbr.rel (%p165) target = $region20
      $region19: #{tpu_custom_call.1} parent=11 // pred_region
        _
      $region20: #{tpu_custom_call.1} parent=11 // pred_fallthru
        _
      // Predicated region
      $region21: #{tpu_custom_call.1} parent=11 // pred_check
        %p168 = pneg %p100
      $region22: #{tpu_custom_call.1} parent=11 // pred_check_branch
        %170 = sbr.rel (%p168) target = $region24
      $region23: #{tpu_custom_call.1} parent=11 // pred_region
        _
      $region24: #{tpu_custom_call.1} parent=11 // pred_fallthru
        _
      // Predicated region
      $region25: #{tpu_custom_call.1} parent=11 // pred_check
        %p171 = pneg %p121
      $region26: #{tpu_custom_call.1} parent=11 // pred_check_branch
        %173 = sbr.rel (%p171) target = $region28
      $region27: #{tpu_custom_call.1} parent=11 // pred_region
        _
      $region28: #{tpu_custom_call.1} parent=11 // pred_fallthru
        _
    $region12: #{tpu_custom_call.1} parent=5 // pred_fallthru
      _
    %p174 = scmp.lt.s32.totalorder %s11, 2
    // Predicated region
    $region29: #{tpu_custom_call.1} parent=5 // pred_check
      %p175 = pneg %p174
    $region30: #{tpu_custom_call.1} parent=5 // pred_check_branch
      %177 = sbr.rel (%p175) target = $region32
    $region31: #{tpu_custom_call.1} parent=5 // pred_region
      // Predicated region
      $region33: #{tpu_custom_call.1} parent=31 // pred_check
        %p178 = pneg %p31
      $region34: #{tpu_custom_call.1} parent=31 // pred_check_branch
        %180 = sbr.rel (%p178) target = $region36
      $region35: #{tpu_custom_call.1} parent=31 // pred_region
        %p181 = scmp.lt.s32.totalorder %s11, 1
        %s182 = scalar_select %p181, %s11, 1
        %s183 = smul.addr %s182, 32
        %s184 = smul.addr %s183, 8
        %s185 = scalar_lea.vmem %s0, %s184
      $region36: #{tpu_custom_call.1} parent=31 // pred_fallthru
        _
    $region32: #{tpu_custom_call.1} parent=5 // pred_fallthru
      _
    %p186 = scmp.le.s32.totalorder 1, %s11
    %p187 = scmp.lt.s32.totalorder %s11, 3
    %p188 = pnand %p186, %p187
    %p189 = pneg %p188
    // Predicated region
    $region37: #{tpu_custom_call.1} parent=5 // pred_check
      _
    $region38: #{tpu_custom_call.1} parent=5 // pred_check_branch
      %191 = sbr.rel (%p188) target = $region40
    $region39: #{tpu_custom_call.1} parent=5 // pred_region
      %s192 = ssub.s32 %s11, 1
      %p193 = scmp.lt.s32.totalorder %s16, 1
      %s194 = scalar_select %p193, %s16, 1
      %s195 = smul.addr %s194, 32
      %s196 = smul.addr %s195, 8
      %s197 = scalar_lea.vmem %s0, %s196
      %p198 = pneg %p37
      %p199 = pneg %p34
      %p200 = pneg %p58
      %p201 = pneg %p55
      %p202 = pneg %p79
      %p203 = pneg %p76
      %p204 = pneg %p100
      %p205 = pneg %p97
      %p206 = pneg %p121
      %p207 = pneg %p118
      %p208 = pneg %p147
      %p209 = pneg %p144
      %p210 = scmp.lt.s32.totalorder %s16, 1
      %s211 = scalar_select %p210, %s16, 1
      %s212 = smul.addr %s211, 32
      %s213 = smul.addr %s212, 8
      %s214 = scalar_lea.vmem %s5, %s213
      %p215 = scmp.lt.s32.totalorder %s16, 1
      %s216 = scalar_select %p215, %s16, 1
      %s217 = smul.addr %s216, 32
      %s218 = smul.addr %s217, 8
      %s219 = scalar_lea.vmem %s0, %s218
      %p220 = scmp.lt.s32.totalorder %s16, 1
      %s221 = scalar_select %p220, %s16, 1
      %s222 = smul.addr %s221, 32
      %s223 = smul.addr %s222, 8
      %s224 = scalar_lea.vmem %s5, %s223
      %v225 = vld [vmem:[%s219] sm:$0xff]
      %v226 = vld [vmem:[%s219 + $0x8] sm:$0xff]
      %v227 = vld [vmem:[%s219 + $0x10] sm:$0xff]
      %v228 = vld [vmem:[%s219 + $0x18] sm:$0xff]
      %v229 = vld [vmem:[%s219 + $0x20] sm:$0xff]
      %v230 = vld [vmem:[%s219 + $0x28] sm:$0xff]
      %v231 = vld [vmem:[%s219 + $0x30] sm:$0xff]
      %v232 = vld [vmem:[%s219 + $0x38] sm:$0xff]
      %v233 = vld [vmem:[%s219 + $0x40] sm:$0xff]
      %v234 = vld [vmem:[%s219 + $0x48] sm:$0xff]
      %v235 = vld [vmem:[%s219 + $0x50] sm:$0xff]
      %v236 = vld [vmem:[%s219 + $0x58] sm:$0xff]
      %v237 = vld [vmem:[%s219 + $0x60] sm:$0xff]
      %v238 = vld [vmem:[%s219 + $0x68] sm:$0xff]
      %v239 = vld [vmem:[%s219 + $0x70] sm:$0xff]
      %v240 = vld [vmem:[%s219 + $0x78] sm:$0xff]
      %v241 = vld [vmem:[%s219 + $0x80] sm:$0xff]
      %v242 = vld [vmem:[%s219 + $0x88] sm:$0xff]
      %v243 = vld [vmem:[%s219 + $0x90] sm:$0xff]
      %v244 = vld [vmem:[%s219 + $0x98] sm:$0xff]
      %v245 = vld [vmem:[%s219 + $0xa0] sm:$0xff]
      %v246 = vld [vmem:[%s219 + $0xa8] sm:$0xff]
      %v247 = vld [vmem:[%s219 + $0xb0] sm:$0xff]
      %v248 = vld [vmem:[%s219 + $0xb8] sm:$0xff]
      %v249 = vld [vmem:[%s219 + $0xc0] sm:$0xff]
      %v250 = vld [vmem:[%s219 + $0xc8] sm:$0xff]
      %v251 = vld [vmem:[%s219 + $0xd0] sm:$0xff]
      %v252 = vld [vmem:[%s219 + $0xd8] sm:$0xff]
      %v253 = vld [vmem:[%s219 + $0xe0] sm:$0xff]
      %v254 = vld [vmem:[%s219 + $0xe8] sm:$0xff]
      %v255 = vld [vmem:[%s219 + $0xf0] sm:$0xff]
      %v256 = vld [vmem:[%s219 + $0xf8] sm:$0xff]
      %v257 = vld [vmem:[%s1] sm:$0xff]
      %v258 = vld [vmem:[%s1 + $0x8] sm:$0xff]
      %v259 = vld [vmem:[%s1 + $0x10] sm:$0xff]
      %v260 = vld [vmem:[%s1 + $0x18] sm:$0xff]
      %v261 = vld [vmem:[%s1 + $0x20] sm:$0xf]
      %v262 = vld [vmem:[%s3] sm:$0xff]
      %v263 = vld [vmem:[%s3 + $0x8] sm:$0xff]
      %v264 = vld [vmem:[%s3 + $0x10] sm:$0xff]
      %v265 = vld [vmem:[%s3 + $0x18] sm:$0xff]
      %v266 = vld [vmem:[%s3 + $0x20] sm:$0xf]
      %v267 = vld [vmem:[%s2] sm:$0x1]
      %v268 = vld [vmem:[%s4] sm:$0x1]
      %s269 = scalar_lea.vmem [#allocation2], 24
      %vm270 = vcmask 31744
      %271 = vst.msk [vmem:[%s269 + $0x1] sm:$0xff] %vm270, %v225
      %272 = vst.msk [vmem:[%s269 + $0x9] sm:$0xff] %vm270, %v226
      %273 = vst.msk [vmem:[%s269 + $0x19] sm:$0xff] %vm270, %v227
      %274 = vst.msk [vmem:[%s269 + $0x21] sm:$0xff] %vm270, %v228
      %275 = vst.msk [vmem:[%s269 + $0x31] sm:$0xff] %vm270, %v229
      %276 = vst.msk [vmem:[%s269 + $0x39] sm:$0xff] %vm270, %v230
      %277 = vst.msk [vmem:[%s269 + $0x49] sm:$0xff] %vm270, %v231
      %278 = vst.msk [vmem:[%s269 + $0x51] sm:$0xff] %vm270, %v232
      %279 = vst.msk [vmem:[%s269 + $0x61] sm:$0xff] %vm270, %v233
      %280 = vst.msk [vmem:[%s269 + $0x69] sm:$0xff] %vm270, %v234
      %281 = vst.msk [vmem:[%s269 + $0x79] sm:$0xff] %vm270, %v235
      %282 = vst.msk [vmem:[%s269 + $0x81] sm:$0xff] %vm270, %v236
      %283 = vst.msk [vmem:[%s269 + $0x91] sm:$0xff] %vm270, %v237
      %284 = vst.msk [vmem:[%s269 + $0x99] sm:$0xff] %vm270, %v238
      %285 = vst.msk [vmem:[%s269 + $0xa9] sm:$0xff] %vm270, %v239
      %286 = vst.msk [vmem:[%s269 + $0xb1] sm:$0xff] %vm270, %v240
      %287 = vst.msk [vmem:[%s269 + $0xc1] sm:$0xff] %vm270, %v241
      %288 = vst.msk [vmem:[%s269 + $0xc9] sm:$0xff] %vm270, %v242
      %289 = vst.msk [vmem:[%s269 + $0xd9] sm:$0xff] %vm270, %v243
      %290 = vst.msk [vmem:[%s269 + $0xe1] sm:$0xff] %vm270, %v244
      %291 = vst.msk [vmem:[%s269 + $0xf1] sm:$0xff] %vm270, %v245
      %292 = vst.msk [vmem:[%s269 + $0xf9] sm:$0xff] %vm270, %v246
      %293 = vst.msk [vmem:[%s269 + $0x109] sm:$0xff] %vm270, %v247
      %294 = vst.msk [vmem:[%s269 + $0x111] sm:$0xff] %vm270, %v248
      %295 = vst.msk [vmem:[%s269 + $0x121] sm:$0xff] %vm270, %v249
      %296 = vst.msk [vmem:[%s269 + $0x129] sm:$0xff] %vm270, %v250
      %297 = vst.msk [vmem:[%s269 + $0x139] sm:$0xff] %vm270, %v251
      %298 = vst.msk [vmem:[%s269 + $0x141] sm:$0xff] %vm270, %v252
      %299 = vst.msk [vmem:[%s269 + $0x151] sm:$0xff] %vm270, %v253
      %300 = vst.msk [vmem:[%s269 + $0x159] sm:$0xff] %vm270, %v254
      %301 = vst.msk [vmem:[%s269 + $0x169] sm:$0xff] %vm270, %v255
      %302 = vst.msk [vmem:[%s269 + $0x171] sm:$0xff] %vm270, %v256
      %s303 = scalar_lea.vmem [#allocation2], 48
      %v304 = vld [vmem:[%s303 + $0x1] sm:$0xff]
      %v305 = vld [vmem:[%s303 + $0x9] sm:$0xff]
      %306 = vst.msk [vmem:[#allocation2 + $0x1] sm:$0xff] %vm270, %v304
      %307 = vst.msk [vmem:[#allocation2 + $0x9] sm:$0xff] %vm270, %v305
      %s308 = scalar_lea.vmem [#allocation2], 360
      %v309 = vld [vmem:[%s308 + $0x1] sm:$0xff]
      %v310 = vld [vmem:[%s308 + $0x9] sm:$0xff]
      %s311 = scalar_lea.vmem [#allocation2], 408
      %312 = vst.msk [vmem:[%s311 + $0x1] sm:$0xff] %vm270, %v309
      %313 = vst.msk [vmem:[%s311 + $0x9] sm:$0xff] %vm270, %v310
      %v314 = vld [vmem:[#allocation2 + $0x2] sm:$0x1]
      %v315 = vld [vmem:[#allocation2 + $0x1a] sm:$0x1]
      %v316 = vld [vmem:[#allocation2 + $0x32] sm:$0x1]
      %v317 = vld [vmem:[#allocation2 + $0x4a] sm:$0x1]
      %v318 = vld [vmem:[#allocation2 + $0x62] sm:$0x1]
      %v319 = vld [vmem:[#allocation2 + $0x7a] sm:$0x1]
      %v320 = vld [vmem:[#allocation2 + $0x92] sm:$0x1]
      %v321 = vld [vmem:[#allocation2 + $0xaa] sm:$0x1]
      %v322 = vld [vmem:[#allocation2 + $0xc2] sm:$0x1]
      %v323 = vld [vmem:[#allocation2 + $0xda] sm:$0x1]
      %v324 = vld [vmem:[#allocation2 + $0xf2] sm:$0x1]
      %v325 = vld [vmem:[#allocation2 + $0x10a] sm:$0x1]
      %v326 = vld [vmem:[#allocation2 + $0x122] sm:$0x1]
      %v327 = vld [vmem:[#allocation2 + $0x13a] sm:$0x1]
      %v328 = vld [vmem:[#allocation2 + $0x152] sm:$0x1]
      %v329 = vld [vmem:[#allocation2 + $0x16a] sm:$0x1]
      %v330 = vld [vmem:[#allocation2 + $0x182] sm:$0x1]
      %v331 = vld [vmem:[#allocation2 + $0x19a] sm:$0x1]
      %vm332 = vcmask 24576
      %333 = vst.msk [vmem:[#allocation2] sm:$0x1] %vm332, %v314
      %334 = vst.msk [vmem:[#allocation2 + $0x18] sm:$0x1] %vm332, %v315
      %335 = vst.msk [vmem:[#allocation2 + $0x30] sm:$0x1] %vm332, %v316
      %336 = vst.msk [vmem:[#allocation2 + $0x48] sm:$0x1] %vm332, %v317
      %337 = vst.msk [vmem:[#allocation2 + $0x60] sm:$0x1] %vm332, %v318
      %338 = vst.msk [vmem:[#allocation2 + $0x78] sm:$0x1] %vm332, %v319
      %339 = vst.msk [vmem:[#allocation2 + $0x90] sm:$0x1] %vm332, %v320
      %340 = vst.msk [vmem:[#allocation2 + $0xa8] sm:$0x1] %vm332, %v321
      %341 = vst.msk [vmem:[#allocation2 + $0xc0] sm:$0x1] %vm332, %v322
      %342 = vst.msk [vmem:[#allocation2 + $0xd8] sm:$0x1] %vm332, %v323
      %343 = vst.msk [vmem:[#allocation2 + $0xf0] sm:$0x1] %vm332, %v324
      %344 = vst.msk [vmem:[#allocation2 + $0x108] sm:$0x1] %vm332, %v325
      %345 = vst.msk [vmem:[#allocation2 + $0x120] sm:$0x1] %vm332, %v326
      %346 = vst.msk [vmem:[#allocation2 + $0x138] sm:$0x1] %vm332, %v327
      %347 = vst.msk [vmem:[#allocation2 + $0x150] sm:$0x1] %vm332, %v328
      %348 = vst.msk [vmem:[#allocation2 + $0x168] sm:$0x1] %vm332, %v329
      %349 = vst.msk [vmem:[#allocation2 + $0x180] sm:$0x1] %vm332, %v330
      %350 = vst.msk [vmem:[#allocation2 + $0x198] sm:$0x1] %vm332, %v331
      %v351 = vld [vmem:[#allocation2 + $0xf] sm:$0x1]
      %v352 = vld [vmem:[#allocation2 + $0x27] sm:$0x1]
      %v353 = vld [vmem:[#allocation2 + $0x3f] sm:$0x1]
      %v354 = vld [vmem:[#allocation2 + $0x57] sm:$0x1]
      %v355 = vld [vmem:[#allocation2 + $0x6f] sm:$0x1]
      %v356 = vld [vmem:[#allocation2 + $0x87] sm:$0x1]
      %v357 = vld [vmem:[#allocation2 + $0x9f] sm:$0x1]
      %v358 = vld [vmem:[#allocation2 + $0xb7] sm:$0x1]
      %v359 = vld [vmem:[#allocation2 + $0xcf] sm:$0x1]
      %v360 = vld [vmem:[#allocation2 + $0xe7] sm:$0x1]
      %v361 = vld [vmem:[#allocation2 + $0xff] sm:$0x1]
      %v362 = vld [vmem:[#allocation2 + $0x117] sm:$0x1]
      %v363 = vld [vmem:[#allocation2 + $0x12f] sm:$0x1]
      %v364 = vld [vmem:[#allocation2 + $0x147] sm:$0x1]
      %v365 = vld [vmem:[#allocation2 + $0x15f] sm:$0x1]
      %v366 = vld [vmem:[#allocation2 + $0x177] sm:$0x1]
      %v367 = vld [vmem:[#allocation2 + $0x18f] sm:$0x1]
      %v368 = vld [vmem:[#allocation2 + $0x1a7] sm:$0x1]
      %369 = vst.msk [vmem:[#allocation2 + $0x11] sm:$0x1] %vm332, %v351
      %370 = vst.msk [vmem:[#allocation2 + $0x29] sm:$0x1] %vm332, %v352
      %371 = vst.msk [vmem:[#allocation2 + $0x41] sm:$0x1] %vm332, %v353
      %372 = vst.msk [vmem:[#allocation2 + $0x59] sm:$0x1] %vm332, %v354
      %373 = vst.msk [vmem:[#allocation2 + $0x71] sm:$0x1] %vm332, %v355
      %374 = vst.msk [vmem:[#allocation2 + $0x89] sm:$0x1] %vm332, %v356
      %375 = vst.msk [vmem:[#allocation2 + $0xa1] sm:$0x1] %vm332, %v357
      %376 = vst.msk [vmem:[#allocation2 + $0xb9] sm:$0x1] %vm332, %v358
      %377 = vst.msk [vmem:[#allocation2 + $0xd1] sm:$0x1] %vm332, %v359
      %378 = vst.msk [vmem:[#allocation2 + $0xe9] sm:$0x1] %vm332, %v360
      %379 = vst.msk [vmem:[#allocation2 + $0x101] sm:$0x1] %vm332, %v361
      %380 = vst.msk [vmem:[#allocation2 + $0x119] sm:$0x1] %vm332, %v362
      %381 = vst.msk [vmem:[#allocation2 + $0x131] sm:$0x1] %vm332, %v363
      %382 = vst.msk [vmem:[#allocation2 + $0x149] sm:$0x1] %vm332, %v364
      %383 = vst.msk [vmem:[#allocation2 + $0x161] sm:$0x1] %vm332, %v365
      %384 = vst.msk [vmem:[#allocation2 + $0x179] sm:$0x1] %vm332, %v366
      %385 = vst.msk [vmem:[#allocation2 + $0x191] sm:$0x1] %vm332, %v367
      %386 = vst.msk [vmem:[#allocation2 + $0x1a9] sm:$0x1] %vm332, %v368
      %v387 = vld [vmem:[#allocation2] sm:$0xff]
      %v388 = vld [vmem:[#allocation2 + $0x8] sm:$0xff]
      %v389 = vld [vmem:[#allocation2 + $0x10] sm:$0x3]
      %v390 = vld [vmem:[#allocation2 + $0x18] sm:$0xff]
      %v391 = vld [vmem:[#allocation2 + $0x20] sm:$0xff]
      %v392 = vld [vmem:[#allocation2 + $0x28] sm:$0x3]
      %v393 = vld [vmem:[#allocation2 + $0x30] sm:$0xff]
      %v394 = vld [vmem:[#allocation2 + $0x38] sm:$0xff]
      %v395 = vld [vmem:[#allocation2 + $0x40] sm:$0x3]
      %v396 = vld [vmem:[#allocation2 + $0x48] sm:$0xff]
      %v397 = vld [vmem:[#allocation2 + $0x50] sm:$0xff]
      %v398 = vld [vmem:[#allocation2 + $0x58] sm:$0x3]
      %v399 = vld [vmem:[#allocation2 + $0x60] sm:$0xff]
      %v400 = vld [vmem:[#allocation2 + $0x68] sm:$0xff]
      %v401 = vld [vmem:[#allocation2 + $0x70] sm:$0x3]
      %v402 = vld [vmem:[#allocation2 + $0x78] sm:$0xff]
      %v403 = vld [vmem:[#allocation2 + $0x80] sm:$0xff]
      %v404 = vld [vmem:[#allocation2 + $0x88] sm:$0x3]
      %v405 = vld [vmem:[#allocation2 + $0x90] sm:$0xff]
      %v406 = vld [vmem:[#allocation2 + $0x98] sm:$0xff]
      %v407 = vld [vmem:[#allocation2 + $0xa0] sm:$0x3]
      %v408 = vld [vmem:[#allocation2 + $0xa8] sm:$0xff]
      %v409 = vld [vmem:[#allocation2 + $0xb0] sm:$0xff]
      %v410 = vld [vmem:[#allocation2 + $0xb8] sm:$0x3]
      %v411 = vld [vmem:[#allocation2 + $0xc0] sm:$0xff]
      %v412 = vld [vmem:[#allocation2 + $0xc8] sm:$0xff]
      %v413 = vld [vmem:[#allocation2 + $0xd0] sm:$0x3]
      %v414 = vld [vmem:[#allocation2 + $0xd8] sm:$0xff]
      %v415 = vld [vmem:[#allocation2 + $0xe0] sm:$0xff]
      %v416 = vld [vmem:[#allocation2 + $0xe8] sm:$0x3]
      %v417 = vld [vmem:[#allocation2 + $0xf0] sm:$0xff]
      %v418 = vld [vmem:[#allocation2 + $0xf8] sm:$0xff]
      %v419 = vld [vmem:[#allocation2 + $0x100] sm:$0x3]
      %v420 = vld [vmem:[#allocation2 + $0x108] sm:$0xff]
      %v421 = vld [vmem:[#allocation2 + $0x110] sm:$0xff]
      %v422 = vld [vmem:[#allocation2 + $0x118] sm:$0x3]
      %v423 = vld [vmem:[#allocation2 + $0x120] sm:$0xff]
      %v424 = vld [vmem:[#allocation2 + $0x128] sm:$0xff]
      %v425 = vld [vmem:[#allocation2 + $0x130] sm:$0x3]
      %v426 = vld [vmem:[#allocation2 + $0x138] sm:$0xff]
      %v427 = vld [vmem:[#allocation2 + $0x140] sm:$0xff]
      %v428 = vld [vmem:[#allocation2 + $0x148] sm:$0x3]
      %v429 = vld [vmem:[#allocation2 + $0x150] sm:$0xff]
      %v430 = vld [vmem:[#allocation2 + $0x158] sm:$0xff]
      %v431 = vld [vmem:[#allocation2 + $0x160] sm:$0x3]
      %v432 = vld [vmem:[#allocation2 + $0x168] sm:$0xff]
      %v433 = vld [vmem:[#allocation2 + $0x170] sm:$0xff]
      %v434 = vld [vmem:[#allocation2 + $0x178] sm:$0x3]
      %v435 = vld [vmem:[#allocation2 + $0x180] sm:$0xff]
      %v436 = vld [vmem:[#allocation2 + $0x188] sm:$0xff]
      %v437 = vld [vmem:[#allocation2 + $0x190] sm:$0x3]
      %v438 = vld [vmem:[#allocation2 + $0x198] sm:$0xff]
      %v439 = vld [vmem:[#allocation2 + $0x1a0] sm:$0xff]
      %v440 = vld [vmem:[#allocation2 + $0x1a8] sm:$0x3]
      %vm489 = vcmask 1046528
      %v490 = vrot.slane %v387, 1
      %v491 = vrot.slane %v388, 1
      %v492 = vsel %vm489, %v490, %v491
      %v493 = vrot.slane %v389, 1
      %v494 = vsel %vm489, %v491, %v493
      %v495 = vrot.slane %v390, 1
      %v496 = vrot.slane %v391, 1
      %v497 = vsel %vm489, %v495, %v496
      %v498 = vrot.slane %v392, 1
      %v499 = vsel %vm489, %v496, %v498
      %v500 = vrot.slane %v393, 1
      %v501 = vrot.slane %v394, 1
      %v502 = vsel %vm489, %v500, %v501
      %v503 = vrot.slane %v395, 1
      %v504 = vsel %vm489, %v501, %v503
      %v505 = vrot.slane %v396, 1
      %v506 = vrot.slane %v397, 1
      %v507 = vsel %vm489, %v505, %v506
      %v508 = vrot.slane %v398, 1
      %v509 = vsel %vm489, %v506, %v508
      %v510 = vrot.slane %v399, 1
      %v511 = vrot.slane %v400, 1
      %v512 = vsel %vm489, %v510, %v511
      %v513 = vrot.slane %v401, 1
      %v514 = vsel %vm489, %v511, %v513
      %v515 = vrot.slane %v402, 1
      %v516 = vrot.slane %v403, 1
      %v517 = vsel %vm489, %v515, %v516
      %v518 = vrot.slane %v404, 1
      %v519 = vsel %vm489, %v516, %v518
      %v520 = vrot.slane %v405, 1
      %v521 = vrot.slane %v406, 1
      %v522 = vsel %vm489, %v520, %v521
      %v523 = vrot.slane %v407, 1
      %v524 = vsel %vm489, %v521, %v523
      %v525 = vrot.slane %v408, 1
      %v526 = vrot.slane %v409, 1
      %v527 = vsel %vm489, %v525, %v526
      %v528 = vrot.slane %v410, 1
      %v529 = vsel %vm489, %v526, %v528
      %v530 = vrot.slane %v411, 1
      %v531 = vrot.slane %v412, 1
      %v532 = vsel %vm489, %v530, %v531
      %v533 = vrot.slane %v413, 1
      %v534 = vsel %vm489, %v531, %v533
      %v535 = vrot.slane %v414, 1
      %v536 = vrot.slane %v415, 1
      %v537 = vsel %vm489, %v535, %v536
      %v538 = vrot.slane %v416, 1
      %v539 = vsel %vm489, %v536, %v538
      %v540 = vrot.slane %v417, 1
      %v541 = vrot.slane %v418, 1
      %v542 = vsel %vm489, %v540, %v541
      %v543 = vrot.slane %v419, 1
      %v544 = vsel %vm489, %v541, %v543
      %v545 = vrot.slane %v420, 1
      %v546 = vrot.slane %v421, 1
      %v547 = vsel %vm489, %v545, %v546
      %v548 = vrot.slane %v422, 1
      %v549 = vsel %vm489, %v546, %v548
      %v550 = vrot.slane %v423, 1
      %v551 = vrot.slane %v424, 1
      %v552 = vsel %vm489, %v550, %v551
      %v553 = vrot.slane %v425, 1
      %v554 = vsel %vm489, %v551, %v553
      %v555 = vrot.slane %v426, 1
      %v556 = vrot.slane %v427, 1
      %v557 = vsel %vm489, %v555, %v556
      %v558 = vrot.slane %v428, 1
      %v559 = vsel %vm489, %v556, %v558
      %v560 = vrot.slane %v429, 1
      %v561 = vrot.slane %v430, 1
      %v562 = vsel %vm489, %v560, %v561
      %v563 = vrot.slane %v431, 1
      %v564 = vsel %vm489, %v561, %v563
      %v565 = vrot.slane %v432, 1
      %v566 = vrot.slane %v433, 1
      %v567 = vsel %vm489, %v565, %v566
      %v568 = vrot.slane %v434, 1
      %v569 = vsel %vm489, %v566, %v568
      %vm570 = vcmask 1045504
      %v571 = vrot.slane %v387, 2
      %v572 = vrot.slane %v388, 2
      %v573 = vsel %vm570, %v571, %v572
      %v574 = vrot.slane %v389, 2
      %v575 = vsel %vm570, %v572, %v574
      %v576 = vrot.slane %v390, 2
      %v577 = vrot.slane %v391, 2
      %v578 = vsel %vm570, %v576, %v577
      %v579 = vrot.slane %v392, 2
      %v580 = vsel %vm570, %v577, %v579
      %v581 = vrot.slane %v393, 2
      %v582 = vrot.slane %v394, 2
      %v583 = vsel %vm570, %v581, %v582
      %v584 = vrot.slane %v395, 2
      %v585 = vsel %vm570, %v582, %v584
      %v586 = vrot.slane %v396, 2
      %v587 = vrot.slane %v397, 2
      %v588 = vsel %vm570, %v586, %v587
      %v589 = vrot.slane %v398, 2
      %v590 = vsel %vm570, %v587, %v589
      %v591 = vrot.slane %v399, 2
      %v592 = vrot.slane %v400, 2
      %v593 = vsel %vm570, %v591, %v592
      %v594 = vrot.slane %v401, 2
      %v595 = vsel %vm570, %v592, %v594
      %v596 = vrot.slane %v402, 2
      %v597 = vrot.slane %v403, 2
      %v598 = vsel %vm570, %v596, %v597
      %v599 = vrot.slane %v404, 2
      %v600 = vsel %vm570, %v597, %v599
      %v601 = vrot.slane %v405, 2
      %v602 = vrot.slane %v406, 2
      %v603 = vsel %vm570, %v601, %v602
      %v604 = vrot.slane %v407, 2
      %v605 = vsel %vm570, %v602, %v604
      %v606 = vrot.slane %v408, 2
      %v607 = vrot.slane %v409, 2
      %v608 = vsel %vm570, %v606, %v607
      %v609 = vrot.slane %v410, 2
      %v610 = vsel %vm570, %v607, %v609
      %v611 = vrot.slane %v411, 2
      %v612 = vrot.slane %v412, 2
      %v613 = vsel %vm570, %v611, %v612
      %v614 = vrot.slane %v413, 2
      %v615 = vsel %vm570, %v612, %v614
      %v616 = vrot.slane %v414, 2
      %v617 = vrot.slane %v415, 2
      %v618 = vsel %vm570, %v616, %v617
      %v619 = vrot.slane %v416, 2
      %v620 = vsel %vm570, %v617, %v619
      %v621 = vrot.slane %v417, 2
      %v622 = vrot.slane %v418, 2
      %v623 = vsel %vm570, %v621, %v622
      %v624 = vrot.slane %v419, 2
      %v625 = vsel %vm570, %v622, %v624
      %v626 = vrot.slane %v420, 2
      %v627 = vrot.slane %v421, 2
      %v628 = vsel %vm570, %v626, %v627
      %v629 = vrot.slane %v422, 2
      %v630 = vsel %vm570, %v627, %v629
      %v631 = vrot.slane %v423, 2
      %v632 = vrot.slane %v424, 2
      %v633 = vsel %vm570, %v631, %v632
      %v634 = vrot.slane %v425, 2
      %v635 = vsel %vm570, %v632, %v634
      %v636 = vrot.slane %v426, 2
      %v637 = vrot.slane %v427, 2
      %v638 = vsel %vm570, %v636, %v637
      %v639 = vrot.slane %v428, 2
      %v640 = vsel %vm570, %v637, %v639
      %v641 = vrot.slane %v429, 2
      %v642 = vrot.slane %v430, 2
      %v643 = vsel %vm570, %v641, %v642
      %v644 = vrot.slane %v431, 2
      %v645 = vsel %vm570, %v642, %v644
      %v646 = vrot.slane %v432, 2
      %v647 = vrot.slane %v433, 2
      %v648 = vsel %vm570, %v646, %v647
      %v649 = vrot.slane %v434, 2
      %v650 = vsel %vm570, %v647, %v649
      %v654 = vrot.slane %v435, 1
      %v655 = vrot.slane %v436, 1
      %v656 = vsel %vm489, %v654, %v655
      %v657 = vrot.slane %v437, 1
      %v658 = vsel %vm489, %v655, %v657
      %v659 = vrot.slane %v435, 2
      %v660 = vrot.slane %v436, 2
      %v661 = vsel %vm570, %v659, %v660
      %v662 = vrot.slane %v437, 2
      %v663 = vsel %vm570, %v660, %v662
      %v667 = vrot.slane %v438, 1
      %v668 = vrot.slane %v439, 1
      %v669 = vsel %vm489, %v667, %v668
      %v670 = vrot.slane %v440, 1
      %v671 = vsel %vm489, %v668, %v670
      %v672 = vrot.slane %v438, 2
      %v673 = vrot.slane %v439, 2
      %v674 = vsel %vm570, %v672, %v673
      %v675 = vrot.slane %v440, 2
      %v676 = vsel %vm570, %v673, %v675
      %677 = vrot.lane.b32.xlu0 %v492, 4
      %v678 = vpop.permute.xlu0 %677
      %679 = vrot.lane.b32.xlu0 %v494, 4
      %v680 = vpop.permute.xlu0 %679
      %681 = vrot.lane.b32.xlu0 %v497, 4
      %v682 = vpop.permute.xlu0 %681
      %683 = vrot.lane.b32.xlu0 %v499, 4
      %v684 = vpop.permute.xlu0 %683
      %685 = vrot.lane.b32.xlu0 %v502, 4
      %v686 = vpop.permute.xlu0 %685
      %687 = vrot.lane.b32.xlu0 %v504, 4
      %v688 = vpop.permute.xlu0 %687
      %689 = vrot.lane.b32.xlu0 %v507, 4
      %v690 = vpop.permute.xlu0 %689
      %691 = vrot.lane.b32.xlu0 %v509, 4
      %v692 = vpop.permute.xlu0 %691
      %693 = vrot.lane.b32.xlu0 %v512, 4
      %v694 = vpop.permute.xlu0 %693
      %695 = vrot.lane.b32.xlu0 %v514, 4
      %v696 = vpop.permute.xlu0 %695
      %697 = vrot.lane.b32.xlu0 %v517, 4
      %v698 = vpop.permute.xlu0 %697
      %699 = vrot.lane.b32.xlu0 %v519, 4
      %v700 = vpop.permute.xlu0 %699
      %701 = vrot.lane.b32.xlu0 %v522, 4
      %v702 = vpop.permute.xlu0 %701
      %703 = vrot.lane.b32.xlu0 %v524, 4
      %v704 = vpop.permute.xlu0 %703
      %705 = vrot.lane.b32.xlu0 %v527, 4
      %v706 = vpop.permute.xlu0 %705
      %707 = vrot.lane.b32.xlu0 %v529, 4
      %v708 = vpop.permute.xlu0 %707
      %709 = vrot.lane.b32.xlu0 %v532, 4
      %v710 = vpop.permute.xlu0 %709
      %711 = vrot.lane.b32.xlu0 %v534, 4
      %v712 = vpop.permute.xlu0 %711
      %713 = vrot.lane.b32.xlu0 %v537, 4
      %v714 = vpop.permute.xlu0 %713
      %715 = vrot.lane.b32.xlu0 %v539, 4
      %v716 = vpop.permute.xlu0 %715
      %717 = vrot.lane.b32.xlu0 %v542, 4
      %v718 = vpop.permute.xlu0 %717
      %719 = vrot.lane.b32.xlu0 %v544, 4
      %v720 = vpop.permute.xlu0 %719
      %721 = vrot.lane.b32.xlu0 %v547, 4
      %v722 = vpop.permute.xlu0 %721
      %723 = vrot.lane.b32.xlu0 %v549, 4
      %v724 = vpop.permute.xlu0 %723
      %725 = vrot.lane.b32.xlu0 %v552, 4
      %v726 = vpop.permute.xlu0 %725
      %727 = vrot.lane.b32.xlu0 %v554, 4
      %v728 = vpop.permute.xlu0 %727
      %729 = vrot.lane.b32.xlu0 %v557, 4
      %v730 = vpop.permute.xlu0 %729
      %731 = vrot.lane.b32.xlu0 %v559, 4
      %v732 = vpop.permute.xlu0 %731
      %733 = vrot.lane.b32.xlu0 %v562, 4
      %v734 = vpop.permute.xlu0 %733
      %735 = vrot.lane.b32.xlu0 %v564, 4
      %v736 = vpop.permute.xlu0 %735
      %737 = vrot.lane.b32.xlu0 %v567, 4
      %v738 = vpop.permute.xlu0 %737
      %739 = vrot.lane.b32.xlu0 %v569, 4
      %v740 = vpop.permute.xlu0 %739
      %773 = vrot.lane.b32.xlu0 %v573, 8
      %v774 = vpop.permute.xlu0 %773
      %775 = vrot.lane.b32.xlu0 %v575, 8
      %v776 = vpop.permute.xlu0 %775
      %777 = vrot.lane.b32.xlu0 %v578, 8
      %v778 = vpop.permute.xlu0 %777
      %779 = vrot.lane.b32.xlu0 %v580, 8
      %v780 = vpop.permute.xlu0 %779
      %781 = vrot.lane.b32.xlu0 %v583, 8
      %v782 = vpop.permute.xlu0 %781
      %783 = vrot.lane.b32.xlu0 %v585, 8
      %v784 = vpop.permute.xlu0 %783
      %785 = vrot.lane.b32.xlu0 %v588, 8
      %v786 = vpop.permute.xlu0 %785
      %787 = vrot.lane.b32.xlu0 %v590, 8
      %v788 = vpop.permute.xlu0 %787
      %789 = vrot.lane.b32.xlu0 %v593, 8
      %v790 = vpop.permute.xlu0 %789
      %791 = vrot.lane.b32.xlu0 %v595, 8
      %v792 = vpop.permute.xlu0 %791
      %793 = vrot.lane.b32.xlu0 %v598, 8
      %v794 = vpop.permute.xlu0 %793
      %795 = vrot.lane.b32.xlu0 %v600, 8
      %v796 = vpop.permute.xlu0 %795
      %797 = vrot.lane.b32.xlu0 %v603, 8
      %v798 = vpop.permute.xlu0 %797
      %799 = vrot.lane.b32.xlu0 %v605, 8
      %v800 = vpop.permute.xlu0 %799
      %801 = vrot.lane.b32.xlu0 %v608, 8
      %v802 = vpop.permute.xlu0 %801
      %803 = vrot.lane.b32.xlu0 %v610, 8
      %v804 = vpop.permute.xlu0 %803
      %805 = vrot.lane.b32.xlu0 %v613, 8
      %v806 = vpop.permute.xlu0 %805
      %807 = vrot.lane.b32.xlu0 %v615, 8
      %v808 = vpop.permute.xlu0 %807
      %809 = vrot.lane.b32.xlu0 %v618, 8
      %v810 = vpop.permute.xlu0 %809
      %811 = vrot.lane.b32.xlu0 %v620, 8
      %v812 = vpop.permute.xlu0 %811
      %813 = vrot.lane.b32.xlu0 %v623, 8
      %v814 = vpop.permute.xlu0 %813
      %815 = vrot.lane.b32.xlu0 %v625, 8
      %v816 = vpop.permute.xlu0 %815
      %817 = vrot.lane.b32.xlu0 %v628, 8
      %v818 = vpop.permute.xlu0 %817
      %819 = vrot.lane.b32.xlu0 %v630, 8
      %v820 = vpop.permute.xlu0 %819
      %821 = vrot.lane.b32.xlu0 %v633, 8
      %v822 = vpop.permute.xlu0 %821
      %823 = vrot.lane.b32.xlu0 %v635, 8
      %v824 = vpop.permute.xlu0 %823
      %825 = vrot.lane.b32.xlu0 %v638, 8
      %v826 = vpop.permute.xlu0 %825
      %827 = vrot.lane.b32.xlu0 %v640, 8
      %v828 = vpop.permute.xlu0 %827
      %829 = vrot.lane.b32.xlu0 %v643, 8
      %v830 = vpop.permute.xlu0 %829
      %831 = vrot.lane.b32.xlu0 %v645, 8
      %v832 = vpop.permute.xlu0 %831
      %833 = vrot.lane.b32.xlu0 %v648, 8
      %v834 = vpop.permute.xlu0 %833
      %835 = vrot.lane.b32.xlu0 %v650, 8
      %v836 = vpop.permute.xlu0 %835
      %869 = vrot.lane.b32.xlu0 %v390, 12
      %v870 = vpop.permute.xlu0 %869
      %871 = vrot.lane.b32.xlu0 %v391, 12
      %v872 = vpop.permute.xlu0 %871
      %873 = vrot.lane.b32.xlu0 %v393, 12
      %v874 = vpop.permute.xlu0 %873
      %875 = vrot.lane.b32.xlu0 %v394, 12
      %v876 = vpop.permute.xlu0 %875
      %877 = vrot.lane.b32.xlu0 %v396, 12
      %v878 = vpop.permute.xlu0 %877
      %879 = vrot.lane.b32.xlu0 %v397, 12
      %v880 = vpop.permute.xlu0 %879
      %881 = vrot.lane.b32.xlu0 %v399, 12
      %v882 = vpop.permute.xlu0 %881
      %883 = vrot.lane.b32.xlu0 %v400, 12
      %v884 = vpop.permute.xlu0 %883
      %885 = vrot.lane.b32.xlu0 %v402, 12
      %v886 = vpop.permute.xlu0 %885
      %887 = vrot.lane.b32.xlu0 %v403, 12
      %v888 = vpop.permute.xlu0 %887
      %889 = vrot.lane.b32.xlu0 %v405, 12
      %v890 = vpop.permute.xlu0 %889
      %891 = vrot.lane.b32.xlu0 %v406, 12
      %v892 = vpop.permute.xlu0 %891
      %893 = vrot.lane.b32.xlu0 %v408, 12
      %v894 = vpop.permute.xlu0 %893
      %895 = vrot.lane.b32.xlu0 %v409, 12
      %v896 = vpop.permute.xlu0 %895
      %897 = vrot.lane.b32.xlu0 %v411, 12
      %v898 = vpop.permute.xlu0 %897
      %899 = vrot.lane.b32.xlu0 %v412, 12
      %v900 = vpop.permute.xlu0 %899
      %901 = vrot.lane.b32.xlu0 %v414, 12
      %v902 = vpop.permute.xlu0 %901
      %903 = vrot.lane.b32.xlu0 %v415, 12
      %v904 = vpop.permute.xlu0 %903
      %905 = vrot.lane.b32.xlu0 %v417, 12
      %v906 = vpop.permute.xlu0 %905
      %907 = vrot.lane.b32.xlu0 %v418, 12
      %v908 = vpop.permute.xlu0 %907
      %909 = vrot.lane.b32.xlu0 %v420, 12
      %v910 = vpop.permute.xlu0 %909
      %911 = vrot.lane.b32.xlu0 %v421, 12
      %v912 = vpop.permute.xlu0 %911
      %913 = vrot.lane.b32.xlu0 %v423, 12
      %v914 = vpop.permute.xlu0 %913
      %915 = vrot.lane.b32.xlu0 %v424, 12
      %v916 = vpop.permute.xlu0 %915
      %917 = vrot.lane.b32.xlu0 %v426, 12
      %v918 = vpop.permute.xlu0 %917
      %919 = vrot.lane.b32.xlu0 %v427, 12
      %v920 = vpop.permute.xlu0 %919
      %921 = vrot.lane.b32.xlu0 %v429, 12
      %v922 = vpop.permute.xlu0 %921
      %923 = vrot.lane.b32.xlu0 %v430, 12
      %v924 = vpop.permute.xlu0 %923
      %925 = vrot.lane.b32.xlu0 %v432, 12
      %v926 = vpop.permute.xlu0 %925
      %927 = vrot.lane.b32.xlu0 %v433, 12
      %v928 = vpop.permute.xlu0 %927
      %929 = vrot.lane.b32.xlu0 %v435, 12
      %v930 = vpop.permute.xlu0 %929
      %931 = vrot.lane.b32.xlu0 %v436, 12
      %v932 = vpop.permute.xlu0 %931
      %965 = vrot.lane.b32.xlu0 %v497, 16
      %v966 = vpop.permute.xlu0 %965
      %967 = vrot.lane.b32.xlu0 %v499, 16
      %v968 = vpop.permute.xlu0 %967
      %969 = vrot.lane.b32.xlu0 %v502, 16
      %v970 = vpop.permute.xlu0 %969
      %971 = vrot.lane.b32.xlu0 %v504, 16
      %v972 = vpop.permute.xlu0 %971
      %973 = vrot.lane.b32.xlu0 %v507, 16
      %v974 = vpop.permute.xlu0 %973
      %975 = vrot.lane.b32.xlu0 %v509, 16
      %v976 = vpop.permute.xlu0 %975
      %977 = vrot.lane.b32.xlu0 %v512, 16
      %v978 = vpop.permute.xlu0 %977
      %979 = vrot.lane.b32.xlu0 %v514, 16
      %v980 = vpop.permute.xlu0 %979
      %981 = vrot.lane.b32.xlu0 %v517, 16
      %v982 = vpop.permute.xlu0 %981
      %983 = vrot.lane.b32.xlu0 %v519, 16
      %v984 = vpop.permute.xlu0 %983
      %985 = vrot.lane.b32.xlu0 %v522, 16
      %v986 = vpop.permute.xlu0 %985
      %987 = vrot.lane.b32.xlu0 %v524, 16
      %v988 = vpop.permute.xlu0 %987
      %989 = vrot.lane.b32.xlu0 %v527, 16
      %v990 = vpop.permute.xlu0 %989
      %991 = vrot.lane.b32.xlu0 %v529, 16
      %v992 = vpop.permute.xlu0 %991
      %993 = vrot.lane.b32.xlu0 %v532, 16
      %v994 = vpop.permute.xlu0 %993
      %995 = vrot.lane.b32.xlu0 %v534, 16
      %v996 = vpop.permute.xlu0 %995
      %997 = vrot.lane.b32.xlu0 %v537, 16
      %v998 = vpop.permute.xlu0 %997
      %999 = vrot.lane.b32.xlu0 %v539, 16
      %v1000 = vpop.permute.xlu0 %999
      %1001 = vrot.lane.b32.xlu0 %v542, 16
      %v1002 = vpop.permute.xlu0 %1001
      %1003 = vrot.lane.b32.xlu0 %v544, 16
      %v1004 = vpop.permute.xlu0 %1003
      %1005 = vrot.lane.b32.xlu0 %v547, 16
      %v1006 = vpop.permute.xlu0 %1005
      %1007 = vrot.lane.b32.xlu0 %v549, 16
      %v1008 = vpop.permute.xlu0 %1007
      %1009 = vrot.lane.b32.xlu0 %v552, 16
      %v1010 = vpop.permute.xlu0 %1009
      %1011 = vrot.lane.b32.xlu0 %v554, 16
      %v1012 = vpop.permute.xlu0 %1011
      %1013 = vrot.lane.b32.xlu0 %v557, 16
      %v1014 = vpop.permute.xlu0 %1013
      %1015 = vrot.lane.b32.xlu0 %v559, 16
      %v1016 = vpop.permute.xlu0 %1015
      %1017 = vrot.lane.b32.xlu0 %v562, 16
      %v1018 = vpop.permute.xlu0 %1017
      %1019 = vrot.lane.b32.xlu0 %v564, 16
      %v1020 = vpop.permute.xlu0 %1019
      %1021 = vrot.lane.b32.xlu0 %v567, 16
      %v1022 = vpop.permute.xlu0 %1021
      %1023 = vrot.lane.b32.xlu0 %v569, 16
      %v1024 = vpop.permute.xlu0 %1023
      %1025 = vrot.lane.b32.xlu0 %v656, 16
      %v1026 = vpop.permute.xlu0 %1025
      %1027 = vrot.lane.b32.xlu0 %v658, 16
      %v1028 = vpop.permute.xlu0 %1027
      %1061 = vrot.lane.b32.xlu0 %v578, 20
      %v1062 = vpop.permute.xlu0 %1061
      %1063 = vrot.lane.b32.xlu0 %v580, 20
      %v1064 = vpop.permute.xlu0 %1063
      %1065 = vrot.lane.b32.xlu0 %v583, 20
      %v1066 = vpop.permute.xlu0 %1065
      %1067 = vrot.lane.b32.xlu0 %v585, 20
      %v1068 = vpop.permute.xlu0 %1067
      %1069 = vrot.lane.b32.xlu0 %v588, 20
      %v1070 = vpop.permute.xlu0 %1069
      %1071 = vrot.lane.b32.xlu0 %v590, 20
      %v1072 = vpop.permute.xlu0 %1071
      %1073 = vrot.lane.b32.xlu0 %v593, 20
      %v1074 = vpop.permute.xlu0 %1073
      %1075 = vrot.lane.b32.xlu0 %v595, 20
      %v1076 = vpop.permute.xlu0 %1075
      %1077 = vrot.lane.b32.xlu0 %v598, 20
      %v1078 = vpop.permute.xlu0 %1077
      %1079 = vrot.lane.b32.xlu0 %v600, 20
      %v1080 = vpop.permute.xlu0 %1079
      %1081 = vrot.lane.b32.xlu0 %v603, 20
      %v1082 = vpop.permute.xlu0 %1081
      %1083 = vrot.lane.b32.xlu0 %v605, 20
      %v1084 = vpop.permute.xlu0 %1083
      %1085 = vrot.lane.b32.xlu0 %v608, 20
      %v1086 = vpop.permute.xlu0 %1085
      %1087 = vrot.lane.b32.xlu0 %v610, 20
      %v1088 = vpop.permute.xlu0 %1087
      %1089 = vrot.lane.b32.xlu0 %v613, 20
      %v1090 = vpop.permute.xlu0 %1089
      %1091 = vrot.lane.b32.xlu0 %v615, 20
      %v1092 = vpop.permute.xlu0 %1091
      %1093 = vrot.lane.b32.xlu0 %v618, 20
      %v1094 = vpop.permute.xlu0 %1093
      %1095 = vrot.lane.b32.xlu0 %v620, 20
      %v1096 = vpop.permute.xlu0 %1095
      %1097 = vrot.lane.b32.xlu0 %v623, 20
      %v1098 = vpop.permute.xlu0 %1097
      %1099 = vrot.lane.b32.xlu0 %v625, 20
      %v1100 = vpop.permute.xlu0 %1099
      %1101 = vrot.lane.b32.xlu0 %v628, 20
      %v1102 = vpop.permute.xlu0 %1101
      %1103 = vrot.lane.b32.xlu0 %v630, 20
      %v1104 = vpop.permute.xlu0 %1103
      %1105 = vrot.lane.b32.xlu0 %v633, 20
      %v1106 = vpop.permute.xlu0 %1105
      %1107 = vrot.lane.b32.xlu0 %v635, 20
      %v1108 = vpop.permute.xlu0 %1107
      %1109 = vrot.lane.b32.xlu0 %v638, 20
      %v1110 = vpop.permute.xlu0 %1109
      %1111 = vrot.lane.b32.xlu0 %v640, 20
      %v1112 = vpop.permute.xlu0 %1111
      %1113 = vrot.lane.b32.xlu0 %v643, 20
      %v1114 = vpop.permute.xlu0 %1113
      %1115 = vrot.lane.b32.xlu0 %v645, 20
      %v1116 = vpop.permute.xlu0 %1115
      %1117 = vrot.lane.b32.xlu0 %v648, 20
      %v1118 = vpop.permute.xlu0 %1117
      %1119 = vrot.lane.b32.xlu0 %v650, 20
      %v1120 = vpop.permute.xlu0 %1119
      %1121 = vrot.lane.b32.xlu0 %v661, 20
      %v1122 = vpop.permute.xlu0 %1121
      %1123 = vrot.lane.b32.xlu0 %v663, 20
      %v1124 = vpop.permute.xlu0 %1123
      %1157 = vrot.lane.b32.xlu0 %v393, 24
      %v1158 = vpop.permute.xlu0 %1157
      %1159 = vrot.lane.b32.xlu0 %v394, 24
      %v1160 = vpop.permute.xlu0 %1159
      %1161 = vrot.lane.b32.xlu0 %v396, 24
      %v1162 = vpop.permute.xlu0 %1161
      %1163 = vrot.lane.b32.xlu0 %v397, 24
      %v1164 = vpop.permute.xlu0 %1163
      %1165 = vrot.lane.b32.xlu0 %v399, 24
      %v1166 = vpop.permute.xlu0 %1165
      %1167 = vrot.lane.b32.xlu0 %v400, 24
      %v1168 = vpop.permute.xlu0 %1167
      %1169 = vrot.lane.b32.xlu0 %v402, 24
      %v1170 = vpop.permute.xlu0 %1169
      %1171 = vrot.lane.b32.xlu0 %v403, 24
      %v1172 = vpop.permute.xlu0 %1171
      %1173 = vrot.lane.b32.xlu0 %v405, 24
      %v1174 = vpop.permute.xlu0 %1173
      %1175 = vrot.lane.b32.xlu0 %v406, 24
      %v1176 = vpop.permute.xlu0 %1175
      %1177 = vrot.lane.b32.xlu0 %v408, 24
      %v1178 = vpop.permute.xlu0 %1177
      %1179 = vrot.lane.b32.xlu0 %v409, 24
      %v1180 = vpop.permute.xlu0 %1179
      %1181 = vrot.lane.b32.xlu0 %v411, 24
      %v1182 = vpop.permute.xlu0 %1181
      %1183 = vrot.lane.b32.xlu0 %v412, 24
      %v1184 = vpop.permute.xlu0 %1183
      %1185 = vrot.lane.b32.xlu0 %v414, 24
      %v1186 = vpop.permute.xlu0 %1185
      %1187 = vrot.lane.b32.xlu0 %v415, 24
      %v1188 = vpop.permute.xlu0 %1187
      %1189 = vrot.lane.b32.xlu0 %v417, 24
      %v1190 = vpop.permute.xlu0 %1189
      %1191 = vrot.lane.b32.xlu0 %v418, 24
      %v1192 = vpop.permute.xlu0 %1191
      %1193 = vrot.lane.b32.xlu0 %v420, 24
      %v1194 = vpop.permute.xlu0 %1193
      %1195 = vrot.lane.b32.xlu0 %v421, 24
      %v1196 = vpop.permute.xlu0 %1195
      %1197 = vrot.lane.b32.xlu0 %v423, 24
      %v1198 = vpop.permute.xlu0 %1197
      %1199 = vrot.lane.b32.xlu0 %v424, 24
      %v1200 = vpop.permute.xlu0 %1199
      %1201 = vrot.lane.b32.xlu0 %v426, 24
      %v1202 = vpop.permute.xlu0 %1201
      %1203 = vrot.lane.b32.xlu0 %v427, 24
      %v1204 = vpop.permute.xlu0 %1203
      %1205 = vrot.lane.b32.xlu0 %v429, 24
      %v1206 = vpop.permute.xlu0 %1205
      %1207 = vrot.lane.b32.xlu0 %v430, 24
      %v1208 = vpop.permute.xlu0 %1207
      %1209 = vrot.lane.b32.xlu0 %v432, 24
      %v1210 = vpop.permute.xlu0 %1209
      %1211 = vrot.lane.b32.xlu0 %v433, 24
      %v1212 = vpop.permute.xlu0 %1211
      %1213 = vrot.lane.b32.xlu0 %v435, 24
      %v1214 = vpop.permute.xlu0 %1213
      %1215 = vrot.lane.b32.xlu0 %v436, 24
      %v1216 = vpop.permute.xlu0 %1215
      %1217 = vrot.lane.b32.xlu0 %v438, 24
      %v1218 = vpop.permute.xlu0 %1217
      %1219 = vrot.lane.b32.xlu0 %v439, 24
      %v1220 = vpop.permute.xlu0 %1219
      %1253 = vrot.lane.b32.xlu0 %v502, 28
      %v1254 = vpop.permute.xlu0 %1253
      %1255 = vrot.lane.b32.xlu0 %v504, 28
      %v1256 = vpop.permute.xlu0 %1255
      %1257 = vrot.lane.b32.xlu0 %v507, 28
      %v1258 = vpop.permute.xlu0 %1257
      %1259 = vrot.lane.b32.xlu0 %v509, 28
      %v1260 = vpop.permute.xlu0 %1259
      %1261 = vrot.lane.b32.xlu0 %v512, 28
      %v1262 = vpop.permute.xlu0 %1261
      %1263 = vrot.lane.b32.xlu0 %v514, 28
      %v1264 = vpop.permute.xlu0 %1263
      %1265 = vrot.lane.b32.xlu0 %v517, 28
      %v1266 = vpop.permute.xlu0 %1265
      %1267 = vrot.lane.b32.xlu0 %v519, 28
      %v1268 = vpop.permute.xlu0 %1267
      %1269 = vrot.lane.b32.xlu0 %v522, 28
      %v1270 = vpop.permute.xlu0 %1269
      %1271 = vrot.lane.b32.xlu0 %v524, 28
      %v1272 = vpop.permute.xlu0 %1271
      %1273 = vrot.lane.b32.xlu0 %v527, 28
      %v1274 = vpop.permute.xlu0 %1273
      %1275 = vrot.lane.b32.xlu0 %v529, 28
      %v1276 = vpop.permute.xlu0 %1275
      %1277 = vrot.lane.b32.xlu0 %v532, 28
      %v1278 = vpop.permute.xlu0 %1277
      %1279 = vrot.lane.b32.xlu0 %v534, 28
      %v1280 = vpop.permute.xlu0 %1279
      %1281 = vrot.lane.b32.xlu0 %v537, 28
      %v1282 = vpop.permute.xlu0 %1281
      %1283 = vrot.lane.b32.xlu0 %v539, 28
      %v1284 = vpop.permute.xlu0 %1283
      %1285 = vrot.lane.b32.xlu0 %v542, 28
      %v1286 = vpop.permute.xlu0 %1285
      %1287 = vrot.lane.b32.xlu0 %v544, 28
      %v1288 = vpop.permute.xlu0 %1287
      %1289 = vrot.lane.b32.xlu0 %v547, 28
      %v1290 = vpop.permute.xlu0 %1289
      %1291 = vrot.lane.b32.xlu0 %v549, 28
      %v1292 = vpop.permute.xlu0 %1291
      %1293 = vrot.lane.b32.xlu0 %v552, 28
      %v1294 = vpop.permute.xlu0 %1293
      %1295 = vrot.lane.b32.xlu0 %v554, 28
      %v1296 = vpop.permute.xlu0 %1295
      %1297 = vrot.lane.b32.xlu0 %v557, 28
      %v1298 = vpop.permute.xlu0 %1297
      %1299 = vrot.lane.b32.xlu0 %v559, 28
      %v1300 = vpop.permute.xlu0 %1299
      %1301 = vrot.lane.b32.xlu0 %v562, 28
      %v1302 = vpop.permute.xlu0 %1301
      %1303 = vrot.lane.b32.xlu0 %v564, 28
      %v1304 = vpop.permute.xlu0 %1303
      %1305 = vrot.lane.b32.xlu0 %v567, 28
      %v1306 = vpop.permute.xlu0 %1305
      %1307 = vrot.lane.b32.xlu0 %v569, 28
      %v1308 = vpop.permute.xlu0 %1307
      %1309 = vrot.lane.b32.xlu0 %v656, 28
      %v1310 = vpop.permute.xlu0 %1309
      %1311 = vrot.lane.b32.xlu0 %v658, 28
      %v1312 = vpop.permute.xlu0 %1311
      %1313 = vrot.lane.b32.xlu0 %v669, 28
      %v1314 = vpop.permute.xlu0 %1313
      %1315 = vrot.lane.b32.xlu0 %v671, 28
      %v1316 = vpop.permute.xlu0 %1315
      %1349 = vrot.lane.b32.xlu0 %v583, 32
      %v1350 = vpop.permute.xlu0 %1349
      %1351 = vrot.lane.b32.xlu0 %v585, 32
      %v1352 = vpop.permute.xlu0 %1351
      %1353 = vrot.lane.b32.xlu0 %v588, 32
      %v1354 = vpop.permute.xlu0 %1353
      %1355 = vrot.lane.b32.xlu0 %v590, 32
      %v1356 = vpop.permute.xlu0 %1355
      %1357 = vrot.lane.b32.xlu0 %v593, 32
      %v1358 = vpop.permute.xlu0 %1357
      %1359 = vrot.lane.b32.xlu0 %v595, 32
      %v1360 = vpop.permute.xlu0 %1359
      %1361 = vrot.lane.b32.xlu0 %v598, 32
      %v1362 = vpop.permute.xlu0 %1361
      %1363 = vrot.lane.b32.xlu0 %v600, 32
      %v1364 = vpop.permute.xlu0 %1363
      %1365 = vrot.lane.b32.xlu0 %v603, 32
      %v1366 = vpop.permute.xlu0 %1365
      %1367 = vrot.lane.b32.xlu0 %v605, 32
      %v1368 = vpop.permute.xlu0 %1367
      %1369 = vrot.lane.b32.xlu0 %v608, 32
      %v1370 = vpop.permute.xlu0 %1369
      %1371 = vrot.lane.b32.xlu0 %v610, 32
      %v1372 = vpop.permute.xlu0 %1371
      %1373 = vrot.lane.b32.xlu0 %v613, 32
      %v1374 = vpop.permute.xlu0 %1373
      %1375 = vrot.lane.b32.xlu0 %v615, 32
      %v1376 = vpop.permute.xlu0 %1375
      %1377 = vrot.lane.b32.xlu0 %v618, 32
      %v1378 = vpop.permute.xlu0 %1377
      %1379 = vrot.lane.b32.xlu0 %v620, 32
      %v1380 = vpop.permute.xlu0 %1379
      %1381 = vrot.lane.b32.xlu0 %v623, 32
      %v1382 = vpop.permute.xlu0 %1381
      %1383 = vrot.lane.b32.xlu0 %v625, 32
      %v1384 = vpop.permute.xlu0 %1383
      %1385 = vrot.lane.b32.xlu0 %v628, 32
      %v1386 = vpop.permute.xlu0 %1385
      %1387 = vrot.lane.b32.xlu0 %v630, 32
      %v1388 = vpop.permute.xlu0 %1387
      %1389 = vrot.lane.b32.xlu0 %v633, 32
      %v1390 = vpop.permute.xlu0 %1389
      %1391 = vrot.lane.b32.xlu0 %v635, 32
      %v1392 = vpop.permute.xlu0 %1391
      %1393 = vrot.lane.b32.xlu0 %v638, 32
      %v1394 = vpop.permute.xlu0 %1393
      %1395 = vrot.lane.b32.xlu0 %v640, 32
      %v1396 = vpop.permute.xlu0 %1395
      %1397 = vrot.lane.b32.xlu0 %v643, 32
      %v1398 = vpop.permute.xlu0 %1397
      %1399 = vrot.lane.b32.xlu0 %v645, 32
      %v1400 = vpop.permute.xlu0 %1399
      %1401 = vrot.lane.b32.xlu0 %v648, 32
      %v1402 = vpop.permute.xlu0 %1401
      %1403 = vrot.lane.b32.xlu0 %v650, 32
      %v1404 = vpop.permute.xlu0 %1403
      %1405 = vrot.lane.b32.xlu0 %v661, 32
      %v1406 = vpop.permute.xlu0 %1405
      %1407 = vrot.lane.b32.xlu0 %v663, 32
      %v1408 = vpop.permute.xlu0 %1407
      %1409 = vrot.lane.b32.xlu0 %v674, 32
      %v1410 = vpop.permute.xlu0 %1409
      %1411 = vrot.lane.b32.xlu0 %v676, 32
      %v1412 = vpop.permute.xlu0 %1411
      %v1445 = vsel %vm270, %v387, %v678
      %v1446 = vsel %vm270, %v388, %v680
      %v1447 = vsel %vm270, %v390, %v682
      %v1448 = vsel %vm270, %v391, %v684
      %v1449 = vsel %vm270, %v393, %v686
      %v1450 = vsel %vm270, %v394, %v688
      %v1451 = vsel %vm270, %v396, %v690
      %v1452 = vsel %vm270, %v397, %v692
      %v1453 = vsel %vm270, %v399, %v694
      %v1454 = vsel %vm270, %v400, %v696
      %v1455 = vsel %vm270, %v402, %v698
      %v1456 = vsel %vm270, %v403, %v700
      %v1457 = vsel %vm270, %v405, %v702
      %v1458 = vsel %vm270, %v406, %v704
      %v1459 = vsel %vm270, %v408, %v706
      %v1460 = vsel %vm270, %v409, %v708
      %v1461 = vsel %vm270, %v411, %v710
      %v1462 = vsel %vm270, %v412, %v712
      %v1463 = vsel %vm270, %v414, %v714
      %v1464 = vsel %vm270, %v415, %v716
      %v1465 = vsel %vm270, %v417, %v718
      %v1466 = vsel %vm270, %v418, %v720
      %v1467 = vsel %vm270, %v420, %v722
      %v1468 = vsel %vm270, %v421, %v724
      %v1469 = vsel %vm270, %v423, %v726
      %v1470 = vsel %vm270, %v424, %v728
      %v1471 = vsel %vm270, %v426, %v730
      %v1472 = vsel %vm270, %v427, %v732
      %v1473 = vsel %vm270, %v429, %v734
      %v1474 = vsel %vm270, %v430, %v736
      %v1475 = vsel %vm270, %v432, %v738
      %v1476 = vsel %vm270, %v433, %v740
      %vm1477 = vcmask 64512
      %v1478 = vsel %vm1477, %v1445, %v774
      %v1479 = vsel %vm1477, %v1446, %v776
      %v1480 = vsel %vm1477, %v1447, %v778
      %v1481 = vsel %vm1477, %v1448, %v780
      %v1482 = vsel %vm1477, %v1449, %v782
      %v1483 = vsel %vm1477, %v1450, %v784
      %v1484 = vsel %vm1477, %v1451, %v786
      %v1485 = vsel %vm1477, %v1452, %v788
      %v1486 = vsel %vm1477, %v1453, %v790
      %v1487 = vsel %vm1477, %v1454, %v792
      %v1488 = vsel %vm1477, %v1455, %v794
      %v1489 = vsel %vm1477, %v1456, %v796
      %v1490 = vsel %vm1477, %v1457, %v798
      %v1491 = vsel %vm1477, %v1458, %v800
      %v1492 = vsel %vm1477, %v1459, %v802
      %v1493 = vsel %vm1477, %v1460, %v804
      %v1494 = vsel %vm1477, %v1461, %v806
      %v1495 = vsel %vm1477, %v1462, %v808
      %v1496 = vsel %vm1477, %v1463, %v810
      %v1497 = vsel %vm1477, %v1464, %v812
      %v1498 = vsel %vm1477, %v1465, %v814
      %v1499 = vsel %vm1477, %v1466, %v816
      %v1500 = vsel %vm1477, %v1467, %v818
      %v1501 = vsel %vm1477, %v1468, %v820
      %v1502 = vsel %vm1477, %v1469, %v822
      %v1503 = vsel %vm1477, %v1470, %v824
      %v1504 = vsel %vm1477, %v1471, %v826
      %v1505 = vsel %vm1477, %v1472, %v828
      %v1506 = vsel %vm1477, %v1473, %v830
      %v1507 = vsel %vm1477, %v1474, %v832
      %v1508 = vsel %vm1477, %v1475, %v834
      %v1509 = vsel %vm1477, %v1476, %v836
      %vm1510 = vcmask 97280
      %v1511 = vsel %vm1510, %v1478, %v870
      %v1512 = vsel %vm1510, %v1479, %v872
      %v1513 = vsel %vm1510, %v1480, %v874
      %v1514 = vsel %vm1510, %v1481, %v876
      %v1515 = vsel %vm1510, %v1482, %v878
      %v1516 = vsel %vm1510, %v1483, %v880
      %v1517 = vsel %vm1510, %v1484, %v882
      %v1518 = vsel %vm1510, %v1485, %v884
      %v1519 = vsel %vm1510, %v1486, %v886
      %v1520 = vsel %vm1510, %v1487, %v888
      %v1521 = vsel %vm1510, %v1488, %v890
      %v1522 = vsel %vm1510, %v1489, %v892
      %v1523 = vsel %vm1510, %v1490, %v894
      %v1524 = vsel %vm1510, %v1491, %v896
      %v1525 = vsel %vm1510, %v1492, %v898
      %v1526 = vsel %vm1510, %v1493, %v900
      %v1527 = vsel %vm1510, %v1494, %v902
      %v1528 = vsel %vm1510, %v1495, %v904
      %v1529 = vsel %vm1510, %v1496, %v906
      %v1530 = vsel %vm1510, %v1497, %v908
      %v1531 = vsel %vm1510, %v1498, %v910
      %v1532 = vsel %vm1510, %v1499, %v912
      %v1533 = vsel %vm1510, %v1500, %v914
      %v1534 = vsel %vm1510, %v1501, %v916
      %v1535 = vsel %vm1510, %v1502, %v918
      %v1536 = vsel %vm1510, %v1503, %v920
      %v1537 = vsel %vm1510, %v1504, %v922
      %v1538 = vsel %vm1510, %v1505, %v924
      %v1539 = vsel %vm1510, %v1506, %v926
      %v1540 = vsel %vm1510, %v1507, %v928
      %v1541 = vsel %vm1510, %v1508, %v930
      %v1542 = vsel %vm1510, %v1509, %v932
      %vm1543 = vcmask 130048
      %v1544 = vsel %vm1543, %v1511, %v966
      %v1545 = vsel %vm1543, %v1512, %v968
      %v1546 = vsel %vm1543, %v1513, %v970
      %v1547 = vsel %vm1543, %v1514, %v972
      %v1548 = vsel %vm1543, %v1515, %v974
      %v1549 = vsel %vm1543, %v1516, %v976
      %v1550 = vsel %vm1543, %v1517, %v978
      %v1551 = vsel %vm1543, %v1518, %v980
      %v1552 = vsel %vm1543, %v1519, %v982
      %v1553 = vsel %vm1543, %v1520, %v984
      %v1554 = vsel %vm1543, %v1521, %v986
      %v1555 = vsel %vm1543, %v1522, %v988
      %v1556 = vsel %vm1543, %v1523, %v990
      %v1557 = vsel %vm1543, %v1524, %v992
      %v1558 = vsel %vm1543, %v1525, %v994
      %v1559 = vsel %vm1543, %v1526, %v996
      %v1560 = vsel %vm1543, %v1527, %v998
      %v1561 = vsel %vm1543, %v1528, %v1000
      %v1562 = vsel %vm1543, %v1529, %v1002
      %v1563 = vsel %vm1543, %v1530, %v1004
      %v1564 = vsel %vm1543, %v1531, %v1006
      %v1565 = vsel %vm1543, %v1532, %v1008
      %v1566 = vsel %vm1543, %v1533, %v1010
      %v1567 = vsel %vm1543, %v1534, %v1012
      %v1568 = vsel %vm1543, %v1535, %v1014
      %v1569 = vsel %vm1543, %v1536, %v1016
      %v1570 = vsel %vm1543, %v1537, %v1018
      %v1571 = vsel %vm1543, %v1538, %v1020
      %v1572 = vsel %vm1543, %v1539, %v1022
      %v1573 = vsel %vm1543, %v1540, %v1024
      %v1574 = vsel %vm1543, %v1541, %v1026
      %v1575 = vsel %vm1543, %v1542, %v1028
      %vm1576 = vcmask 162816
      %v1577 = vsel %vm1576, %v1544, %v1062
      %v1578 = vsel %vm1576, %v1545, %v1064
      %v1579 = vsel %vm1576, %v1546, %v1066
      %v1580 = vsel %vm1576, %v1547, %v1068
      %v1581 = vsel %vm1576, %v1548, %v1070
      %v1582 = vsel %vm1576, %v1549, %v1072
      %v1583 = vsel %vm1576, %v1550, %v1074
      %v1584 = vsel %vm1576, %v1551, %v1076
      %v1585 = vsel %vm1576, %v1552, %v1078
      %v1586 = vsel %vm1576, %v1553, %v1080
      %v1587 = vsel %vm1576, %v1554, %v1082
      %v1588 = vsel %vm1576, %v1555, %v1084
      %v1589 = vsel %vm1576, %v1556, %v1086
      %v1590 = vsel %vm1576, %v1557, %v1088
      %v1591 = vsel %vm1576, %v1558, %v1090
      %v1592 = vsel %vm1576, %v1559, %v1092
      %v1593 = vsel %vm1576, %v1560, %v1094
      %v1594 = vsel %vm1576, %v1561, %v1096
      %v1595 = vsel %vm1576, %v1562, %v1098
      %v1596 = vsel %vm1576, %v1563, %v1100
      %v1597 = vsel %vm1576, %v1564, %v1102
      %v1598 = vsel %vm1576, %v1565, %v1104
      %v1599 = vsel %vm1576, %v1566, %v1106
      %v1600 = vsel %vm1576, %v1567, %v1108
      %v1601 = vsel %vm1576, %v1568, %v1110
      %v1602 = vsel %vm1576, %v1569, %v1112
      %v1603 = vsel %vm1576, %v1570, %v1114
      %v1604 = vsel %vm1576, %v1571, %v1116
      %v1605 = vsel %vm1576, %v1572, %v1118
      %v1606 = vsel %vm1576, %v1573, %v1120
      %v1607 = vsel %vm1576, %v1574, %v1122
      %v1608 = vsel %vm1576, %v1575, %v1124
      %vm1609 = vcmask 195584
      %v1610 = vsel %vm1609, %v1577, %v1158
      %v1611 = vsel %vm1609, %v1578, %v1160
      %v1612 = vsel %vm1609, %v1579, %v1162
      %v1613 = vsel %vm1609, %v1580, %v1164
      %v1614 = vsel %vm1609, %v1581, %v1166
      %v1615 = vsel %vm1609, %v1582, %v1168
      %v1616 = vsel %vm1609, %v1583, %v1170
      %v1617 = vsel %vm1609, %v1584, %v1172
      %v1618 = vsel %vm1609, %v1585, %v1174
      %v1619 = vsel %vm1609, %v1586, %v1176
      %v1620 = vsel %vm1609, %v1587, %v1178
      %v1621 = vsel %vm1609, %v1588, %v1180
      %v1622 = vsel %vm1609, %v1589, %v1182
      %v1623 = vsel %vm1609, %v1590, %v1184
      %v1624 = vsel %vm1609, %v1591, %v1186
      %v1625 = vsel %vm1609, %v1592, %v1188
      %v1626 = vsel %vm1609, %v1593, %v1190
      %v1627 = vsel %vm1609, %v1594, %v1192
      %v1628 = vsel %vm1609, %v1595, %v1194
      %v1629 = vsel %vm1609, %v1596, %v1196
      %v1630 = vsel %vm1609, %v1597, %v1198
      %v1631 = vsel %vm1609, %v1598, %v1200
      %v1632 = vsel %vm1609, %v1599, %v1202
      %v1633 = vsel %vm1609, %v1600, %v1204
      %v1634 = vsel %vm1609, %v1601, %v1206
      %v1635 = vsel %vm1609, %v1602, %v1208
      %v1636 = vsel %vm1609, %v1603, %v1210
      %v1637 = vsel %vm1609, %v1604, %v1212
      %v1638 = vsel %vm1609, %v1605, %v1214
      %v1639 = vsel %vm1609, %v1606, %v1216
      %v1640 = vsel %vm1609, %v1607, %v1218
      %v1641 = vsel %vm1609, %v1608, %v1220
      %vm1642 = vcmask 228352
      %v1643 = vsel %vm1642, %v1610, %v1254
      %v1644 = vsel %vm1642, %v1611, %v1256
      %v1645 = vsel %vm1642, %v1612, %v1258
      %v1646 = vsel %vm1642, %v1613, %v1260
      %v1647 = vsel %vm1642, %v1614, %v1262
      %v1648 = vsel %vm1642, %v1615, %v1264
      %v1649 = vsel %vm1642, %v1616, %v1266
      %v1650 = vsel %vm1642, %v1617, %v1268
      %v1651 = vsel %vm1642, %v1618, %v1270
      %v1652 = vsel %vm1642, %v1619, %v1272
      %v1653 = vsel %vm1642, %v1620, %v1274
      %v1654 = vsel %vm1642, %v1621, %v1276
      %v1655 = vsel %vm1642, %v1622, %v1278
      %v1656 = vsel %vm1642, %v1623, %v1280
      %v1657 = vsel %vm1642, %v1624, %v1282
      %v1658 = vsel %vm1642, %v1625, %v1284
      %v1659 = vsel %vm1642, %v1626, %v1286
      %v1660 = vsel %vm1642, %v1627, %v1288
      %v1661 = vsel %vm1642, %v1628, %v1290
      %v1662 = vsel %vm1642, %v1629, %v1292
      %v1663 = vsel %vm1642, %v1630, %v1294
      %v1664 = vsel %vm1642, %v1631, %v1296
      %v1665 = vsel %vm1642, %v1632, %v1298
      %v1666 = vsel %vm1642, %v1633, %v1300
      %v1667 = vsel %vm1642, %v1634, %v1302
      %v1668 = vsel %vm1642, %v1635, %v1304
      %v1669 = vsel %vm1642, %v1636, %v1306
      %v1670 = vsel %vm1642, %v1637, %v1308
      %v1671 = vsel %vm1642, %v1638, %v1310
      %v1672 = vsel %vm1642, %v1639, %v1312
      %v1673 = vsel %vm1642, %v1640, %v1314
      %v1674 = vsel %vm1642, %v1641, %v1316
      %vm1675 = vcmask 261120
      %v1676 = vsel %vm1675, %v1643, %v1350
      %v1677 = vsel %vm1675, %v1644, %v1352
      %v1678 = vsel %vm1675, %v1645, %v1354
      %v1679 = vsel %vm1675, %v1646, %v1356
      %v1680 = vsel %vm1675, %v1647, %v1358
      %v1681 = vsel %vm1675, %v1648, %v1360
      %v1682 = vsel %vm1675, %v1649, %v1362
      %v1683 = vsel %vm1675, %v1650, %v1364
      %v1684 = vsel %vm1675, %v1651, %v1366
      %v1685 = vsel %vm1675, %v1652, %v1368
      %v1686 = vsel %vm1675, %v1653, %v1370
      %v1687 = vsel %vm1675, %v1654, %v1372
      %v1688 = vsel %vm1675, %v1655, %v1374
      %v1689 = vsel %vm1675, %v1656, %v1376
      %v1690 = vsel %vm1675, %v1657, %v1378
      %v1691 = vsel %vm1675, %v1658, %v1380
      %v1692 = vsel %vm1675, %v1659, %v1382
      %v1693 = vsel %vm1675, %v1660, %v1384
      %v1694 = vsel %vm1675, %v1661, %v1386
      %v1695 = vsel %vm1675, %v1662, %v1388
      %v1696 = vsel %vm1675, %v1663, %v1390
      %v1697 = vsel %vm1675, %v1664, %v1392
      %v1698 = vsel %vm1675, %v1665, %v1394
      %v1699 = vsel %vm1675, %v1666, %v1396
      %v1700 = vsel %vm1675, %v1667, %v1398
      %v1701 = vsel %vm1675, %v1668, %v1400
      %v1702 = vsel %vm1675, %v1669, %v1402
      %v1703 = vsel %vm1675, %v1670, %v1404
      %v1704 = vsel %vm1675, %v1671, %v1406
      %v1705 = vsel %vm1675, %v1672, %v1408
      %v1706 = vsel %vm1675, %v1673, %v1410
      %v1707 = vsel %vm1675, %v1674, %v1412
      %v1709 = vlaneseq
      %v1710 = vshrl.u32 %v1709, 7
      %v1711 = vsub.s32 0, %v1710
      %v1712 = vrot.slane %v267, %v1711
      %vm1714 = vcmask 293888
      %v1716 = vsel %vm1714, %v1676, 0
      %v1719 = vsel %vm1714, %v1677, 0
      %v1722 = vsel %vm1714, %v1678, 0
      %v1725 = vsel %vm1714, %v1679, 0
      %v1728 = vsel %vm1714, %v1680, 0
      %v1731 = vsel %vm1714, %v1681, 0
      %v1734 = vsel %vm1714, %v1682, 0
      %v1737 = vsel %vm1714, %v1683, 0
      %v1740 = vsel %vm1714, %v1684, 0
      %v1743 = vsel %vm1714, %v1685, 0
      %v1746 = vsel %vm1714, %v1686, 0
      %v1749 = vsel %vm1714, %v1687, 0
      %v1752 = vsel %vm1714, %v1688, 0
      %v1755 = vsel %vm1714, %v1689, 0
      %v1758 = vsel %vm1714, %v1690, 0
      %v1761 = vsel %vm1714, %v1691, 0
      %v1764 = vsel %vm1714, %v1692, 0
      %v1767 = vsel %vm1714, %v1693, 0
      %v1770 = vsel %vm1714, %v1694, 0
      %v1773 = vsel %vm1714, %v1695, 0
      %v1776 = vsel %vm1714, %v1696, 0
      %v1779 = vsel %vm1714, %v1697, 0
      %v1782 = vsel %vm1714, %v1698, 0
      %v1785 = vsel %vm1714, %v1699, 0
      %v1788 = vsel %vm1714, %v1700, 0
      %v1791 = vsel %vm1714, %v1701, 0
      %v1794 = vsel %vm1714, %v1702, 0
      %v1797 = vsel %vm1714, %v1703, 0
      %v1800 = vsel %vm1714, %v1704, 0
      %v1803 = vsel %vm1714, %v1705, 0
      %v1806 = vsel %vm1714, %v1706, 0
      %v1809 = vsel %vm1714, %v1707, 0
      %vm1811 = vcmask 1043456
      %v1813 = vsel %vm1811, %v261, 0
      %1815 = vmatprep.subr.mxu0 0.0
      %1816 = vmatpush1.msra.mxu0 0.0
      %1817 = vmatprep.subr.mxu0 0.0
      %1818 = vmatpush1.msra.mxu0 0.0
      %1819 = vmatprep.subr.mxu0 0.0
      %1820 = vmatpush1.msra.mxu0 0.0
      %1821 = vmatprep.subr.mxu0 0.0
      %1822 = vmatpush1.msra.mxu0 0.0
      %1823 = vmatprep.subr.mxu0 0.0
      %1824 = vmatpush1.msra.mxu0 0.0
      %1825 = vmatprep.subr.mxu0 0.0
      %1826 = vmatpush1.msra.mxu0 0.0
      %1827 = vmatprep.subr.mxu0 0.0
      %1828 = vmatpush1.msra.mxu0 0.0
      %1829 = vmatprep.subr.mxu0 0.0
      %1830 = vmatpush1.msra.mxu0 0.0
      %1831 = vmatprep.subr.mxu0 0.0
      %1832 = vmatpush1.msra.mxu0 0.0
      %1833 = vmatprep.subr.mxu0 0.0
      %1834 = vmatpush1.msra.mxu0 0.0
      %1835 = vmatprep.subr.mxu0 0.0
      %1836 = vmatpush1.msra.mxu0 0.0
      %1837 = vmatprep.subr.mxu0 0.0
      %1838 = vmatpush1.msra.mxu0 %v1813
      %1839 = vmatprep.subr.mxu0 0.0
      %1840 = vmatpush1.msra.mxu0 %v260
      %1841 = vmatprep.subr.mxu0 0.0
      %1842 = vmatpush1.msra.mxu0 %v259
      %1843 = vmatprep.subr.mxu0 0.0
      %1844 = vmatpush1.msra.mxu0 %v258
      %1845 = vmatprep.subr.mxu0 0.0
      %1846 = vmatpush1.msra.mxu0 %v257
      %1847 = vmatprep.subr.mxu0 0.0
      %1848 = vmatpush2.msra.mxu0 0.0
      %1849 = vmatprep.subr.mxu0 0.0
      %1850 = vmatpush2.msra.mxu0 0.0
      %1851 = vmatprep.subr.mxu0 0.0
      %1852 = vmatpush2.msra.mxu0 0.0
      %1853 = vmatprep.subr.mxu0 0.0
      %1854 = vmatpush2.msra.mxu0 0.0
      %1855 = vmatprep.subr.mxu0 0.0
      %1856 = vmatpush2.msra.mxu0 0.0
      %1857 = vmatprep.subr.mxu0 0.0
      %1858 = vmatpush2.msra.mxu0 0.0
      %1859 = vmatprep.subr.mxu0 0.0
      %1860 = vmatpush2.msra.mxu0 0.0
      %1861 = vmatprep.subr.mxu0 0.0
      %1862 = vmatpush2.msra.mxu0 0.0
      %1863 = vmatprep.subr.mxu0 0.0
      %1864 = vmatpush2.msra.mxu0 0.0
      %1865 = vmatprep.subr.mxu0 0.0
      %1866 = vmatpush2.msra.mxu0 0.0
      %1867 = vmatprep.subr.mxu0 0.0
      %1868 = vmatpush2.msra.mxu0 0.0
      %1869 = vmatprep.subr.mxu0 0.0
      %1870 = vmatpush2.msra.mxu0 0.0
      %1871 = vmatprep.subr.mxu0 0.0
      %1872 = vmatpush2.msra.mxu0 0.0
      %1873 = vmatprep.subr.mxu0 0.0
      %1874 = vmatpush2.msra.mxu0 0.0
      %1875 = vmatprep.subr.mxu0 0.0
      %1876 = vmatpush2.msra.mxu0 0.0
      %1877 = vmatprep.subr.mxu0 0.0
      %1878 = vmatpush2.msra.mxu0 0.0
      %1879 = vmatprep.mubr.f32.mxu0 0.0
      %1880 = vmatmul.mubr.f32.gmra.mxu0 %v1716
      %v1881 = vpop.f32.mrf.mxu0
      %v1882 = vadd.f32 %v1712, %v1881
      %v1883 = vpop.f32.mrf.mxu0
      %1884 = vmatprep.mubr.f32.mxu0 0.0
      %1885 = vmatmul.mubr.f32.gmra.mxu0 %v1719
      %v1886 = vpop.f32.mrf.mxu0
      %v1887 = vadd.f32 %v1712, %v1886
      %v1888 = vpop.f32.mrf.mxu0
      %1889 = vmatprep.mubr.f32.mxu0 0.0
      %1890 = vmatmul.mubr.f32.gmra.mxu0 %v1722
      %v1891 = vpop.f32.mrf.mxu0
      %v1892 = vadd.f32 %v1712, %v1891
      %v1893 = vpop.f32.mrf.mxu0
      %1894 = vmatprep.mubr.f32.mxu0 0.0
      %1895 = vmatmul.mubr.f32.gmra.mxu0 %v1725
      %v1896 = vpop.f32.mrf.mxu0
      %v1897 = vadd.f32 %v1712, %v1896
      %v1898 = vpop.f32.mrf.mxu0
      %1899 = vmatprep.mubr.f32.mxu0 0.0
      %1900 = vmatmul.mubr.f32.gmra.mxu0 %v1728
      %v1901 = vpop.f32.mrf.mxu0
      %v1902 = vadd.f32 %v1712, %v1901
      %v1903 = vpop.f32.mrf.mxu0
      %1904 = vmatprep.mubr.f32.mxu0 0.0
      %1905 = vmatmul.mubr.f32.gmra.mxu0 %v1731
      %v1906 = vpop.f32.mrf.mxu0
      %v1907 = vadd.f32 %v1712, %v1906
      %v1908 = vpop.f32.mrf.mxu0
      %1909 = vmatprep.mubr.f32.mxu0 0.0
      %1910 = vmatmul.mubr.f32.gmra.mxu0 %v1734
      %v1911 = vpop.f32.mrf.mxu0
      %v1912 = vadd.f32 %v1712, %v1911
      %v1913 = vpop.f32.mrf.mxu0
      %1914 = vmatprep.mubr.f32.mxu0 0.0
      %1915 = vmatmul.mubr.f32.gmra.mxu0 %v1737
      %v1916 = vpop.f32.mrf.mxu0
      %v1917 = vadd.f32 %v1712, %v1916
      %v1918 = vpop.f32.mrf.mxu0
      %1919 = vmatprep.mubr.f32.mxu0 0.0
      %1920 = vmatmul.mubr.f32.gmra.mxu0 %v1740
      %v1921 = vpop.f32.mrf.mxu0
      %v1922 = vadd.f32 %v1712, %v1921
      %v1923 = vpop.f32.mrf.mxu0
      %1924 = vmatprep.mubr.f32.mxu0 0.0
      %1925 = vmatmul.mubr.f32.gmra.mxu0 %v1743
      %v1926 = vpop.f32.mrf.mxu0
      %v1927 = vadd.f32 %v1712, %v1926
      %v1928 = vpop.f32.mrf.mxu0
      %1929 = vmatprep.mubr.f32.mxu0 0.0
      %1930 = vmatmul.mubr.f32.gmra.mxu0 %v1746
      %v1931 = vpop.f32.mrf.mxu0
      %v1932 = vadd.f32 %v1712, %v1931
      %v1933 = vpop.f32.mrf.mxu0
      %1934 = vmatprep.mubr.f32.mxu0 0.0
      %1935 = vmatmul.mubr.f32.gmra.mxu0 %v1749
      %v1936 = vpop.f32.mrf.mxu0
      %v1937 = vadd.f32 %v1712, %v1936
      %v1938 = vpop.f32.mrf.mxu0
      %1939 = vmatprep.mubr.f32.mxu0 0.0
      %1940 = vmatmul.mubr.f32.gmra.mxu0 %v1752
      %v1941 = vpop.f32.mrf.mxu0
      %v1942 = vadd.f32 %v1712, %v1941
      %v1943 = vpop.f32.mrf.mxu0
      %1944 = vmatprep.mubr.f32.mxu0 0.0
      %1945 = vmatmul.mubr.f32.gmra.mxu0 %v1755
      %v1946 = vpop.f32.mrf.mxu0
      %v1947 = vadd.f32 %v1712, %v1946
      %v1948 = vpop.f32.mrf.mxu0
      %1949 = vmatprep.mubr.f32.mxu0 0.0
      %1950 = vmatmul.mubr.f32.gmra.mxu0 %v1758
      %v1951 = vpop.f32.mrf.mxu0
      %v1952 = vadd.f32 %v1712, %v1951
      %v1953 = vpop.f32.mrf.mxu0
      %1954 = vmatprep.mubr.f32.mxu0 0.0
      %1955 = vmatmul.mubr.f32.gmra.mxu0 %v1761
      %v1956 = vpop.f32.mrf.mxu0
      %v1957 = vadd.f32 %v1712, %v1956
      %v1958 = vpop.f32.mrf.mxu0
      %1959 = vmatprep.mubr.f32.mxu0 0.0
      %1960 = vmatmul.mubr.f32.gmra.mxu0 %v1764
      %v1961 = vpop.f32.mrf.mxu0
      %v1962 = vadd.f32 %v1712, %v1961
      %v1963 = vpop.f32.mrf.mxu0
      %1964 = vmatprep.mubr.f32.mxu0 0.0
      %1965 = vmatmul.mubr.f32.gmra.mxu0 %v1767
      %v1966 = vpop.f32.mrf.mxu0
      %v1967 = vadd.f32 %v1712, %v1966
      %v1968 = vpop.f32.mrf.mxu0
      %1969 = vmatprep.mubr.f32.mxu0 0.0
      %1970 = vmatmul.mubr.f32.gmra.mxu0 %v1770
      %v1971 = vpop.f32.mrf.mxu0
      %v1972 = vadd.f32 %v1712, %v1971
      %v1973 = vpop.f32.mrf.mxu0
      %1974 = vmatprep.mubr.f32.mxu0 0.0
      %1975 = vmatmul.mubr.f32.gmra.mxu0 %v1773
      %v1976 = vpop.f32.mrf.mxu0
      %v1977 = vadd.f32 %v1712, %v1976
      %v1978 = vpop.f32.mrf.mxu0
      %1979 = vmatprep.mubr.f32.mxu0 0.0
      %1980 = vmatmul.mubr.f32.gmra.mxu0 %v1776
      %v1981 = vpop.f32.mrf.mxu0
      %v1982 = vadd.f32 %v1712, %v1981
      %v1983 = vpop.f32.mrf.mxu0
      %1984 = vmatprep.mubr.f32.mxu0 0.0
      %1985 = vmatmul.mubr.f32.gmra.mxu0 %v1779
      %v1986 = vpop.f32.mrf.mxu0
      %v1987 = vadd.f32 %v1712, %v1986
      %v1988 = vpop.f32.mrf.mxu0
      %1989 = vmatprep.mubr.f32.mxu0 0.0
      %1990 = vmatmul.mubr.f32.gmra.mxu0 %v1782
      %v1991 = vpop.f32.mrf.mxu0
      %v1992 = vadd.f32 %v1712, %v1991
      %v1993 = vpop.f32.mrf.mxu0
      %1994 = vmatprep.mubr.f32.mxu0 0.0
      %1995 = vmatmul.mubr.f32.gmra.mxu0 %v1785
      %v1996 = vpop.f32.mrf.mxu0
      %v1997 = vadd.f32 %v1712, %v1996
      %v1998 = vpop.f32.mrf.mxu0
      %1999 = vmatprep.mubr.f32.mxu0 0.0
      %2000 = vmatmul.mubr.f32.gmra.mxu0 %v1788
      %v2001 = vpop.f32.mrf.mxu0
      %v2002 = vadd.f32 %v1712, %v2001
      %v2003 = vpop.f32.mrf.mxu0
      %2004 = vmatprep.mubr.f32.mxu0 0.0
      %2005 = vmatmul.mubr.f32.gmra.mxu0 %v1791
      %v2006 = vpop.f32.mrf.mxu0
      %v2007 = vadd.f32 %v1712, %v2006
      %v2008 = vpop.f32.mrf.mxu0
      %2009 = vmatprep.mubr.f32.mxu0 0.0
      %2010 = vmatmul.mubr.f32.gmra.mxu0 %v1794
      %v2011 = vpop.f32.mrf.mxu0
      %v2012 = vadd.f32 %v1712, %v2011
      %v2013 = vpop.f32.mrf.mxu0
      %2014 = vmatprep.mubr.f32.mxu0 0.0
      %2015 = vmatmul.mubr.f32.gmra.mxu0 %v1797
      %v2016 = vpop.f32.mrf.mxu0
      %v2017 = vadd.f32 %v1712, %v2016
      %v2018 = vpop.f32.mrf.mxu0
      %2019 = vmatprep.mubr.f32.mxu0 0.0
      %2020 = vmatmul.mubr.f32.gmra.mxu0 %v1800
      %v2021 = vpop.f32.mrf.mxu0
      %v2022 = vadd.f32 %v1712, %v2021
      %v2023 = vpop.f32.mrf.mxu0
      %2024 = vmatprep.mubr.f32.mxu0 0.0
      %2025 = vmatmul.mubr.f32.gmra.mxu0 %v1803
      %v2026 = vpop.f32.mrf.mxu0
      %v2027 = vadd.f32 %v1712, %v2026
      %v2028 = vpop.f32.mrf.mxu0
      %2029 = vmatprep.mubr.f32.mxu0 0.0
      %2030 = vmatmul.mubr.f32.gmra.mxu0 %v1806
      %v2031 = vpop.f32.mrf.mxu0
      %v2032 = vadd.f32 %v1712, %v2031
      %v2033 = vpop.f32.mrf.mxu0
      %2034 = vmatprep.mubr.f32.mxu0 0.0
      %2035 = vmatmul.mubr.f32.gmra.mxu0 %v1809
      %v2036 = vpop.f32.mrf.mxu0
      %v2037 = vadd.f32 %v1712, %v2036
      %v2038 = vpop.f32.mrf.mxu0
      %2039 = vdwg.mxu0
      %v2040 = vsel %vm270, %v1882, 0.0
      %v2041 = vsel %vm270, %v1887, 0.0
      %v2042 = vadd.f32 %v2040, %v2041
      %v2043 = vsel %vm270, %v1892, 0.0
      %v2044 = vadd.f32 %v2042, %v2043
      %v2045 = vsel %vm270, %v1897, 0.0
      %v2046 = vadd.f32 %v2044, %v2045
      %v2047 = vsel %vm270, %v1902, 0.0
      %v2048 = vadd.f32 %v2046, %v2047
      %v2049 = vsel %vm270, %v1907, 0.0
      %v2050 = vadd.f32 %v2048, %v2049
      %v2051 = vsel %vm270, %v1912, 0.0
      %v2052 = vadd.f32 %v2050, %v2051
      %v2053 = vsel %vm270, %v1917, 0.0
      %v2054 = vadd.f32 %v2052, %v2053
      %v2055 = vsel %vm270, %v1922, 0.0
      %v2056 = vadd.f32 %v2054, %v2055
      %v2057 = vsel %vm270, %v1927, 0.0
      %v2058 = vadd.f32 %v2056, %v2057
      %v2059 = vsel %vm270, %v1932, 0.0
      %v2060 = vadd.f32 %v2058, %v2059
      %v2061 = vsel %vm270, %v1937, 0.0
      %v2062 = vadd.f32 %v2060, %v2061
      %v2063 = vsel %vm270, %v1942, 0.0
      %v2064 = vadd.f32 %v2062, %v2063
      %v2065 = vsel %vm270, %v1947, 0.0
      %v2066 = vadd.f32 %v2064, %v2065
      %v2067 = vsel %vm270, %v1952, 0.0
      %v2068 = vadd.f32 %v2066, %v2067
      %v2069 = vsel %vm270, %v1957, 0.0
      %v2070 = vadd.f32 %v2068, %v2069
      %v2071 = vsel %vm270, %v1962, 0.0
      %v2072 = vadd.f32 %v2070, %v2071
      %v2073 = vsel %vm270, %v1967, 0.0
      %v2074 = vadd.f32 %v2072, %v2073
      %v2075 = vsel %vm270, %v1972, 0.0
      %v2076 = vadd.f32 %v2074, %v2075
      %v2077 = vsel %vm270, %v1977, 0.0
      %v2078 = vadd.f32 %v2076, %v2077
      %v2079 = vsel %vm270, %v1982, 0.0
      %v2080 = vadd.f32 %v2078, %v2079
      %v2081 = vsel %vm270, %v1987, 0.0
      %v2082 = vadd.f32 %v2080, %v2081
      %v2083 = vsel %vm270, %v1992, 0.0
      %v2084 = vadd.f32 %v2082, %v2083
      %v2085 = vsel %vm270, %v1997, 0.0
      %v2086 = vadd.f32 %v2084, %v2085
      %v2087 = vsel %vm270, %v2002, 0.0
      %v2088 = vadd.f32 %v2086, %v2087
      %v2089 = vsel %vm270, %v2007, 0.0
      %v2090 = vadd.f32 %v2088, %v2089
      %v2091 = vsel %vm270, %v2012, 0.0
      %v2092 = vadd.f32 %v2090, %v2091
      %v2093 = vsel %vm270, %v2017, 0.0
      %v2094 = vadd.f32 %v2092, %v2093
      %v2095 = vsel %vm270, %v2022, 0.0
      %v2096 = vadd.f32 %v2094, %v2095
      %v2097 = vsel %vm270, %v2027, 0.0
      %v2098 = vadd.f32 %v2096, %v2097
      %v2099 = vsel %vm270, %v2032, 0.0
      %v2100 = vadd.f32 %v2098, %v2099
      %v2101 = vsel %vm270, %v2037, 0.0
      %v2102 = vadd.f32 %v2100, %v2101
      %v2103 = vrot.slane %v2102, 4
      %v2104 = vadd.f32 %v2102, %v2103
      %v2105 = vrot.slane %v2104, 2
      %v2106 = vadd.f32 %v2104, %v2105
      %v2107 = vrot.slane %v2106, 1
      %v2108 = vadd.f32 %v2106, %v2107
      %v2109 = vrcp.pop 256.0
      %v2110 = vmul.f32 %v2108, %v2109
      %v2111 = vmul.f32 %v1882, %v1882
      %v2112 = vmul.f32 %v1887, %v1887
      %v2113 = vmul.f32 %v1892, %v1892
      %v2114 = vmul.f32 %v1897, %v1897
      %v2115 = vmul.f32 %v1902, %v1902
      %v2116 = vmul.f32 %v1907, %v1907
      %v2117 = vmul.f32 %v1912, %v1912
      %v2118 = vmul.f32 %v1917, %v1917
      %v2119 = vmul.f32 %v1922, %v1922
      %v2120 = vmul.f32 %v1927, %v1927
      %v2121 = vmul.f32 %v1932, %v1932
      %v2122 = vmul.f32 %v1937, %v1937
      %v2123 = vmul.f32 %v1942, %v1942
      %v2124 = vmul.f32 %v1947, %v1947
      %v2125 = vmul.f32 %v1952, %v1952
      %v2126 = vmul.f32 %v1957, %v1957
      %v2127 = vmul.f32 %v1962, %v1962
      %v2128 = vmul.f32 %v1967, %v1967
      %v2129 = vmul.f32 %v1972, %v1972
      %v2130 = vmul.f32 %v1977, %v1977
      %v2131 = vmul.f32 %v1982, %v1982
      %v2132 = vmul.f32 %v1987, %v1987
      %v2133 = vmul.f32 %v1992, %v1992
      %v2134 = vmul.f32 %v1997, %v1997
      %v2135 = vmul.f32 %v2002, %v2002
      %v2136 = vmul.f32 %v2007, %v2007
      %v2137 = vmul.f32 %v2012, %v2012
      %v2138 = vmul.f32 %v2017, %v2017
      %v2139 = vmul.f32 %v2022, %v2022
      %v2140 = vmul.f32 %v2027, %v2027
      %v2141 = vmul.f32 %v2032, %v2032
      %v2142 = vmul.f32 %v2037, %v2037
      %v2143 = vsel %vm270, %v2111, 0.0
      %v2144 = vsel %vm270, %v2112, 0.0
      %v2145 = vadd.f32 %v2143, %v2144
      %v2146 = vsel %vm270, %v2113, 0.0
      %v2147 = vadd.f32 %v2145, %v2146
      %v2148 = vsel %vm270, %v2114, 0.0
      %v2149 = vadd.f32 %v2147, %v2148
      %v2150 = vsel %vm270, %v2115, 0.0
      %v2151 = vadd.f32 %v2149, %v2150
      %v2152 = vsel %vm270, %v2116, 0.0
      %v2153 = vadd.f32 %v2151, %v2152
      %v2154 = vsel %vm270, %v2117, 0.0
      %v2155 = vadd.f32 %v2153, %v2154
      %v2156 = vsel %vm270, %v2118, 0.0
      %v2157 = vadd.f32 %v2155, %v2156
      %v2158 = vsel %vm270, %v2119, 0.0
      %v2159 = vadd.f32 %v2157, %v2158
      %v2160 = vsel %vm270, %v2120, 0.0
      %v2161 = vadd.f32 %v2159, %v2160
      %v2162 = vsel %vm270, %v2121, 0.0
      %v2163 = vadd.f32 %v2161, %v2162
      %v2164 = vsel %vm270, %v2122, 0.0
      %v2165 = vadd.f32 %v2163, %v2164
      %v2166 = vsel %vm270, %v2123, 0.0
      %v2167 = vadd.f32 %v2165, %v2166
      %v2168 = vsel %vm270, %v2124, 0.0
      %v2169 = vadd.f32 %v2167, %v2168
      %v2170 = vsel %vm270, %v2125, 0.0
      %v2171 = vadd.f32 %v2169, %v2170
      %v2172 = vsel %vm270, %v2126, 0.0
      %v2173 = vadd.f32 %v2171, %v2172
      %v2174 = vsel %vm270, %v2127, 0.0
      %v2175 = vadd.f32 %v2173, %v2174
      %v2176 = vsel %vm270, %v2128, 0.0
      %v2177 = vadd.f32 %v2175, %v2176
      %v2178 = vsel %vm270, %v2129, 0.0
      %v2179 = vadd.f32 %v2177, %v2178
      %v2180 = vsel %vm270, %v2130, 0.0
      %v2181 = vadd.f32 %v2179, %v2180
      %v2182 = vsel %vm270, %v2131, 0.0
      %v2183 = vadd.f32 %v2181, %v2182
      %v2184 = vsel %vm270, %v2132, 0.0
      %v2185 = vadd.f32 %v2183, %v2184
      %v2186 = vsel %vm270, %v2133, 0.0
      %v2187 = vadd.f32 %v2185, %v2186
      %v2188 = vsel %vm270, %v2134, 0.0
      %v2189 = vadd.f32 %v2187, %v2188
      %v2190 = vsel %vm270, %v2135, 0.0
      %v2191 = vadd.f32 %v2189, %v2190
      %v2192 = vsel %vm270, %v2136, 0.0
      %v2193 = vadd.f32 %v2191, %v2192
      %v2194 = vsel %vm270, %v2137, 0.0
      %v2195 = vadd.f32 %v2193, %v2194
      %v2196 = vsel %vm270, %v2138, 0.0
      %v2197 = vadd.f32 %v2195, %v2196
      %v2198 = vsel %vm270, %v2139, 0.0
      %v2199 = vadd.f32 %v2197, %v2198
      %v2200 = vsel %vm270, %v2140, 0.0
      %v2201 = vadd.f32 %v2199, %v2200
      %v2202 = vsel %vm270, %v2141, 0.0
      %v2203 = vadd.f32 %v2201, %v2202
      %v2204 = vsel %vm270, %v2142, 0.0
      %v2205 = vadd.f32 %v2203, %v2204
      %v2206 = vrot.slane %v2205, 4
      %v2207 = vadd.f32 %v2205, %v2206
      %v2208 = vrot.slane %v2207, 2
      %v2209 = vadd.f32 %v2207, %v2208
      %v2210 = vrot.slane %v2209, 1
      %v2211 = vadd.f32 %v2209, %v2210
      %v2212 = vmul.f32 %v2211, %v2109
      %v2213 = vmul.f32 %v2110, %v2110
      %v2214 = vsub.f32 %v2212, %v2213
      %v2215 = vsub.f32 %v1882, %v2110
      %v2216 = vsub.f32 %v1887, %v2110
      %v2217 = vsub.f32 %v1892, %v2110
      %v2218 = vsub.f32 %v1897, %v2110
      %v2219 = vsub.f32 %v1902, %v2110
      %v2220 = vsub.f32 %v1907, %v2110
      %v2221 = vsub.f32 %v1912, %v2110
      %v2222 = vsub.f32 %v1917, %v2110
      %v2223 = vsub.f32 %v1922, %v2110
      %v2224 = vsub.f32 %v1927, %v2110
      %v2225 = vsub.f32 %v1932, %v2110
      %v2226 = vsub.f32 %v1937, %v2110
      %v2227 = vsub.f32 %v1942, %v2110
      %v2228 = vsub.f32 %v1947, %v2110
      %v2229 = vsub.f32 %v1952, %v2110
      %v2230 = vsub.f32 %v1957, %v2110
      %v2231 = vsub.f32 %v1962, %v2110
      %v2232 = vsub.f32 %v1967, %v2110
      %v2233 = vsub.f32 %v1972, %v2110
      %v2234 = vsub.f32 %v1977, %v2110
      %v2235 = vsub.f32 %v1982, %v2110
      %v2236 = vsub.f32 %v1987, %v2110
      %v2237 = vsub.f32 %v1992, %v2110
      %v2238 = vsub.f32 %v1997, %v2110
      %v2239 = vsub.f32 %v2002, %v2110
      %v2240 = vsub.f32 %v2007, %v2110
      %v2241 = vsub.f32 %v2012, %v2110
      %v2242 = vsub.f32 %v2017, %v2110
      %v2243 = vsub.f32 %v2022, %v2110
      %v2244 = vsub.f32 %v2027, %v2110
      %v2245 = vsub.f32 %v2032, %v2110
      %v2246 = vsub.f32 %v2037, %v2110
      %v2247 = vadd.f32 %v2214, 1e-05
      %v2248 = vrsqrt.pop %v2247
      %v2249 = vmul.f32 %v2215, %v2248
      %v2250 = vmul.f32 %v2216, %v2248
      %v2251 = vmul.f32 %v2217, %v2248
      %v2252 = vmul.f32 %v2218, %v2248
      %v2253 = vmul.f32 %v2219, %v2248
      %v2254 = vmul.f32 %v2220, %v2248
      %v2255 = vmul.f32 %v2221, %v2248
      %v2256 = vmul.f32 %v2222, %v2248
      %v2257 = vmul.f32 %v2223, %v2248
      %v2258 = vmul.f32 %v2224, %v2248
      %v2259 = vmul.f32 %v2225, %v2248
      %v2260 = vmul.f32 %v2226, %v2248
      %v2261 = vmul.f32 %v2227, %v2248
      %v2262 = vmul.f32 %v2228, %v2248
      %v2263 = vmul.f32 %v2229, %v2248
      %v2264 = vmul.f32 %v2230, %v2248
      %v2265 = vmul.f32 %v2231, %v2248
      %v2266 = vmul.f32 %v2232, %v2248
      %v2267 = vmul.f32 %v2233, %v2248
      %v2268 = vmul.f32 %v2234, %v2248
      %v2269 = vmul.f32 %v2235, %v2248
      %v2270 = vmul.f32 %v2236, %v2248
      %v2271 = vmul.f32 %v2237, %v2248
      %v2272 = vmul.f32 %v2238, %v2248
      %v2273 = vmul.f32 %v2239, %v2248
      %v2274 = vmul.f32 %v2240, %v2248
      %v2275 = vmul.f32 %v2241, %v2248
      %v2276 = vmul.f32 %v2242, %v2248
      %v2277 = vmul.f32 %v2243, %v2248
      %v2278 = vmul.f32 %v2244, %v2248
      %v2279 = vmul.f32 %v2245, %v2248
      %v2280 = vmul.f32 %v2246, %v2248
      %v2281 = vmax.f32 %v2249, 0.0
      %v2282 = vmax.f32 %v2250, 0.0
      %v2283 = vmax.f32 %v2251, 0.0
      %v2284 = vmax.f32 %v2252, 0.0
      %v2285 = vmax.f32 %v2253, 0.0
      %v2286 = vmax.f32 %v2254, 0.0
      %v2287 = vmax.f32 %v2255, 0.0
      %v2288 = vmax.f32 %v2256, 0.0
      %v2289 = vmax.f32 %v2257, 0.0
      %v2290 = vmax.f32 %v2258, 0.0
      %v2291 = vmax.f32 %v2259, 0.0
      %v2292 = vmax.f32 %v2260, 0.0
      %v2293 = vmax.f32 %v2261, 0.0
      %v2294 = vmax.f32 %v2262, 0.0
      %v2295 = vmax.f32 %v2263, 0.0
      %v2296 = vmax.f32 %v2264, 0.0
      %v2297 = vmax.f32 %v2265, 0.0
      %v2298 = vmax.f32 %v2266, 0.0
      %v2299 = vmax.f32 %v2267, 0.0
      %v2300 = vmax.f32 %v2268, 0.0
      %v2301 = vmax.f32 %v2269, 0.0
      %v2302 = vmax.f32 %v2270, 0.0
      %v2303 = vmax.f32 %v2271, 0.0
      %v2304 = vmax.f32 %v2272, 0.0
      %v2305 = vmax.f32 %v2273, 0.0
      %v2306 = vmax.f32 %v2274, 0.0
      %v2307 = vmax.f32 %v2275, 0.0
      %v2308 = vmax.f32 %v2276, 0.0
      %v2309 = vmax.f32 %v2277, 0.0
      %v2310 = vmax.f32 %v2278, 0.0
      %v2311 = vmax.f32 %v2279, 0.0
      %v2312 = vmax.f32 %v2280, 0.0
      %2313 = vst.msk [vmem:[%s269 + $0x1] sm:$0xff] %vm270, %v2281
      %2314 = vst.msk [vmem:[%s269 + $0x9] sm:$0xff] %vm270, %v2282
      %2315 = vst.msk [vmem:[%s269 + $0x19] sm:$0xff] %vm270, %v2283
      %2316 = vst.msk [vmem:[%s269 + $0x21] sm:$0xff] %vm270, %v2284
      %2317 = vst.msk [vmem:[%s269 + $0x31] sm:$0xff] %vm270, %v2285
      %2318 = vst.msk [vmem:[%s269 + $0x39] sm:$0xff] %vm270, %v2286
      %2319 = vst.msk [vmem:[%s269 + $0x49] sm:$0xff] %vm270, %v2287
      %2320 = vst.msk [vmem:[%s269 + $0x51] sm:$0xff] %vm270, %v2288
      %2321 = vst.msk [vmem:[%s269 + $0x61] sm:$0xff] %vm270, %v2289
      %2322 = vst.msk [vmem:[%s269 + $0x69] sm:$0xff] %vm270, %v2290
      %2323 = vst.msk [vmem:[%s269 + $0x79] sm:$0xff] %vm270, %v2291
      %2324 = vst.msk [vmem:[%s269 + $0x81] sm:$0xff] %vm270, %v2292
      %2325 = vst.msk [vmem:[%s269 + $0x91] sm:$0xff] %vm270, %v2293
      %2326 = vst.msk [vmem:[%s269 + $0x99] sm:$0xff] %vm270, %v2294
      %2327 = vst.msk [vmem:[%s269 + $0xa9] sm:$0xff] %vm270, %v2295
      %2328 = vst.msk [vmem:[%s269 + $0xb1] sm:$0xff] %vm270, %v2296
      %2329 = vst.msk [vmem:[%s269 + $0xc1] sm:$0xff] %vm270, %v2297
      %2330 = vst.msk [vmem:[%s269 + $0xc9] sm:$0xff] %vm270, %v2298
      %2331 = vst.msk [vmem:[%s269 + $0xd9] sm:$0xff] %vm270, %v2299
      %2332 = vst.msk [vmem:[%s269 + $0xe1] sm:$0xff] %vm270, %v2300
      %2333 = vst.msk [vmem:[%s269 + $0xf1] sm:$0xff] %vm270, %v2301
      %2334 = vst.msk [vmem:[%s269 + $0xf9] sm:$0xff] %vm270, %v2302
      %2335 = vst.msk [vmem:[%s269 + $0x109] sm:$0xff] %vm270, %v2303
      %2336 = vst.msk [vmem:[%s269 + $0x111] sm:$0xff] %vm270, %v2304
      %2337 = vst.msk [vmem:[%s269 + $0x121] sm:$0xff] %vm270, %v2305
      %2338 = vst.msk [vmem:[%s269 + $0x129] sm:$0xff] %vm270, %v2306
      %2339 = vst.msk [vmem:[%s269 + $0x139] sm:$0xff] %vm270, %v2307
      %2340 = vst.msk [vmem:[%s269 + $0x141] sm:$0xff] %vm270, %v2308
      %2341 = vst.msk [vmem:[%s269 + $0x151] sm:$0xff] %vm270, %v2309
      %2342 = vst.msk [vmem:[%s269 + $0x159] sm:$0xff] %vm270, %v2310
      %2343 = vst.msk [vmem:[%s269 + $0x169] sm:$0xff] %vm270, %v2311
      %2344 = vst.msk [vmem:[%s269 + $0x171] sm:$0xff] %vm270, %v2312
      %v2345 = vld [vmem:[%s303 + $0x1] sm:$0xff]
      %v2346 = vld [vmem:[%s303 + $0x9] sm:$0xff]
      %2347 = vst.msk [vmem:[#allocation2 + $0x1] sm:$0xff] %vm270, %v2345
      %2348 = vst.msk [vmem:[#allocation2 + $0x9] sm:$0xff] %vm270, %v2346
      %v2349 = vld [vmem:[%s308 + $0x1] sm:$0xff]
      %v2350 = vld [vmem:[%s308 + $0x9] sm:$0xff]
      %2351 = vst.msk [vmem:[%s311 + $0x1] sm:$0xff] %vm270, %v2349
      %2352 = vst.msk [vmem:[%s311 + $0x9] sm:$0xff] %vm270, %v2350
      %v2353 = vld [vmem:[#allocation2 + $0x2] sm:$0x1]
      %v2354 = vld [vmem:[#allocation2 + $0x1a] sm:$0x1]
      %v2355 = vld [vmem:[#allocation2 + $0x32] sm:$0x1]
      %v2356 = vld [vmem:[#allocation2 + $0x4a] sm:$0x1]
      %v2357 = vld [vmem:[#allocation2 + $0x62] sm:$0x1]
      %v2358 = vld [vmem:[#allocation2 + $0x7a] sm:$0x1]
      %v2359 = vld [vmem:[#allocation2 + $0x92] sm:$0x1]
      %v2360 = vld [vmem:[#allocation2 + $0xaa] sm:$0x1]
      %v2361 = vld [vmem:[#allocation2 + $0xc2] sm:$0x1]
      %v2362 = vld [vmem:[#allocation2 + $0xda] sm:$0x1]
      %v2363 = vld [vmem:[#allocation2 + $0xf2] sm:$0x1]
      %v2364 = vld [vmem:[#allocation2 + $0x10a] sm:$0x1]
      %v2365 = vld [vmem:[#allocation2 + $0x122] sm:$0x1]
      %v2366 = vld [vmem:[#allocation2 + $0x13a] sm:$0x1]
      %v2367 = vld [vmem:[#allocation2 + $0x152] sm:$0x1]
      %v2368 = vld [vmem:[#allocation2 + $0x16a] sm:$0x1]
      %v2369 = vld [vmem:[#allocation2 + $0x182] sm:$0x1]
      %v2370 = vld [vmem:[#allocation2 + $0x19a] sm:$0x1]
      %2371 = vst.msk [vmem:[#allocation2] sm:$0x1] %vm332, %v2353
      %2372 = vst.msk [vmem:[#allocation2 + $0x18] sm:$0x1] %vm332, %v2354
      %2373 = vst.msk [vmem:[#allocation2 + $0x30] sm:$0x1] %vm332, %v2355
      %2374 = vst.msk [vmem:[#allocation2 + $0x48] sm:$0x1] %vm332, %v2356
      %2375 = vst.msk [vmem:[#allocation2 + $0x60] sm:$0x1] %vm332, %v2357
      %2376 = vst.msk [vmem:[#allocation2 + $0x78] sm:$0x1] %vm332, %v2358
      %2377 = vst.msk [vmem:[#allocation2 + $0x90] sm:$0x1] %vm332, %v2359
      %2378 = vst.msk [vmem:[#allocation2 + $0xa8] sm:$0x1] %vm332, %v2360
      %2379 = vst.msk [vmem:[#allocation2 + $0xc0] sm:$0x1] %vm332, %v2361
      %2380 = vst.msk [vmem:[#allocation2 + $0xd8] sm:$0x1] %vm332, %v2362
      %2381 = vst.msk [vmem:[#allocation2 + $0xf0] sm:$0x1] %vm332, %v2363
      %2382 = vst.msk [vmem:[#allocation2 + $0x108] sm:$0x1] %vm332, %v2364
      %2383 = vst.msk [vmem:[#allocation2 + $0x120] sm:$0x1] %vm332, %v2365
      %2384 = vst.msk [vmem:[#allocation2 + $0x138] sm:$0x1] %vm332, %v2366
      %2385 = vst.msk [vmem:[#allocation2 + $0x150] sm:$0x1] %vm332, %v2367
      %2386 = vst.msk [vmem:[#allocation2 + $0x168] sm:$0x1] %vm332, %v2368
      %2387 = vst.msk [vmem:[#allocation2 + $0x180] sm:$0x1] %vm332, %v2369
      %2388 = vst.msk [vmem:[#allocation2 + $0x198] sm:$0x1] %vm332, %v2370
      %v2389 = vld [vmem:[#allocation2 + $0xf] sm:$0x1]
      %v2390 = vld [vmem:[#allocation2 + $0x27] sm:$0x1]
      %v2391 = vld [vmem:[#allocation2 + $0x3f] sm:$0x1]
      %v2392 = vld [vmem:[#allocation2 + $0x57] sm:$0x1]
      %v2393 = vld [vmem:[#allocation2 + $0x6f] sm:$0x1]
      %v2394 = vld [vmem:[#allocation2 + $0x87] sm:$0x1]
      %v2395 = vld [vmem:[#allocation2 + $0x9f] sm:$0x1]
      %v2396 = vld [vmem:[#allocation2 + $0xb7] sm:$0x1]
      %v2397 = vld [vmem:[#allocation2 + $0xcf] sm:$0x1]
      %v2398 = vld [vmem:[#allocation2 + $0xe7] sm:$0x1]
      %v2399 = vld [vmem:[#allocation2 + $0xff] sm:$0x1]
      %v2400 = vld [vmem:[#allocation2 + $0x117] sm:$0x1]
      %v2401 = vld [vmem:[#allocation2 + $0x12f] sm:$0x1]
      %v2402 = vld [vmem:[#allocation2 + $0x147] sm:$0x1]
      %v2403 = vld [vmem:[#allocation2 + $0x15f] sm:$0x1]
      %v2404 = vld [vmem:[#allocation2 + $0x177] sm:$0x1]
      %v2405 = vld [vmem:[#allocation2 + $0x18f] sm:$0x1]
      %v2406 = vld [vmem:[#allocation2 + $0x1a7] sm:$0x1]
      %2407 = vst.msk [vmem:[#allocation2 + $0x11] sm:$0x1] %vm332, %v2389
      %2408 = vst.msk [vmem:[#allocation2 + $0x29] sm:$0x1] %vm332, %v2390
      %2409 = vst.msk [vmem:[#allocation2 + $0x41] sm:$0x1] %vm332, %v2391
      %2410 = vst.msk [vmem:[#allocation2 + $0x59] sm:$0x1] %vm332, %v2392
      %2411 = vst.msk [vmem:[#allocation2 + $0x71] sm:$0x1] %vm332, %v2393
      %2412 = vst.msk [vmem:[#allocation2 + $0x89] sm:$0x1] %vm332, %v2394
      %2413 = vst.msk [vmem:[#allocation2 + $0xa1] sm:$0x1] %vm332, %v2395
      %2414 = vst.msk [vmem:[#allocation2 + $0xb9] sm:$0x1] %vm332, %v2396
      %2415 = vst.msk [vmem:[#allocation2 + $0xd1] sm:$0x1] %vm332, %v2397
      %2416 = vst.msk [vmem:[#allocation2 + $0xe9] sm:$0x1] %vm332, %v2398
      %2417 = vst.msk [vmem:[#allocation2 + $0x101] sm:$0x1] %vm332, %v2399
      %2418 = vst.msk [vmem:[#allocation2 + $0x119] sm:$0x1] %vm332, %v2400
      %2419 = vst.msk [vmem:[#allocation2 + $0x131] sm:$0x1] %vm332, %v2401
      %2420 = vst.msk [vmem:[#allocation2 + $0x149] sm:$0x1] %vm332, %v2402
      %2421 = vst.msk [vmem:[#allocation2 + $0x161] sm:$0x1] %vm332, %v2403
      %2422 = vst.msk [vmem:[#allocation2 + $0x179] sm:$0x1] %vm332, %v2404
      %2423 = vst.msk [vmem:[#allocation2 + $0x191] sm:$0x1] %vm332, %v2405
      %2424 = vst.msk [vmem:[#allocation2 + $0x1a9] sm:$0x1] %vm332, %v2406
      %v2425 = vld [vmem:[#allocation2] sm:$0xff]
      %v2426 = vld [vmem:[#allocation2 + $0x8] sm:$0xff]
      %v2427 = vld [vmem:[#allocation2 + $0x10] sm:$0x3]
      %v2428 = vld [vmem:[#allocation2 + $0x18] sm:$0xff]
      %v2429 = vld [vmem:[#allocation2 + $0x20] sm:$0xff]
      %v2430 = vld [vmem:[#allocation2 + $0x28] sm:$0x3]
      %v2431 = vld [vmem:[#allocation2 + $0x30] sm:$0xff]
      %v2432 = vld [vmem:[#allocation2 + $0x38] sm:$0xff]
      %v2433 = vld [vmem:[#allocation2 + $0x40] sm:$0x3]
      %v2434 = vld [vmem:[#allocation2 + $0x48] sm:$0xff]
      %v2435 = vld [vmem:[#allocation2 + $0x50] sm:$0xff]
      %v2436 = vld [vmem:[#allocation2 + $0x58] sm:$0x3]
      %v2437 = vld [vmem:[#allocation2 + $0x60] sm:$0xff]
      %v2438 = vld [vmem:[#allocation2 + $0x68] sm:$0xff]
      %v2439 = vld [vmem:[#allocation2 + $0x70] sm:$0x3]
      %v2440 = vld [vmem:[#allocation2 + $0x78] sm:$0xff]
      %v2441 = vld [vmem:[#allocation2 + $0x80] sm:$0xff]
      %v2442 = vld [vmem:[#allocation2 + $0x88] sm:$0x3]
      %v2443 = vld [vmem:[#allocation2 + $0x90] sm:$0xff]
      %v2444 = vld [vmem:[#allocation2 + $0x98] sm:$0xff]
      %v2445 = vld [vmem:[#allocation2 + $0xa0] sm:$0x3]
      %v2446 = vld [vmem:[#allocation2 + $0xa8] sm:$0xff]
      %v2447 = vld [vmem:[#allocation2 + $0xb0] sm:$0xff]
      %v2448 = vld [vmem:[#allocation2 + $0xb8] sm:$0x3]
      %v2449 = vld [vmem:[#allocation2 + $0xc0] sm:$0xff]
      %v2450 = vld [vmem:[#allocation2 + $0xc8] sm:$0xff]
      %v2451 = vld [vmem:[#allocation2 + $0xd0] sm:$0x3]
      %v2452 = vld [vmem:[#allocation2 + $0xd8] sm:$0xff]
      %v2453 = vld [vmem:[#allocation2 + $0xe0] sm:$0xff]
      %v2454 = vld [vmem:[#allocation2 + $0xe8] sm:$0x3]
      %v2455 = vld [vmem:[#allocation2 + $0xf0] sm:$0xff]
      %v2456 = vld [vmem:[#allocation2 + $0xf8] sm:$0xff]
      %v2457 = vld [vmem:[#allocation2 + $0x100] sm:$0x3]
      %v2458 = vld [vmem:[#allocation2 + $0x108] sm:$0xff]
      %v2459 = vld [vmem:[#allocation2 + $0x110] sm:$0xff]
      %v2460 = vld [vmem:[#allocation2 + $0x118] sm:$0x3]
      %v2461 = vld [vmem:[#allocation2 + $0x120] sm:$0xff]
      %v2462 = vld [vmem:[#allocation2 + $0x128] sm:$0xff]
      %v2463 = vld [vmem:[#allocation2 + $0x130] sm:$0x3]
      %v2464 = vld [vmem:[#allocation2 + $0x138] sm:$0xff]
      %v2465 = vld [vmem:[#allocation2 + $0x140] sm:$0xff]
      %v2466 = vld [vmem:[#allocation2 + $0x148] sm:$0x3]
      %v2467 = vld [vmem:[#allocation2 + $0x150] sm:$0xff]
      %v2468 = vld [vmem:[#allocation2 + $0x158] sm:$0xff]
      %v2469 = vld [vmem:[#allocation2 + $0x160] sm:$0x3]
      %v2470 = vld [vmem:[#allocation2 + $0x168] sm:$0xff]
      %v2471 = vld [vmem:[#allocation2 + $0x170] sm:$0xff]
      %v2472 = vld [vmem:[#allocation2 + $0x178] sm:$0x3]
      %v2473 = vld [vmem:[#allocation2 + $0x180] sm:$0xff]
      %v2474 = vld [vmem:[#allocation2 + $0x188] sm:$0xff]
      %v2475 = vld [vmem:[#allocation2 + $0x190] sm:$0x3]
      %v2476 = vld [vmem:[#allocation2 + $0x198] sm:$0xff]
      %v2477 = vld [vmem:[#allocation2 + $0x1a0] sm:$0xff]
      %v2478 = vld [vmem:[#allocation2 + $0x1a8] sm:$0x3]
      %v2527 = vrot.slane %v2425, 1
      %v2528 = vrot.slane %v2426, 1
      %v2529 = vsel %vm489, %v2527, %v2528
      %v2530 = vrot.slane %v2427, 1
      %v2531 = vsel %vm489, %v2528, %v2530
      %v2532 = vrot.slane %v2428, 1
      %v2533 = vrot.slane %v2429, 1
      %v2534 = vsel %vm489, %v2532, %v2533
      %v2535 = vrot.slane %v2430, 1
      %v2536 = vsel %vm489, %v2533, %v2535
      %v2537 = vrot.slane %v2431, 1
      %v2538 = vrot.slane %v2432, 1
      %v2539 = vsel %vm489, %v2537, %v2538
      %v2540 = vrot.slane %v2433, 1
      %v2541 = vsel %vm489, %v2538, %v2540
      %v2542 = vrot.slane %v2434, 1
      %v2543 = vrot.slane %v2435, 1
      %v2544 = vsel %vm489, %v2542, %v2543
      %v2545 = vrot.slane %v2436, 1
      %v2546 = vsel %vm489, %v2543, %v2545
      %v2547 = vrot.slane %v2437, 1
      %v2548 = vrot.slane %v2438, 1
      %v2549 = vsel %vm489, %v2547, %v2548
      %v2550 = vrot.slane %v2439, 1
      %v2551 = vsel %vm489, %v2548, %v2550
      %v2552 = vrot.slane %v2440, 1
      %v2553 = vrot.slane %v2441, 1
      %v2554 = vsel %vm489, %v2552, %v2553
      %v2555 = vrot.slane %v2442, 1
      %v2556 = vsel %vm489, %v2553, %v2555
      %v2557 = vrot.slane %v2443, 1
      %v2558 = vrot.slane %v2444, 1
      %v2559 = vsel %vm489, %v2557, %v2558
      %v2560 = vrot.slane %v2445, 1
      %v2561 = vsel %vm489, %v2558, %v2560
      %v2562 = vrot.slane %v2446, 1
      %v2563 = vrot.slane %v2447, 1
      %v2564 = vsel %vm489, %v2562, %v2563
      %v2565 = vrot.slane %v2448, 1
      %v2566 = vsel %vm489, %v2563, %v2565
      %v2567 = vrot.slane %v2449, 1
      %v2568 = vrot.slane %v2450, 1
      %v2569 = vsel %vm489, %v2567, %v2568
      %v2570 = vrot.slane %v2451, 1
      %v2571 = vsel %vm489, %v2568, %v2570
      %v2572 = vrot.slane %v2452, 1
      %v2573 = vrot.slane %v2453, 1
      %v2574 = vsel %vm489, %v2572, %v2573
      %v2575 = vrot.slane %v2454, 1
      %v2576 = vsel %vm489, %v2573, %v2575
      %v2577 = vrot.slane %v2455, 1
      %v2578 = vrot.slane %v2456, 1
      %v2579 = vsel %vm489, %v2577, %v2578
      %v2580 = vrot.slane %v2457, 1
      %v2581 = vsel %vm489, %v2578, %v2580
      %v2582 = vrot.slane %v2458, 1
      %v2583 = vrot.slane %v2459, 1
      %v2584 = vsel %vm489, %v2582, %v2583
      %v2585 = vrot.slane %v2460, 1
      %v2586 = vsel %vm489, %v2583, %v2585
      %v2587 = vrot.slane %v2461, 1
      %v2588 = vrot.slane %v2462, 1
      %v2589 = vsel %vm489, %v2587, %v2588
      %v2590 = vrot.slane %v2463, 1
      %v2591 = vsel %vm489, %v2588, %v2590
      %v2592 = vrot.slane %v2464, 1
      %v2593 = vrot.slane %v2465, 1
      %v2594 = vsel %vm489, %v2592, %v2593
      %v2595 = vrot.slane %v2466, 1
      %v2596 = vsel %vm489, %v2593, %v2595
      %v2597 = vrot.slane %v2467, 1
      %v2598 = vrot.slane %v2468, 1
      %v2599 = vsel %vm489, %v2597, %v2598
      %v2600 = vrot.slane %v2469, 1
      %v2601 = vsel %vm489, %v2598, %v2600
      %v2602 = vrot.slane %v2470, 1
      %v2603 = vrot.slane %v2471, 1
      %v2604 = vsel %vm489, %v2602, %v2603
      %v2605 = vrot.slane %v2472, 1
      %v2606 = vsel %vm489, %v2603, %v2605
      %v2607 = vrot.slane %v2425, 2
      %v2608 = vrot.slane %v2426, 2
      %v2609 = vsel %vm570, %v2607, %v2608
      %v2610 = vrot.slane %v2427, 2
      %v2611 = vsel %vm570, %v2608, %v2610
      %v2612 = vrot.slane %v2428, 2
      %v2613 = vrot.slane %v2429, 2
      %v2614 = vsel %vm570, %v2612, %v2613
      %v2615 = vrot.slane %v2430, 2
      %v2616 = vsel %vm570, %v2613, %v2615
      %v2617 = vrot.slane %v2431, 2
      %v2618 = vrot.slane %v2432, 2
      %v2619 = vsel %vm570, %v2617, %v2618
      %v2620 = vrot.slane %v2433, 2
      %v2621 = vsel %vm570, %v2618, %v2620
      %v2622 = vrot.slane %v2434, 2
      %v2623 = vrot.slane %v2435, 2
      %v2624 = vsel %vm570, %v2622, %v2623
      %v2625 = vrot.slane %v2436, 2
      %v2626 = vsel %vm570, %v2623, %v2625
      %v2627 = vrot.slane %v2437, 2
      %v2628 = vrot.slane %v2438, 2
      %v2629 = vsel %vm570, %v2627, %v2628
      %v2630 = vrot.slane %v2439, 2
      %v2631 = vsel %vm570, %v2628, %v2630
      %v2632 = vrot.slane %v2440, 2
      %v2633 = vrot.slane %v2441, 2
      %v2634 = vsel %vm570, %v2632, %v2633
      %v2635 = vrot.slane %v2442, 2
      %v2636 = vsel %vm570, %v2633, %v2635
      %v2637 = vrot.slane %v2443, 2
      %v2638 = vrot.slane %v2444, 2
      %v2639 = vsel %vm570, %v2637, %v2638
      %v2640 = vrot.slane %v2445, 2
      %v2641 = vsel %vm570, %v2638, %v2640
      %v2642 = vrot.slane %v2446, 2
      %v2643 = vrot.slane %v2447, 2
      %v2644 = vsel %vm570, %v2642, %v2643
      %v2645 = vrot.slane %v2448, 2
      %v2646 = vsel %vm570, %v2643, %v2645
      %v2647 = vrot.slane %v2449, 2
      %v2648 = vrot.slane %v2450, 2
      %v2649 = vsel %vm570, %v2647, %v2648
      %v2650 = vrot.slane %v2451, 2
      %v2651 = vsel %vm570, %v2648, %v2650
      %v2652 = vrot.slane %v2452, 2
      %v2653 = vrot.slane %v2453, 2
      %v2654 = vsel %vm570, %v2652, %v2653
      %v2655 = vrot.slane %v2454, 2
      %v2656 = vsel %vm570, %v2653, %v2655
      %v2657 = vrot.slane %v2455, 2
      %v2658 = vrot.slane %v2456, 2
      %v2659 = vsel %vm570, %v2657, %v2658
      %v2660 = vrot.slane %v2457, 2
      %v2661 = vsel %vm570, %v2658, %v2660
      %v2662 = vrot.slane %v2458, 2
      %v2663 = vrot.slane %v2459, 2
      %v2664 = vsel %vm570, %v2662, %v2663
      %v2665 = vrot.slane %v2460, 2
      %v2666 = vsel %vm570, %v2663, %v2665
      %v2667 = vrot.slane %v2461, 2
      %v2668 = vrot.slane %v2462, 2
      %v2669 = vsel %vm570, %v2667, %v2668
      %v2670 = vrot.slane %v2463, 2
      %v2671 = vsel %vm570, %v2668, %v2670
      %v2672 = vrot.slane %v2464, 2
      %v2673 = vrot.slane %v2465, 2
      %v2674 = vsel %vm570, %v2672, %v2673
      %v2675 = vrot.slane %v2466, 2
      %v2676 = vsel %vm570, %v2673, %v2675
      %v2677 = vrot.slane %v2467, 2
      %v2678 = vrot.slane %v2468, 2
      %v2679 = vsel %vm570, %v2677, %v2678
      %v2680 = vrot.slane %v2469, 2
      %v2681 = vsel %vm570, %v2678, %v2680
      %v2682 = vrot.slane %v2470, 2
      %v2683 = vrot.slane %v2471, 2
      %v2684 = vsel %vm570, %v2682, %v2683
      %v2685 = vrot.slane %v2472, 2
      %v2686 = vsel %vm570, %v2683, %v2685
      %v2690 = vrot.slane %v2473, 1
      %v2691 = vrot.slane %v2474, 1
      %v2692 = vsel %vm489, %v2690, %v2691
      %v2693 = vrot.slane %v2475, 1
      %v2694 = vsel %vm489, %v2691, %v2693
      %v2695 = vrot.slane %v2473, 2
      %v2696 = vrot.slane %v2474, 2
      %v2697 = vsel %vm570, %v2695, %v2696
      %v2698 = vrot.slane %v2475, 2
      %v2699 = vsel %vm570, %v2696, %v2698
      %v2703 = vrot.slane %v2476, 1
      %v2704 = vrot.slane %v2477, 1
      %v2705 = vsel %vm489, %v2703, %v2704
      %v2706 = vrot.slane %v2478, 1
      %v2707 = vsel %vm489, %v2704, %v2706
      %v2708 = vrot.slane %v2476, 2
      %v2709 = vrot.slane %v2477, 2
      %v2710 = vsel %vm570, %v2708, %v2709
      %v2711 = vrot.slane %v2478, 2
      %v2712 = vsel %vm570, %v2709, %v2711
      %2713 = vrot.lane.b32.xlu0 %v2529, 4
      %v2714 = vpop.permute.xlu0 %2713
      %2715 = vrot.lane.b32.xlu0 %v2531, 4
      %v2716 = vpop.permute.xlu0 %2715
      %2717 = vrot.lane.b32.xlu0 %v2534, 4
      %v2718 = vpop.permute.xlu0 %2717
      %2719 = vrot.lane.b32.xlu0 %v2536, 4
      %v2720 = vpop.permute.xlu0 %2719
      %2721 = vrot.lane.b32.xlu0 %v2539, 4
      %v2722 = vpop.permute.xlu0 %2721
      %2723 = vrot.lane.b32.xlu0 %v2541, 4
      %v2724 = vpop.permute.xlu0 %2723
      %2725 = vrot.lane.b32.xlu0 %v2544, 4
      %v2726 = vpop.permute.xlu0 %2725
      %2727 = vrot.lane.b32.xlu0 %v2546, 4
      %v2728 = vpop.permute.xlu0 %2727
      %2729 = vrot.lane.b32.xlu0 %v2549, 4
      %v2730 = vpop.permute.xlu0 %2729
      %2731 = vrot.lane.b32.xlu0 %v2551, 4
      %v2732 = vpop.permute.xlu0 %2731
      %2733 = vrot.lane.b32.xlu0 %v2554, 4
      %v2734 = vpop.permute.xlu0 %2733
      %2735 = vrot.lane.b32.xlu0 %v2556, 4
      %v2736 = vpop.permute.xlu0 %2735
      %2737 = vrot.lane.b32.xlu0 %v2559, 4
      %v2738 = vpop.permute.xlu0 %2737
      %2739 = vrot.lane.b32.xlu0 %v2561, 4
      %v2740 = vpop.permute.xlu0 %2739
      %2741 = vrot.lane.b32.xlu0 %v2564, 4
      %v2742 = vpop.permute.xlu0 %2741
      %2743 = vrot.lane.b32.xlu0 %v2566, 4
      %v2744 = vpop.permute.xlu0 %2743
      %2745 = vrot.lane.b32.xlu0 %v2569, 4
      %v2746 = vpop.permute.xlu0 %2745
      %2747 = vrot.lane.b32.xlu0 %v2571, 4
      %v2748 = vpop.permute.xlu0 %2747
      %2749 = vrot.lane.b32.xlu0 %v2574, 4
      %v2750 = vpop.permute.xlu0 %2749
      %2751 = vrot.lane.b32.xlu0 %v2576, 4
      %v2752 = vpop.permute.xlu0 %2751
      %2753 = vrot.lane.b32.xlu0 %v2579, 4
      %v2754 = vpop.permute.xlu0 %2753
      %2755 = vrot.lane.b32.xlu0 %v2581, 4
      %v2756 = vpop.permute.xlu0 %2755
      %2757 = vrot.lane.b32.xlu0 %v2584, 4
      %v2758 = vpop.permute.xlu0 %2757
      %2759 = vrot.lane.b32.xlu0 %v2586, 4
      %v2760 = vpop.permute.xlu0 %2759
      %2761 = vrot.lane.b32.xlu0 %v2589, 4
      %v2762 = vpop.permute.xlu0 %2761
      %2763 = vrot.lane.b32.xlu0 %v2591, 4
      %v2764 = vpop.permute.xlu0 %2763
      %2765 = vrot.lane.b32.xlu0 %v2594, 4
      %v2766 = vpop.permute.xlu0 %2765
      %2767 = vrot.lane.b32.xlu0 %v2596, 4
      %v2768 = vpop.permute.xlu0 %2767
      %2769 = vrot.lane.b32.xlu0 %v2599, 4
      %v2770 = vpop.permute.xlu0 %2769
      %2771 = vrot.lane.b32.xlu0 %v2601, 4
      %v2772 = vpop.permute.xlu0 %2771
      %2773 = vrot.lane.b32.xlu0 %v2604, 4
      %v2774 = vpop.permute.xlu0 %2773
      %2775 = vrot.lane.b32.xlu0 %v2606, 4
      %v2776 = vpop.permute.xlu0 %2775
      %2809 = vrot.lane.b32.xlu0 %v2609, 8
      %v2810 = vpop.permute.xlu0 %2809
      %2811 = vrot.lane.b32.xlu0 %v2611, 8
      %v2812 = vpop.permute.xlu0 %2811
      %2813 = vrot.lane.b32.xlu0 %v2614, 8
      %v2814 = vpop.permute.xlu0 %2813
      %2815 = vrot.lane.b32.xlu0 %v2616, 8
      %v2816 = vpop.permute.xlu0 %2815
      %2817 = vrot.lane.b32.xlu0 %v2619, 8
      %v2818 = vpop.permute.xlu0 %2817
      %2819 = vrot.lane.b32.xlu0 %v2621, 8
      %v2820 = vpop.permute.xlu0 %2819
      %2821 = vrot.lane.b32.xlu0 %v2624, 8
      %v2822 = vpop.permute.xlu0 %2821
      %2823 = vrot.lane.b32.xlu0 %v2626, 8
      %v2824 = vpop.permute.xlu0 %2823
      %2825 = vrot.lane.b32.xlu0 %v2629, 8
      %v2826 = vpop.permute.xlu0 %2825
      %2827 = vrot.lane.b32.xlu0 %v2631, 8
      %v2828 = vpop.permute.xlu0 %2827
      %2829 = vrot.lane.b32.xlu0 %v2634, 8
      %v2830 = vpop.permute.xlu0 %2829
      %2831 = vrot.lane.b32.xlu0 %v2636, 8
      %v2832 = vpop.permute.xlu0 %2831
      %2833 = vrot.lane.b32.xlu0 %v2639, 8
      %v2834 = vpop.permute.xlu0 %2833
      %2835 = vrot.lane.b32.xlu0 %v2641, 8
      %v2836 = vpop.permute.xlu0 %2835
      %2837 = vrot.lane.b32.xlu0 %v2644, 8
      %v2838 = vpop.permute.xlu0 %2837
      %2839 = vrot.lane.b32.xlu0 %v2646, 8
      %v2840 = vpop.permute.xlu0 %2839
      %2841 = vrot.lane.b32.xlu0 %v2649, 8
      %v2842 = vpop.permute.xlu0 %2841
      %2843 = vrot.lane.b32.xlu0 %v2651, 8
      %v2844 = vpop.permute.xlu0 %2843
      %2845 = vrot.lane.b32.xlu0 %v2654, 8
      %v2846 = vpop.permute.xlu0 %2845
      %2847 = vrot.lane.b32.xlu0 %v2656, 8
      %v2848 = vpop.permute.xlu0 %2847
      %2849 = vrot.lane.b32.xlu0 %v2659, 8
      %v2850 = vpop.permute.xlu0 %2849
      %2851 = vrot.lane.b32.xlu0 %v2661, 8
      %v2852 = vpop.permute.xlu0 %2851
      %2853 = vrot.lane.b32.xlu0 %v2664, 8
      %v2854 = vpop.permute.xlu0 %2853
      %2855 = vrot.lane.b32.xlu0 %v2666, 8
      %v2856 = vpop.permute.xlu0 %2855
      %2857 = vrot.lane.b32.xlu0 %v2669, 8
      %v2858 = vpop.permute.xlu0 %2857
      %2859 = vrot.lane.b32.xlu0 %v2671, 8
      %v2860 = vpop.permute.xlu0 %2859
      %2861 = vrot.lane.b32.xlu0 %v2674, 8
      %v2862 = vpop.permute.xlu0 %2861
      %2863 = vrot.lane.b32.xlu0 %v2676, 8
      %v2864 = vpop.permute.xlu0 %2863
      %2865 = vrot.lane.b32.xlu0 %v2679, 8
      %v2866 = vpop.permute.xlu0 %2865
      %2867 = vrot.lane.b32.xlu0 %v2681, 8
      %v2868 = vpop.permute.xlu0 %2867
      %2869 = vrot.lane.b32.xlu0 %v2684, 8
      %v2870 = vpop.permute.xlu0 %2869
      %2871 = vrot.lane.b32.xlu0 %v2686, 8
      %v2872 = vpop.permute.xlu0 %2871
      %2905 = vrot.lane.b32.xlu0 %v2428, 12
      %v2906 = vpop.permute.xlu0 %2905
      %2907 = vrot.lane.b32.xlu0 %v2429, 12
      %v2908 = vpop.permute.xlu0 %2907
      %2909 = vrot.lane.b32.xlu0 %v2431, 12
      %v2910 = vpop.permute.xlu0 %2909
      %2911 = vrot.lane.b32.xlu0 %v2432, 12
      %v2912 = vpop.permute.xlu0 %2911
      %2913 = vrot.lane.b32.xlu0 %v2434, 12
      %v2914 = vpop.permute.xlu0 %2913
      %2915 = vrot.lane.b32.xlu0 %v2435, 12
      %v2916 = vpop.permute.xlu0 %2915
      %2917 = vrot.lane.b32.xlu0 %v2437, 12
      %v2918 = vpop.permute.xlu0 %2917
      %2919 = vrot.lane.b32.xlu0 %v2438, 12
      %v2920 = vpop.permute.xlu0 %2919
      %2921 = vrot.lane.b32.xlu0 %v2440, 12
      %v2922 = vpop.permute.xlu0 %2921
      %2923 = vrot.lane.b32.xlu0 %v2441, 12
      %v2924 = vpop.permute.xlu0 %2923
      %2925 = vrot.lane.b32.xlu0 %v2443, 12
      %v2926 = vpop.permute.xlu0 %2925
      %2927 = vrot.lane.b32.xlu0 %v2444, 12
      %v2928 = vpop.permute.xlu0 %2927
      %2929 = vrot.lane.b32.xlu0 %v2446, 12
      %v2930 = vpop.permute.xlu0 %2929
      %2931 = vrot.lane.b32.xlu0 %v2447, 12
      %v2932 = vpop.permute.xlu0 %2931
      %2933 = vrot.lane.b32.xlu0 %v2449, 12
      %v2934 = vpop.permute.xlu0 %2933
      %2935 = vrot.lane.b32.xlu0 %v2450, 12
      %v2936 = vpop.permute.xlu0 %2935
      %2937 = vrot.lane.b32.xlu0 %v2452, 12
      %v2938 = vpop.permute.xlu0 %2937
      %2939 = vrot.lane.b32.xlu0 %v2453, 12
      %v2940 = vpop.permute.xlu0 %2939
      %2941 = vrot.lane.b32.xlu0 %v2455, 12
      %v2942 = vpop.permute.xlu0 %2941
      %2943 = vrot.lane.b32.xlu0 %v2456, 12
      %v2944 = vpop.permute.xlu0 %2943
      %2945 = vrot.lane.b32.xlu0 %v2458, 12
      %v2946 = vpop.permute.xlu0 %2945
      %2947 = vrot.lane.b32.xlu0 %v2459, 12
      %v2948 = vpop.permute.xlu0 %2947
      %2949 = vrot.lane.b32.xlu0 %v2461, 12
      %v2950 = vpop.permute.xlu0 %2949
      %2951 = vrot.lane.b32.xlu0 %v2462, 12
      %v2952 = vpop.permute.xlu0 %2951
      %2953 = vrot.lane.b32.xlu0 %v2464, 12
      %v2954 = vpop.permute.xlu0 %2953
      %2955 = vrot.lane.b32.xlu0 %v2465, 12
      %v2956 = vpop.permute.xlu0 %2955
      %2957 = vrot.lane.b32.xlu0 %v2467, 12
      %v2958 = vpop.permute.xlu0 %2957
      %2959 = vrot.lane.b32.xlu0 %v2468, 12
      %v2960 = vpop.permute.xlu0 %2959
      %2961 = vrot.lane.b32.xlu0 %v2470, 12
      %v2962 = vpop.permute.xlu0 %2961
      %2963 = vrot.lane.b32.xlu0 %v2471, 12
      %v2964 = vpop.permute.xlu0 %2963
      %2965 = vrot.lane.b32.xlu0 %v2473, 12
      %v2966 = vpop.permute.xlu0 %2965
      %2967 = vrot.lane.b32.xlu0 %v2474, 12
      %v2968 = vpop.permute.xlu0 %2967
      %3001 = vrot.lane.b32.xlu0 %v2534, 16
      %v3002 = vpop.permute.xlu0 %3001
      %3003 = vrot.lane.b32.xlu0 %v2536, 16
      %v3004 = vpop.permute.xlu0 %3003
      %3005 = vrot.lane.b32.xlu0 %v2539, 16
      %v3006 = vpop.permute.xlu0 %3005
      %3007 = vrot.lane.b32.xlu0 %v2541, 16
      %v3008 = vpop.permute.xlu0 %3007
      %3009 = vrot.lane.b32.xlu0 %v2544, 16
      %v3010 = vpop.permute.xlu0 %3009
      %3011 = vrot.lane.b32.xlu0 %v2546, 16
      %v3012 = vpop.permute.xlu0 %3011
      %3013 = vrot.lane.b32.xlu0 %v2549, 16
      %v3014 = vpop.permute.xlu0 %3013
      %3015 = vrot.lane.b32.xlu0 %v2551, 16
      %v3016 = vpop.permute.xlu0 %3015
      %3017 = vrot.lane.b32.xlu0 %v2554, 16
      %v3018 = vpop.permute.xlu0 %3017
      %3019 = vrot.lane.b32.xlu0 %v2556, 16
      %v3020 = vpop.permute.xlu0 %3019
      %3021 = vrot.lane.b32.xlu0 %v2559, 16
      %v3022 = vpop.permute.xlu0 %3021
      %3023 = vrot.lane.b32.xlu0 %v2561, 16
      %v3024 = vpop.permute.xlu0 %3023
      %3025 = vrot.lane.b32.xlu0 %v2564, 16
      %v3026 = vpop.permute.xlu0 %3025
      %3027 = vrot.lane.b32.xlu0 %v2566, 16
      %v3028 = vpop.permute.xlu0 %3027
      %3029 = vrot.lane.b32.xlu0 %v2569, 16
      %v3030 = vpop.permute.xlu0 %3029
      %3031 = vrot.lane.b32.xlu0 %v2571, 16
      %v3032 = vpop.permute.xlu0 %3031
      %3033 = vrot.lane.b32.xlu0 %v2574, 16
      %v3034 = vpop.permute.xlu0 %3033
      %3035 = vrot.lane.b32.xlu0 %v2576, 16
      %v3036 = vpop.permute.xlu0 %3035
      %3037 = vrot.lane.b32.xlu0 %v2579, 16
      %v3038 = vpop.permute.xlu0 %3037
      %3039 = vrot.lane.b32.xlu0 %v2581, 16
      %v3040 = vpop.permute.xlu0 %3039
      %3041 = vrot.lane.b32.xlu0 %v2584, 16
      %v3042 = vpop.permute.xlu0 %3041
      %3043 = vrot.lane.b32.xlu0 %v2586, 16
      %v3044 = vpop.permute.xlu0 %3043
      %3045 = vrot.lane.b32.xlu0 %v2589, 16
      %v3046 = vpop.permute.xlu0 %3045
      %3047 = vrot.lane.b32.xlu0 %v2591, 16
      %v3048 = vpop.permute.xlu0 %3047
      %3049 = vrot.lane.b32.xlu0 %v2594, 16
      %v3050 = vpop.permute.xlu0 %3049
      %3051 = vrot.lane.b32.xlu0 %v2596, 16
      %v3052 = vpop.permute.xlu0 %3051
      %3053 = vrot.lane.b32.xlu0 %v2599, 16
      %v3054 = vpop.permute.xlu0 %3053
      %3055 = vrot.lane.b32.xlu0 %v2601, 16
      %v3056 = vpop.permute.xlu0 %3055
      %3057 = vrot.lane.b32.xlu0 %v2604, 16
      %v3058 = vpop.permute.xlu0 %3057
      %3059 = vrot.lane.b32.xlu0 %v2606, 16
      %v3060 = vpop.permute.xlu0 %3059
      %3061 = vrot.lane.b32.xlu0 %v2692, 16
      %v3062 = vpop.permute.xlu0 %3061
      %3063 = vrot.lane.b32.xlu0 %v2694, 16
      %v3064 = vpop.permute.xlu0 %3063
      %3097 = vrot.lane.b32.xlu0 %v2614, 20
      %v3098 = vpop.permute.xlu0 %3097
      %3099 = vrot.lane.b32.xlu0 %v2616, 20
      %v3100 = vpop.permute.xlu0 %3099
      %3101 = vrot.lane.b32.xlu0 %v2619, 20
      %v3102 = vpop.permute.xlu0 %3101
      %3103 = vrot.lane.b32.xlu0 %v2621, 20
      %v3104 = vpop.permute.xlu0 %3103
      %3105 = vrot.lane.b32.xlu0 %v2624, 20
      %v3106 = vpop.permute.xlu0 %3105
      %3107 = vrot.lane.b32.xlu0 %v2626, 20
      %v3108 = vpop.permute.xlu0 %3107
      %3109 = vrot.lane.b32.xlu0 %v2629, 20
      %v3110 = vpop.permute.xlu0 %3109
      %3111 = vrot.lane.b32.xlu0 %v2631, 20
      %v3112 = vpop.permute.xlu0 %3111
      %3113 = vrot.lane.b32.xlu0 %v2634, 20
      %v3114 = vpop.permute.xlu0 %3113
      %3115 = vrot.lane.b32.xlu0 %v2636, 20
      %v3116 = vpop.permute.xlu0 %3115
      %3117 = vrot.lane.b32.xlu0 %v2639, 20
      %v3118 = vpop.permute.xlu0 %3117
      %3119 = vrot.lane.b32.xlu0 %v2641, 20
      %v3120 = vpop.permute.xlu0 %3119
      %3121 = vrot.lane.b32.xlu0 %v2644, 20
      %v3122 = vpop.permute.xlu0 %3121
      %3123 = vrot.lane.b32.xlu0 %v2646, 20
      %v3124 = vpop.permute.xlu0 %3123
      %3125 = vrot.lane.b32.xlu0 %v2649, 20
      %v3126 = vpop.permute.xlu0 %3125
      %3127 = vrot.lane.b32.xlu0 %v2651, 20
      %v3128 = vpop.permute.xlu0 %3127
      %3129 = vrot.lane.b32.xlu0 %v2654, 20
      %v3130 = vpop.permute.xlu0 %3129
      %3131 = vrot.lane.b32.xlu0 %v2656, 20
      %v3132 = vpop.permute.xlu0 %3131
      %3133 = vrot.lane.b32.xlu0 %v2659, 20
      %v3134 = vpop.permute.xlu0 %3133
      %3135 = vrot.lane.b32.xlu0 %v2661, 20
      %v3136 = vpop.permute.xlu0 %3135
      %3137 = vrot.lane.b32.xlu0 %v2664, 20
      %v3138 = vpop.permute.xlu0 %3137
      %3139 = vrot.lane.b32.xlu0 %v2666, 20
      %v3140 = vpop.permute.xlu0 %3139
      %3141 = vrot.lane.b32.xlu0 %v2669, 20
      %v3142 = vpop.permute.xlu0 %3141
      %3143 = vrot.lane.b32.xlu0 %v2671, 20
      %v3144 = vpop.permute.xlu0 %3143
      %3145 = vrot.lane.b32.xlu0 %v2674, 20
      %v3146 = vpop.permute.xlu0 %3145
      %3147 = vrot.lane.b32.xlu0 %v2676, 20
      %v3148 = vpop.permute.xlu0 %3147
      %3149 = vrot.lane.b32.xlu0 %v2679, 20
      %v3150 = vpop.permute.xlu0 %3149
      %3151 = vrot.lane.b32.xlu0 %v2681, 20
      %v3152 = vpop.permute.xlu0 %3151
      %3153 = vrot.lane.b32.xlu0 %v2684, 20
      %v3154 = vpop.permute.xlu0 %3153
      %3155 = vrot.lane.b32.xlu0 %v2686, 20
      %v3156 = vpop.permute.xlu0 %3155
      %3157 = vrot.lane.b32.xlu0 %v2697, 20
      %v3158 = vpop.permute.xlu0 %3157
      %3159 = vrot.lane.b32.xlu0 %v2699, 20
      %v3160 = vpop.permute.xlu0 %3159
      %3193 = vrot.lane.b32.xlu0 %v2431, 24
      %v3194 = vpop.permute.xlu0 %3193
      %3195 = vrot.lane.b32.xlu0 %v2432, 24
      %v3196 = vpop.permute.xlu0 %3195
      %3197 = vrot.lane.b32.xlu0 %v2434, 24
      %v3198 = vpop.permute.xlu0 %3197
      %3199 = vrot.lane.b32.xlu0 %v2435, 24
      %v3200 = vpop.permute.xlu0 %3199
      %3201 = vrot.lane.b32.xlu0 %v2437, 24
      %v3202 = vpop.permute.xlu0 %3201
      %3203 = vrot.lane.b32.xlu0 %v2438, 24
      %v3204 = vpop.permute.xlu0 %3203
      %3205 = vrot.lane.b32.xlu0 %v2440, 24
      %v3206 = vpop.permute.xlu0 %3205
      %3207 = vrot.lane.b32.xlu0 %v2441, 24
      %v3208 = vpop.permute.xlu0 %3207
      %3209 = vrot.lane.b32.xlu0 %v2443, 24
      %v3210 = vpop.permute.xlu0 %3209
      %3211 = vrot.lane.b32.xlu0 %v2444, 24
      %v3212 = vpop.permute.xlu0 %3211
      %3213 = vrot.lane.b32.xlu0 %v2446, 24
      %v3214 = vpop.permute.xlu0 %3213
      %3215 = vrot.lane.b32.xlu0 %v2447, 24
      %v3216 = vpop.permute.xlu0 %3215
      %3217 = vrot.lane.b32.xlu0 %v2449, 24
      %v3218 = vpop.permute.xlu0 %3217
      %3219 = vrot.lane.b32.xlu0 %v2450, 24
      %v3220 = vpop.permute.xlu0 %3219
      %3221 = vrot.lane.b32.xlu0 %v2452, 24
      %v3222 = vpop.permute.xlu0 %3221
      %3223 = vrot.lane.b32.xlu0 %v2453, 24
      %v3224 = vpop.permute.xlu0 %3223
      %3225 = vrot.lane.b32.xlu0 %v2455, 24
      %v3226 = vpop.permute.xlu0 %3225
      %3227 = vrot.lane.b32.xlu0 %v2456, 24
      %v3228 = vpop.permute.xlu0 %3227
      %3229 = vrot.lane.b32.xlu0 %v2458, 24
      %v3230 = vpop.permute.xlu0 %3229
      %3231 = vrot.lane.b32.xlu0 %v2459, 24
      %v3232 = vpop.permute.xlu0 %3231
      %3233 = vrot.lane.b32.xlu0 %v2461, 24
      %v3234 = vpop.permute.xlu0 %3233
      %3235 = vrot.lane.b32.xlu0 %v2462, 24
      %v3236 = vpop.permute.xlu0 %3235
      %3237 = vrot.lane.b32.xlu0 %v2464, 24
      %v3238 = vpop.permute.xlu0 %3237
      %3239 = vrot.lane.b32.xlu0 %v2465, 24
      %v3240 = vpop.permute.xlu0 %3239
      %3241 = vrot.lane.b32.xlu0 %v2467, 24
      %v3242 = vpop.permute.xlu0 %3241
      %3243 = vrot.lane.b32.xlu0 %v2468, 24
      %v3244 = vpop.permute.xlu0 %3243
      %3245 = vrot.lane.b32.xlu0 %v2470, 24
      %v3246 = vpop.permute.xlu0 %3245
      %3247 = vrot.lane.b32.xlu0 %v2471, 24
      %v3248 = vpop.permute.xlu0 %3247
      %3249 = vrot.lane.b32.xlu0 %v2473, 24
      %v3250 = vpop.permute.xlu0 %3249
      %3251 = vrot.lane.b32.xlu0 %v2474, 24
      %v3252 = vpop.permute.xlu0 %3251
      %3253 = vrot.lane.b32.xlu0 %v2476, 24
      %v3254 = vpop.permute.xlu0 %3253
      %3255 = vrot.lane.b32.xlu0 %v2477, 24
      %v3256 = vpop.permute.xlu0 %3255
      %3289 = vrot.lane.b32.xlu0 %v2539, 28
      %v3290 = vpop.permute.xlu0 %3289
      %3291 = vrot.lane.b32.xlu0 %v2541, 28
      %v3292 = vpop.permute.xlu0 %3291
      %3293 = vrot.lane.b32.xlu0 %v2544, 28
      %v3294 = vpop.permute.xlu0 %3293
      %3295 = vrot.lane.b32.xlu0 %v2546, 28
      %v3296 = vpop.permute.xlu0 %3295
      %3297 = vrot.lane.b32.xlu0 %v2549, 28
      %v3298 = vpop.permute.xlu0 %3297
      %3299 = vrot.lane.b32.xlu0 %v2551, 28
      %v3300 = vpop.permute.xlu0 %3299
      %3301 = vrot.lane.b32.xlu0 %v2554, 28
      %v3302 = vpop.permute.xlu0 %3301
      %3303 = vrot.lane.b32.xlu0 %v2556, 28
      %v3304 = vpop.permute.xlu0 %3303
      %3305 = vrot.lane.b32.xlu0 %v2559, 28
      %v3306 = vpop.permute.xlu0 %3305
      %3307 = vrot.lane.b32.xlu0 %v2561, 28
      %v3308 = vpop.permute.xlu0 %3307
      %3309 = vrot.lane.b32.xlu0 %v2564, 28
      %v3310 = vpop.permute.xlu0 %3309
      %3311 = vrot.lane.b32.xlu0 %v2566, 28
      %v3312 = vpop.permute.xlu0 %3311
      %3313 = vrot.lane.b32.xlu0 %v2569, 28
      %v3314 = vpop.permute.xlu0 %3313
      %3315 = vrot.lane.b32.xlu0 %v2571, 28
      %v3316 = vpop.permute.xlu0 %3315
      %3317 = vrot.lane.b32.xlu0 %v2574, 28
      %v3318 = vpop.permute.xlu0 %3317
      %3319 = vrot.lane.b32.xlu0 %v2576, 28
      %v3320 = vpop.permute.xlu0 %3319
      %3321 = vrot.lane.b32.xlu0 %v2579, 28
      %v3322 = vpop.permute.xlu0 %3321
      %3323 = vrot.lane.b32.xlu0 %v2581, 28
      %v3324 = vpop.permute.xlu0 %3323
      %3325 = vrot.lane.b32.xlu0 %v2584, 28
      %v3326 = vpop.permute.xlu0 %3325
      %3327 = vrot.lane.b32.xlu0 %v2586, 28
      %v3328 = vpop.permute.xlu0 %3327
      %3329 = vrot.lane.b32.xlu0 %v2589, 28
      %v3330 = vpop.permute.xlu0 %3329
      %3331 = vrot.lane.b32.xlu0 %v2591, 28
      %v3332 = vpop.permute.xlu0 %3331
      %3333 = vrot.lane.b32.xlu0 %v2594, 28
      %v3334 = vpop.permute.xlu0 %3333
      %3335 = vrot.lane.b32.xlu0 %v2596, 28
      %v3336 = vpop.permute.xlu0 %3335
      %3337 = vrot.lane.b32.xlu0 %v2599, 28
      %v3338 = vpop.permute.xlu0 %3337
      %3339 = vrot.lane.b32.xlu0 %v2601, 28
      %v3340 = vpop.permute.xlu0 %3339
      %3341 = vrot.lane.b32.xlu0 %v2604, 28
      %v3342 = vpop.permute.xlu0 %3341
      %3343 = vrot.lane.b32.xlu0 %v2606, 28
      %v3344 = vpop.permute.xlu0 %3343
      %3345 = vrot.lane.b32.xlu0 %v2692, 28
      %v3346 = vpop.permute.xlu0 %3345
      %3347 = vrot.lane.b32.xlu0 %v2694, 28
      %v3348 = vpop.permute.xlu0 %3347
      %3349 = vrot.lane.b32.xlu0 %v2705, 28
      %v3350 = vpop.permute.xlu0 %3349
      %3351 = vrot.lane.b32.xlu0 %v2707, 28
      %v3352 = vpop.permute.xlu0 %3351
      %3385 = vrot.lane.b32.xlu0 %v2619, 32
      %v3386 = vpop.permute.xlu0 %3385
      %3387 = vrot.lane.b32.xlu0 %v2621, 32
      %v3388 = vpop.permute.xlu0 %3387
      %3389 = vrot.lane.b32.xlu0 %v2624, 32
      %v3390 = vpop.permute.xlu0 %3389
      %3391 = vrot.lane.b32.xlu0 %v2626, 32
      %v3392 = vpop.permute.xlu0 %3391
      %3393 = vrot.lane.b32.xlu0 %v2629, 32
      %v3394 = vpop.permute.xlu0 %3393
      %3395 = vrot.lane.b32.xlu0 %v2631, 32
      %v3396 = vpop.permute.xlu0 %3395
      %3397 = vrot.lane.b32.xlu0 %v2634, 32
      %v3398 = vpop.permute.xlu0 %3397
      %3399 = vrot.lane.b32.xlu0 %v2636, 32
      %v3400 = vpop.permute.xlu0 %3399
      %3401 = vrot.lane.b32.xlu0 %v2639, 32
      %v3402 = vpop.permute.xlu0 %3401
      %3403 = vrot.lane.b32.xlu0 %v2641, 32
      %v3404 = vpop.permute.xlu0 %3403
      %3405 = vrot.lane.b32.xlu0 %v2644, 32
      %v3406 = vpop.permute.xlu0 %3405
      %3407 = vrot.lane.b32.xlu0 %v2646, 32
      %v3408 = vpop.permute.xlu0 %3407
      %3409 = vrot.lane.b32.xlu0 %v2649, 32
      %v3410 = vpop.permute.xlu0 %3409
      %3411 = vrot.lane.b32.xlu0 %v2651, 32
      %v3412 = vpop.permute.xlu0 %3411
      %3413 = vrot.lane.b32.xlu0 %v2654, 32
      %v3414 = vpop.permute.xlu0 %3413
      %3415 = vrot.lane.b32.xlu0 %v2656, 32
      %v3416 = vpop.permute.xlu0 %3415
      %3417 = vrot.lane.b32.xlu0 %v2659, 32
      %v3418 = vpop.permute.xlu0 %3417
      %3419 = vrot.lane.b32.xlu0 %v2661, 32
      %v3420 = vpop.permute.xlu0 %3419
      %3421 = vrot.lane.b32.xlu0 %v2664, 32
      %v3422 = vpop.permute.xlu0 %3421
      %3423 = vrot.lane.b32.xlu0 %v2666, 32
      %v3424 = vpop.permute.xlu0 %3423
      %3425 = vrot.lane.b32.xlu0 %v2669, 32
      %v3426 = vpop.permute.xlu0 %3425
      %3427 = vrot.lane.b32.xlu0 %v2671, 32
      %v3428 = vpop.permute.xlu0 %3427
      %3429 = vrot.lane.b32.xlu0 %v2674, 32
      %v3430 = vpop.permute.xlu0 %3429
      %3431 = vrot.lane.b32.xlu0 %v2676, 32
      %v3432 = vpop.permute.xlu0 %3431
      %3433 = vrot.lane.b32.xlu0 %v2679, 32
      %v3434 = vpop.permute.xlu0 %3433
      %3435 = vrot.lane.b32.xlu0 %v2681, 32
      %v3436 = vpop.permute.xlu0 %3435
      %3437 = vrot.lane.b32.xlu0 %v2684, 32
      %v3438 = vpop.permute.xlu0 %3437
      %3439 = vrot.lane.b32.xlu0 %v2686, 32
      %v3440 = vpop.permute.xlu0 %3439
      %3441 = vrot.lane.b32.xlu0 %v2697, 32
      %v3442 = vpop.permute.xlu0 %3441
      %3443 = vrot.lane.b32.xlu0 %v2699, 32
      %v3444 = vpop.permute.xlu0 %3443
      %3445 = vrot.lane.b32.xlu0 %v2710, 32
      %v3446 = vpop.permute.xlu0 %3445
      %3447 = vrot.lane.b32.xlu0 %v2712, 32
      %v3448 = vpop.permute.xlu0 %3447
      %v3481 = vsel %vm270, %v2425, %v2714
      %v3482 = vsel %vm270, %v2426, %v2716
      %v3483 = vsel %vm270, %v2428, %v2718
      %v3484 = vsel %vm270, %v2429, %v2720
      %v3485 = vsel %vm270, %v2431, %v2722
      %v3486 = vsel %vm270, %v2432, %v2724
      %v3487 = vsel %vm270, %v2434, %v2726
      %v3488 = vsel %vm270, %v2435, %v2728
      %v3489 = vsel %vm270, %v2437, %v2730
      %v3490 = vsel %vm270, %v2438, %v2732
      %v3491 = vsel %vm270, %v2440, %v2734
      %v3492 = vsel %vm270, %v2441, %v2736
      %v3493 = vsel %vm270, %v2443, %v2738
      %v3494 = vsel %vm270, %v2444, %v2740
      %v3495 = vsel %vm270, %v2446, %v2742
      %v3496 = vsel %vm270, %v2447, %v2744
      %v3497 = vsel %vm270, %v2449, %v2746
      %v3498 = vsel %vm270, %v2450, %v2748
      %v3499 = vsel %vm270, %v2452, %v2750
      %v3500 = vsel %vm270, %v2453, %v2752
      %v3501 = vsel %vm270, %v2455, %v2754
      %v3502 = vsel %vm270, %v2456, %v2756
      %v3503 = vsel %vm270, %v2458, %v2758
      %v3504 = vsel %vm270, %v2459, %v2760
      %v3505 = vsel %vm270, %v2461, %v2762
      %v3506 = vsel %vm270, %v2462, %v2764
      %v3507 = vsel %vm270, %v2464, %v2766
      %v3508 = vsel %vm270, %v2465, %v2768
      %v3509 = vsel %vm270, %v2467, %v2770
      %v3510 = vsel %vm270, %v2468, %v2772
      %v3511 = vsel %vm270, %v2470, %v2774
      %v3512 = vsel %vm270, %v2471, %v2776
      %v3513 = vsel %vm1477, %v3481, %v2810
      %v3514 = vsel %vm1477, %v3482, %v2812
      %v3515 = vsel %vm1477, %v3483, %v2814
      %v3516 = vsel %vm1477, %v3484, %v2816
      %v3517 = vsel %vm1477, %v3485, %v2818
      %v3518 = vsel %vm1477, %v3486, %v2820
      %v3519 = vsel %vm1477, %v3487, %v2822
      %v3520 = vsel %vm1477, %v3488, %v2824
      %v3521 = vsel %vm1477, %v3489, %v2826
      %v3522 = vsel %vm1477, %v3490, %v2828
      %v3523 = vsel %vm1477, %v3491, %v2830
      %v3524 = vsel %vm1477, %v3492, %v2832
      %v3525 = vsel %vm1477, %v3493, %v2834
      %v3526 = vsel %vm1477, %v3494, %v2836
      %v3527 = vsel %vm1477, %v3495, %v2838
      %v3528 = vsel %vm1477, %v3496, %v2840
      %v3529 = vsel %vm1477, %v3497, %v2842
      %v3530 = vsel %vm1477, %v3498, %v2844
      %v3531 = vsel %vm1477, %v3499, %v2846
      %v3532 = vsel %vm1477, %v3500, %v2848
      %v3533 = vsel %vm1477, %v3501, %v2850
      %v3534 = vsel %vm1477, %v3502, %v2852
      %v3535 = vsel %vm1477, %v3503, %v2854
      %v3536 = vsel %vm1477, %v3504, %v2856
      %v3537 = vsel %vm1477, %v3505, %v2858
      %v3538 = vsel %vm1477, %v3506, %v2860
      %v3539 = vsel %vm1477, %v3507, %v2862
      %v3540 = vsel %vm1477, %v3508, %v2864
      %v3541 = vsel %vm1477, %v3509, %v2866
      %v3542 = vsel %vm1477, %v3510, %v2868
      %v3543 = vsel %vm1477, %v3511, %v2870
      %v3544 = vsel %vm1477, %v3512, %v2872
      %v3545 = vsel %vm1510, %v3513, %v2906
      %v3546 = vsel %vm1510, %v3514, %v2908
      %v3547 = vsel %vm1510, %v3515, %v2910
      %v3548 = vsel %vm1510, %v3516, %v2912
      %v3549 = vsel %vm1510, %v3517, %v2914
      %v3550 = vsel %vm1510, %v3518, %v2916
      %v3551 = vsel %vm1510, %v3519, %v2918
      %v3552 = vsel %vm1510, %v3520, %v2920
      %v3553 = vsel %vm1510, %v3521, %v2922
      %v3554 = vsel %vm1510, %v3522, %v2924
      %v3555 = vsel %vm1510, %v3523, %v2926
      %v3556 = vsel %vm1510, %v3524, %v2928
      %v3557 = vsel %vm1510, %v3525, %v2930
      %v3558 = vsel %vm1510, %v3526, %v2932
      %v3559 = vsel %vm1510, %v3527, %v2934
      %v3560 = vsel %vm1510, %v3528, %v2936
      %v3561 = vsel %vm1510, %v3529, %v2938
      %v3562 = vsel %vm1510, %v3530, %v2940
      %v3563 = vsel %vm1510, %v3531, %v2942
      %v3564 = vsel %vm1510, %v3532, %v2944
      %v3565 = vsel %vm1510, %v3533, %v2946
      %v3566 = vsel %vm1510, %v3534, %v2948
      %v3567 = vsel %vm1510, %v3535, %v2950
      %v3568 = vsel %vm1510, %v3536, %v2952
      %v3569 = vsel %vm1510, %v3537, %v2954
      %v3570 = vsel %vm1510, %v3538, %v2956
      %v3571 = vsel %vm1510, %v3539, %v2958
      %v3572 = vsel %vm1510, %v3540, %v2960
      %v3573 = vsel %vm1510, %v3541, %v2962
      %v3574 = vsel %vm1510, %v3542, %v2964
      %v3575 = vsel %vm1510, %v3543, %v2966
      %v3576 = vsel %vm1510, %v3544, %v2968
      %v3577 = vsel %vm1543, %v3545, %v3002
      %v3578 = vsel %vm1543, %v3546, %v3004
      %v3579 = vsel %vm1543, %v3547, %v3006
      %v3580 = vsel %vm1543, %v3548, %v3008
      %v3581 = vsel %vm1543, %v3549, %v3010
      %v3582 = vsel %vm1543, %v3550, %v3012
      %v3583 = vsel %vm1543, %v3551, %v3014
      %v3584 = vsel %vm1543, %v3552, %v3016
      %v3585 = vsel %vm1543, %v3553, %v3018
      %v3586 = vsel %vm1543, %v3554, %v3020
      %v3587 = vsel %vm1543, %v3555, %v3022
      %v3588 = vsel %vm1543, %v3556, %v3024
      %v3589 = vsel %vm1543, %v3557, %v3026
      %v3590 = vsel %vm1543, %v3558, %v3028
      %v3591 = vsel %vm1543, %v3559, %v3030
      %v3592 = vsel %vm1543, %v3560, %v3032
      %v3593 = vsel %vm1543, %v3561, %v3034
      %v3594 = vsel %vm1543, %v3562, %v3036
      %v3595 = vsel %vm1543, %v3563, %v3038
      %v3596 = vsel %vm1543, %v3564, %v3040
      %v3597 = vsel %vm1543, %v3565, %v3042
      %v3598 = vsel %vm1543, %v3566, %v3044
      %v3599 = vsel %vm1543, %v3567, %v3046
      %v3600 = vsel %vm1543, %v3568, %v3048
      %v3601 = vsel %vm1543, %v3569, %v3050
      %v3602 = vsel %vm1543, %v3570, %v3052
      %v3603 = vsel %vm1543, %v3571, %v3054
      %v3604 = vsel %vm1543, %v3572, %v3056
      %v3605 = vsel %vm1543, %v3573, %v3058
      %v3606 = vsel %vm1543, %v3574, %v3060
      %v3607 = vsel %vm1543, %v3575, %v3062
      %v3608 = vsel %vm1543, %v3576, %v3064
      %v3609 = vsel %vm1576, %v3577, %v3098
      %v3610 = vsel %vm1576, %v3578, %v3100
      %v3611 = vsel %vm1576, %v3579, %v3102
      %v3612 = vsel %vm1576, %v3580, %v3104
      %v3613 = vsel %vm1576, %v3581, %v3106
      %v3614 = vsel %vm1576, %v3582, %v3108
      %v3615 = vsel %vm1576, %v3583, %v3110
      %v3616 = vsel %vm1576, %v3584, %v3112
      %v3617 = vsel %vm1576, %v3585, %v3114
      %v3618 = vsel %vm1576, %v3586, %v3116
      %v3619 = vsel %vm1576, %v3587, %v3118
      %v3620 = vsel %vm1576, %v3588, %v3120
      %v3621 = vsel %vm1576, %v3589, %v3122
      %v3622 = vsel %vm1576, %v3590, %v3124
      %v3623 = vsel %vm1576, %v3591, %v3126
      %v3624 = vsel %vm1576, %v3592, %v3128
      %v3625 = vsel %vm1576, %v3593, %v3130
      %v3626 = vsel %vm1576, %v3594, %v3132
      %v3627 = vsel %vm1576, %v3595, %v3134
      %v3628 = vsel %vm1576, %v3596, %v3136
      %v3629 = vsel %vm1576, %v3597, %v3138
      %v3630 = vsel %vm1576, %v3598, %v3140
      %v3631 = vsel %vm1576, %v3599, %v3142
      %v3632 = vsel %vm1576, %v3600, %v3144
      %v3633 = vsel %vm1576, %v3601, %v3146
      %v3634 = vsel %vm1576, %v3602, %v3148
      %v3635 = vsel %vm1576, %v3603, %v3150
      %v3636 = vsel %vm1576, %v3604, %v3152
      %v3637 = vsel %vm1576, %v3605, %v3154
      %v3638 = vsel %vm1576, %v3606, %v3156
      %v3639 = vsel %vm1576, %v3607, %v3158
      %v3640 = vsel %vm1576, %v3608, %v3160
      %v3641 = vsel %vm1609, %v3609, %v3194
      %v3642 = vsel %vm1609, %v3610, %v3196
      %v3643 = vsel %vm1609, %v3611, %v3198
      %v3644 = vsel %vm1609, %v3612, %v3200
      %v3645 = vsel %vm1609, %v3613, %v3202
      %v3646 = vsel %vm1609, %v3614, %v3204
      %v3647 = vsel %vm1609, %v3615, %v3206
      %v3648 = vsel %vm1609, %v3616, %v3208
      %v3649 = vsel %vm1609, %v3617, %v3210
      %v3650 = vsel %vm1609, %v3618, %v3212
      %v3651 = vsel %vm1609, %v3619, %v3214
      %v3652 = vsel %vm1609, %v3620, %v3216
      %v3653 = vsel %vm1609, %v3621, %v3218
      %v3654 = vsel %vm1609, %v3622, %v3220
      %v3655 = vsel %vm1609, %v3623, %v3222
      %v3656 = vsel %vm1609, %v3624, %v3224
      %v3657 = vsel %vm1609, %v3625, %v3226
      %v3658 = vsel %vm1609, %v3626, %v3228
      %v3659 = vsel %vm1609, %v3627, %v3230
      %v3660 = vsel %vm1609, %v3628, %v3232
      %v3661 = vsel %vm1609, %v3629, %v3234
      %v3662 = vsel %vm1609, %v3630, %v3236
      %v3663 = vsel %vm1609, %v3631, %v3238
      %v3664 = vsel %vm1609, %v3632, %v3240
      %v3665 = vsel %vm1609, %v3633, %v3242
      %v3666 = vsel %vm1609, %v3634, %v3244
      %v3667 = vsel %vm1609, %v3635, %v3246
      %v3668 = vsel %vm1609, %v3636, %v3248
      %v3669 = vsel %vm1609, %v3637, %v3250
      %v3670 = vsel %vm1609, %v3638, %v3252
      %v3671 = vsel %vm1609, %v3639, %v3254
      %v3672 = vsel %vm1609, %v3640, %v3256
      %v3673 = vsel %vm1642, %v3641, %v3290
      %v3674 = vsel %vm1642, %v3642, %v3292
      %v3675 = vsel %vm1642, %v3643, %v3294
      %v3676 = vsel %vm1642, %v3644, %v3296
      %v3677 = vsel %vm1642, %v3645, %v3298
      %v3678 = vsel %vm1642, %v3646, %v3300
      %v3679 = vsel %vm1642, %v3647, %v3302
      %v3680 = vsel %vm1642, %v3648, %v3304
      %v3681 = vsel %vm1642, %v3649, %v3306
      %v3682 = vsel %vm1642, %v3650, %v3308
      %v3683 = vsel %vm1642, %v3651, %v3310
      %v3684 = vsel %vm1642, %v3652, %v3312
      %v3685 = vsel %vm1642, %v3653, %v3314
      %v3686 = vsel %vm1642, %v3654, %v3316
      %v3687 = vsel %vm1642, %v3655, %v3318
      %v3688 = vsel %vm1642, %v3656, %v3320
      %v3689 = vsel %vm1642, %v3657, %v3322
      %v3690 = vsel %vm1642, %v3658, %v3324
      %v3691 = vsel %vm1642, %v3659, %v3326
      %v3692 = vsel %vm1642, %v3660, %v3328
      %v3693 = vsel %vm1642, %v3661, %v3330
      %v3694 = vsel %vm1642, %v3662, %v3332
      %v3695 = vsel %vm1642, %v3663, %v3334
      %v3696 = vsel %vm1642, %v3664, %v3336
      %v3697 = vsel %vm1642, %v3665, %v3338
      %v3698 = vsel %vm1642, %v3666, %v3340
      %v3699 = vsel %vm1642, %v3667, %v3342
      %v3700 = vsel %vm1642, %v3668, %v3344
      %v3701 = vsel %vm1642, %v3669, %v3346
      %v3702 = vsel %vm1642, %v3670, %v3348
      %v3703 = vsel %vm1642, %v3671, %v3350
      %v3704 = vsel %vm1642, %v3672, %v3352
      %v3705 = vsel %vm1675, %v3673, %v3386
      %v3706 = vsel %vm1675, %v3674, %v3388
      %v3707 = vsel %vm1675, %v3675, %v3390
      %v3708 = vsel %vm1675, %v3676, %v3392
      %v3709 = vsel %vm1675, %v3677, %v3394
      %v3710 = vsel %vm1675, %v3678, %v3396
      %v3711 = vsel %vm1675, %v3679, %v3398
      %v3712 = vsel %vm1675, %v3680, %v3400
      %v3713 = vsel %vm1675, %v3681, %v3402
      %v3714 = vsel %vm1675, %v3682, %v3404
      %v3715 = vsel %vm1675, %v3683, %v3406
      %v3716 = vsel %vm1675, %v3684, %v3408
      %v3717 = vsel %vm1675, %v3685, %v3410
      %v3718 = vsel %vm1675, %v3686, %v3412
      %v3719 = vsel %vm1675, %v3687, %v3414
      %v3720 = vsel %vm1675, %v3688, %v3416
      %v3721 = vsel %vm1675, %v3689, %v3418
      %v3722 = vsel %vm1675, %v3690, %v3420
      %v3723 = vsel %vm1675, %v3691, %v3422
      %v3724 = vsel %vm1675, %v3692, %v3424
      %v3725 = vsel %vm1675, %v3693, %v3426
      %v3726 = vsel %vm1675, %v3694, %v3428
      %v3727 = vsel %vm1675, %v3695, %v3430
      %v3728 = vsel %vm1675, %v3696, %v3432
      %v3729 = vsel %vm1675, %v3697, %v3434
      %v3730 = vsel %vm1675, %v3698, %v3436
      %v3731 = vsel %vm1675, %v3699, %v3438
      %v3732 = vsel %vm1675, %v3700, %v3440
      %v3733 = vsel %vm1675, %v3701, %v3442
      %v3734 = vsel %vm1675, %v3702, %v3444
      %v3735 = vsel %vm1675, %v3703, %v3446
      %v3736 = vsel %vm1675, %v3704, %v3448
      %v3738 = vlaneseq
      %v3739 = vshrl.u32 %v3738, 7
      %v3740 = vsub.s32 0, %v3739
      %v3741 = vrot.slane %v268, %v3740
      %v3744 = vsel %vm1714, %v3705, 0
      %v3747 = vsel %vm1714, %v3706, 0
      %v3750 = vsel %vm1714, %v3707, 0
      %v3753 = vsel %vm1714, %v3708, 0
      %v3756 = vsel %vm1714, %v3709, 0
      %v3759 = vsel %vm1714, %v3710, 0
      %v3762 = vsel %vm1714, %v3711, 0
      %v3765 = vsel %vm1714, %v3712, 0
      %v3768 = vsel %vm1714, %v3713, 0
      %v3771 = vsel %vm1714, %v3714, 0
      %v3774 = vsel %vm1714, %v3715, 0
      %v3777 = vsel %vm1714, %v3716, 0
      %v3780 = vsel %vm1714, %v3717, 0
      %v3783 = vsel %vm1714, %v3718, 0
      %v3786 = vsel %vm1714, %v3719, 0
      %v3789 = vsel %vm1714, %v3720, 0
      %v3792 = vsel %vm1714, %v3721, 0
      %v3795 = vsel %vm1714, %v3722, 0
      %v3798 = vsel %vm1714, %v3723, 0
      %v3801 = vsel %vm1714, %v3724, 0
      %v3804 = vsel %vm1714, %v3725, 0
      %v3807 = vsel %vm1714, %v3726, 0
      %v3810 = vsel %vm1714, %v3727, 0
      %v3813 = vsel %vm1714, %v3728, 0
      %v3816 = vsel %vm1714, %v3729, 0
      %v3819 = vsel %vm1714, %v3730, 0
      %v3822 = vsel %vm1714, %v3731, 0
      %v3825 = vsel %vm1714, %v3732, 0
      %v3828 = vsel %vm1714, %v3733, 0
      %v3831 = vsel %vm1714, %v3734, 0
      %v3834 = vsel %vm1714, %v3735, 0
      %v3837 = vsel %vm1714, %v3736, 0
      %v3840 = vsel %vm1811, %v266, 0
      %3842 = vmatprep.subr.mxu0 0.0
      %3843 = vmatpush1.msra.mxu0 0.0
      %3844 = vmatprep.subr.mxu0 0.0
      %3845 = vmatpush1.msra.mxu0 0.0
      %3846 = vmatprep.subr.mxu0 0.0
      %3847 = vmatpush1.msra.mxu0 0.0
      %3848 = vmatprep.subr.mxu0 0.0
      %3849 = vmatpush1.msra.mxu0 0.0
      %3850 = vmatprep.subr.mxu0 0.0
      %3851 = vmatpush1.msra.mxu0 0.0
      %3852 = vmatprep.subr.mxu0 0.0
      %3853 = vmatpush1.msra.mxu0 0.0
      %3854 = vmatprep.subr.mxu0 0.0
      %3855 = vmatpush1.msra.mxu0 0.0
      %3856 = vmatprep.subr.mxu0 0.0
      %3857 = vmatpush1.msra.mxu0 0.0
      %3858 = vmatprep.subr.mxu0 0.0
      %3859 = vmatpush1.msra.mxu0 0.0
      %3860 = vmatprep.subr.mxu0 0.0
      %3861 = vmatpush1.msra.mxu0 0.0
      %3862 = vmatprep.subr.mxu0 0.0
      %3863 = vmatpush1.msra.mxu0 0.0
      %3864 = vmatprep.subr.mxu0 0.0
      %3865 = vmatpush1.msra.mxu0 %v3840
      %3866 = vmatprep.subr.mxu0 0.0
      %3867 = vmatpush1.msra.mxu0 %v265
      %3868 = vmatprep.subr.mxu0 0.0
      %3869 = vmatpush1.msra.mxu0 %v264
      %3870 = vmatprep.subr.mxu0 0.0
      %3871 = vmatpush1.msra.mxu0 %v263
      %3872 = vmatprep.subr.mxu0 0.0
      %3873 = vmatpush1.msra.mxu0 %v262
      %3874 = vmatprep.subr.mxu0 0.0
      %3875 = vmatpush2.msra.mxu0 0.0
      %3876 = vmatprep.subr.mxu0 0.0
      %3877 = vmatpush2.msra.mxu0 0.0
      %3878 = vmatprep.subr.mxu0 0.0
      %3879 = vmatpush2.msra.mxu0 0.0
      %3880 = vmatprep.subr.mxu0 0.0
      %3881 = vmatpush2.msra.mxu0 0.0
      %3882 = vmatprep.subr.mxu0 0.0
      %3883 = vmatpush2.msra.mxu0 0.0
      %3884 = vmatprep.subr.mxu0 0.0
      %3885 = vmatpush2.msra.mxu0 0.0
      %3886 = vmatprep.subr.mxu0 0.0
      %3887 = vmatpush2.msra.mxu0 0.0
      %3888 = vmatprep.subr.mxu0 0.0
      %3889 = vmatpush2.msra.mxu0 0.0
      %3890 = vmatprep.subr.mxu0 0.0
      %3891 = vmatpush2.msra.mxu0 0.0
      %3892 = vmatprep.subr.mxu0 0.0
      %3893 = vmatpush2.msra.mxu0 0.0
      %3894 = vmatprep.subr.mxu0 0.0
      %3895 = vmatpush2.msra.mxu0 0.0
      %3896 = vmatprep.subr.mxu0 0.0
      %3897 = vmatpush2.msra.mxu0 0.0
      %3898 = vmatprep.subr.mxu0 0.0
      %3899 = vmatpush2.msra.mxu0 0.0
      %3900 = vmatprep.subr.mxu0 0.0
      %3901 = vmatpush2.msra.mxu0 0.0
      %3902 = vmatprep.subr.mxu0 0.0
      %3903 = vmatpush2.msra.mxu0 0.0
      %3904 = vmatprep.subr.mxu0 0.0
      %3905 = vmatpush2.msra.mxu0 0.0
      %3906 = vmatprep.mubr.f32.mxu0 0.0
      %3907 = vmatmul.mubr.f32.gmra.mxu0 %v3744
      %v3908 = vpop.f32.mrf.mxu0
      %v3909 = vadd.f32 %v3741, %v3908
      %v3910 = vpop.f32.mrf.mxu0
      %3911 = vmatprep.mubr.f32.mxu0 0.0
      %3912 = vmatmul.mubr.f32.gmra.mxu0 %v3747
      %v3913 = vpop.f32.mrf.mxu0
      %v3914 = vadd.f32 %v3741, %v3913
      %v3915 = vpop.f32.mrf.mxu0
      %3916 = vmatprep.mubr.f32.mxu0 0.0
      %3917 = vmatmul.mubr.f32.gmra.mxu0 %v3750
      %v3918 = vpop.f32.mrf.mxu0
      %v3919 = vadd.f32 %v3741, %v3918
      %v3920 = vpop.f32.mrf.mxu0
      %3921 = vmatprep.mubr.f32.mxu0 0.0
      %3922 = vmatmul.mubr.f32.gmra.mxu0 %v3753
      %v3923 = vpop.f32.mrf.mxu0
      %v3924 = vadd.f32 %v3741, %v3923
      %v3925 = vpop.f32.mrf.mxu0
      %3926 = vmatprep.mubr.f32.mxu0 0.0
      %3927 = vmatmul.mubr.f32.gmra.mxu0 %v3756
      %v3928 = vpop.f32.mrf.mxu0
      %v3929 = vadd.f32 %v3741, %v3928
      %v3930 = vpop.f32.mrf.mxu0
      %3931 = vmatprep.mubr.f32.mxu0 0.0
      %3932 = vmatmul.mubr.f32.gmra.mxu0 %v3759
      %v3933 = vpop.f32.mrf.mxu0
      %v3934 = vadd.f32 %v3741, %v3933
      %v3935 = vpop.f32.mrf.mxu0
      %3936 = vmatprep.mubr.f32.mxu0 0.0
      %3937 = vmatmul.mubr.f32.gmra.mxu0 %v3762
      %v3938 = vpop.f32.mrf.mxu0
      %v3939 = vadd.f32 %v3741, %v3938
      %v3940 = vpop.f32.mrf.mxu0
      %3941 = vmatprep.mubr.f32.mxu0 0.0
      %3942 = vmatmul.mubr.f32.gmra.mxu0 %v3765
      %v3943 = vpop.f32.mrf.mxu0
      %v3944 = vadd.f32 %v3741, %v3943
      %v3945 = vpop.f32.mrf.mxu0
      %3946 = vmatprep.mubr.f32.mxu0 0.0
      %3947 = vmatmul.mubr.f32.gmra.mxu0 %v3768
      %v3948 = vpop.f32.mrf.mxu0
      %v3949 = vadd.f32 %v3741, %v3948
      %v3950 = vpop.f32.mrf.mxu0
      %3951 = vmatprep.mubr.f32.mxu0 0.0
      %3952 = vmatmul.mubr.f32.gmra.mxu0 %v3771
      %v3953 = vpop.f32.mrf.mxu0
      %v3954 = vadd.f32 %v3741, %v3953
      %v3955 = vpop.f32.mrf.mxu0
      %3956 = vmatprep.mubr.f32.mxu0 0.0
      %3957 = vmatmul.mubr.f32.gmra.mxu0 %v3774
      %v3958 = vpop.f32.mrf.mxu0
      %v3959 = vadd.f32 %v3741, %v3958
      %v3960 = vpop.f32.mrf.mxu0
      %3961 = vmatprep.mubr.f32.mxu0 0.0
      %3962 = vmatmul.mubr.f32.gmra.mxu0 %v3777
      %v3963 = vpop.f32.mrf.mxu0
      %v3964 = vadd.f32 %v3741, %v3963
      %v3965 = vpop.f32.mrf.mxu0
      %3966 = vmatprep.mubr.f32.mxu0 0.0
      %3967 = vmatmul.mubr.f32.gmra.mxu0 %v3780
      %v3968 = vpop.f32.mrf.mxu0
      %v3969 = vadd.f32 %v3741, %v3968
      %v3970 = vpop.f32.mrf.mxu0
      %3971 = vmatprep.mubr.f32.mxu0 0.0
      %3972 = vmatmul.mubr.f32.gmra.mxu0 %v3783
      %v3973 = vpop.f32.mrf.mxu0
      %v3974 = vadd.f32 %v3741, %v3973
      %v3975 = vpop.f32.mrf.mxu0
      %3976 = vmatprep.mubr.f32.mxu0 0.0
      %3977 = vmatmul.mubr.f32.gmra.mxu0 %v3786
      %v3978 = vpop.f32.mrf.mxu0
      %v3979 = vadd.f32 %v3741, %v3978
      %v3980 = vpop.f32.mrf.mxu0
      %3981 = vmatprep.mubr.f32.mxu0 0.0
      %3982 = vmatmul.mubr.f32.gmra.mxu0 %v3789
      %v3983 = vpop.f32.mrf.mxu0
      %v3984 = vadd.f32 %v3741, %v3983
      %v3985 = vpop.f32.mrf.mxu0
      %3986 = vmatprep.mubr.f32.mxu0 0.0
      %3987 = vmatmul.mubr.f32.gmra.mxu0 %v3792
      %v3988 = vpop.f32.mrf.mxu0
      %v3989 = vadd.f32 %v3741, %v3988
      %v3990 = vpop.f32.mrf.mxu0
      %3991 = vmatprep.mubr.f32.mxu0 0.0
      %3992 = vmatmul.mubr.f32.gmra.mxu0 %v3795
      %v3993 = vpop.f32.mrf.mxu0
      %v3994 = vadd.f32 %v3741, %v3993
      %v3995 = vpop.f32.mrf.mxu0
      %3996 = vmatprep.mubr.f32.mxu0 0.0
      %3997 = vmatmul.mubr.f32.gmra.mxu0 %v3798
      %v3998 = vpop.f32.mrf.mxu0
      %v3999 = vadd.f32 %v3741, %v3998
      %v4000 = vpop.f32.mrf.mxu0
      %4001 = vmatprep.mubr.f32.mxu0 0.0
      %4002 = vmatmul.mubr.f32.gmra.mxu0 %v3801
      %v4003 = vpop.f32.mrf.mxu0
      %v4004 = vadd.f32 %v3741, %v4003
      %v4005 = vpop.f32.mrf.mxu0
      %4006 = vmatprep.mubr.f32.mxu0 0.0
      %4007 = vmatmul.mubr.f32.gmra.mxu0 %v3804
      %v4008 = vpop.f32.mrf.mxu0
      %v4009 = vadd.f32 %v3741, %v4008
      %v4010 = vpop.f32.mrf.mxu0
      %4011 = vmatprep.mubr.f32.mxu0 0.0
      %4012 = vmatmul.mubr.f32.gmra.mxu0 %v3807
      %v4013 = vpop.f32.mrf.mxu0
      %v4014 = vadd.f32 %v3741, %v4013
      %v4015 = vpop.f32.mrf.mxu0
      %4016 = vmatprep.mubr.f32.mxu0 0.0
      %4017 = vmatmul.mubr.f32.gmra.mxu0 %v3810
      %v4018 = vpop.f32.mrf.mxu0
      %v4019 = vadd.f32 %v3741, %v4018
      %v4020 = vpop.f32.mrf.mxu0
      %4021 = vmatprep.mubr.f32.mxu0 0.0
      %4022 = vmatmul.mubr.f32.gmra.mxu0 %v3813
      %v4023 = vpop.f32.mrf.mxu0
      %v4024 = vadd.f32 %v3741, %v4023
      %v4025 = vpop.f32.mrf.mxu0
      %4026 = vmatprep.mubr.f32.mxu0 0.0
      %4027 = vmatmul.mubr.f32.gmra.mxu0 %v3816
      %v4028 = vpop.f32.mrf.mxu0
      %v4029 = vadd.f32 %v3741, %v4028
      %v4030 = vpop.f32.mrf.mxu0
      %4031 = vmatprep.mubr.f32.mxu0 0.0
      %4032 = vmatmul.mubr.f32.gmra.mxu0 %v3819
      %v4033 = vpop.f32.mrf.mxu0
      %v4034 = vadd.f32 %v3741, %v4033
      %v4035 = vpop.f32.mrf.mxu0
      %4036 = vmatprep.mubr.f32.mxu0 0.0
      %4037 = vmatmul.mubr.f32.gmra.mxu0 %v3822
      %v4038 = vpop.f32.mrf.mxu0
      %v4039 = vadd.f32 %v3741, %v4038
      %v4040 = vpop.f32.mrf.mxu0
      %4041 = vmatprep.mubr.f32.mxu0 0.0
      %4042 = vmatmul.mubr.f32.gmra.mxu0 %v3825
      %v4043 = vpop.f32.mrf.mxu0
      %v4044 = vadd.f32 %v3741, %v4043
      %v4045 = vpop.f32.mrf.mxu0
      %4046 = vmatprep.mubr.f32.mxu0 0.0
      %4047 = vmatmul.mubr.f32.gmra.mxu0 %v3828
      %v4048 = vpop.f32.mrf.mxu0
      %v4049 = vadd.f32 %v3741, %v4048
      %v4050 = vpop.f32.mrf.mxu0
      %4051 = vmatprep.mubr.f32.mxu0 0.0
      %4052 = vmatmul.mubr.f32.gmra.mxu0 %v3831
      %v4053 = vpop.f32.mrf.mxu0
      %v4054 = vadd.f32 %v3741, %v4053
      %v4055 = vpop.f32.mrf.mxu0
      %4056 = vmatprep.mubr.f32.mxu0 0.0
      %4057 = vmatmul.mubr.f32.gmra.mxu0 %v3834
      %v4058 = vpop.f32.mrf.mxu0
      %v4059 = vadd.f32 %v3741, %v4058
      %v4060 = vpop.f32.mrf.mxu0
      %4061 = vmatprep.mubr.f32.mxu0 0.0
      %4062 = vmatmul.mubr.f32.gmra.mxu0 %v3837
      %v4063 = vpop.f32.mrf.mxu0
      %v4064 = vadd.f32 %v3741, %v4063
      %v4065 = vpop.f32.mrf.mxu0
      %4066 = vdwg.mxu0
      %v4067 = vsel %vm270, %v3909, 0.0
      %v4068 = vsel %vm270, %v3914, 0.0
      %v4069 = vadd.f32 %v4067, %v4068
      %v4070 = vsel %vm270, %v3919, 0.0
      %v4071 = vadd.f32 %v4069, %v4070
      %v4072 = vsel %vm270, %v3924, 0.0
      %v4073 = vadd.f32 %v4071, %v4072
      %v4074 = vsel %vm270, %v3929, 0.0
      %v4075 = vadd.f32 %v4073, %v4074
      %v4076 = vsel %vm270, %v3934, 0.0
      %v4077 = vadd.f32 %v4075, %v4076
      %v4078 = vsel %vm270, %v3939, 0.0
      %v4079 = vadd.f32 %v4077, %v4078
      %v4080 = vsel %vm270, %v3944, 0.0
      %v4081 = vadd.f32 %v4079, %v4080
      %v4082 = vsel %vm270, %v3949, 0.0
      %v4083 = vadd.f32 %v4081, %v4082
      %v4084 = vsel %vm270, %v3954, 0.0
      %v4085 = vadd.f32 %v4083, %v4084
      %v4086 = vsel %vm270, %v3959, 0.0
      %v4087 = vadd.f32 %v4085, %v4086
      %v4088 = vsel %vm270, %v3964, 0.0
      %v4089 = vadd.f32 %v4087, %v4088
      %v4090 = vsel %vm270, %v3969, 0.0
      %v4091 = vadd.f32 %v4089, %v4090
      %v4092 = vsel %vm270, %v3974, 0.0
      %v4093 = vadd.f32 %v4091, %v4092
      %v4094 = vsel %vm270, %v3979, 0.0
      %v4095 = vadd.f32 %v4093, %v4094
      %v4096 = vsel %vm270, %v3984, 0.0
      %v4097 = vadd.f32 %v4095, %v4096
      %v4098 = vsel %vm270, %v3989, 0.0
      %v4099 = vadd.f32 %v4097, %v4098
      %v4100 = vsel %vm270, %v3994, 0.0
      %v4101 = vadd.f32 %v4099, %v4100
      %v4102 = vsel %vm270, %v3999, 0.0
      %v4103 = vadd.f32 %v4101, %v4102
      %v4104 = vsel %vm270, %v4004, 0.0
      %v4105 = vadd.f32 %v4103, %v4104
      %v4106 = vsel %vm270, %v4009, 0.0
      %v4107 = vadd.f32 %v4105, %v4106
      %v4108 = vsel %vm270, %v4014, 0.0
      %v4109 = vadd.f32 %v4107, %v4108
      %v4110 = vsel %vm270, %v4019, 0.0
      %v4111 = vadd.f32 %v4109, %v4110
      %v4112 = vsel %vm270, %v4024, 0.0
      %v4113 = vadd.f32 %v4111, %v4112
      %v4114 = vsel %vm270, %v4029, 0.0
      %v4115 = vadd.f32 %v4113, %v4114
      %v4116 = vsel %vm270, %v4034, 0.0
      %v4117 = vadd.f32 %v4115, %v4116
      %v4118 = vsel %vm270, %v4039, 0.0
      %v4119 = vadd.f32 %v4117, %v4118
      %v4120 = vsel %vm270, %v4044, 0.0
      %v4121 = vadd.f32 %v4119, %v4120
      %v4122 = vsel %vm270, %v4049, 0.0
      %v4123 = vadd.f32 %v4121, %v4122
      %v4124 = vsel %vm270, %v4054, 0.0
      %v4125 = vadd.f32 %v4123, %v4124
      %v4126 = vsel %vm270, %v4059, 0.0
      %v4127 = vadd.f32 %v4125, %v4126
      %v4128 = vsel %vm270, %v4064, 0.0
      %v4129 = vadd.f32 %v4127, %v4128
      %v4130 = vrot.slane %v4129, 4
      %v4131 = vadd.f32 %v4129, %v4130
      %v4132 = vrot.slane %v4131, 2
      %v4133 = vadd.f32 %v4131, %v4132
      %v4134 = vrot.slane %v4133, 1
      %v4135 = vadd.f32 %v4133, %v4134
      %v4136 = vmul.f32 %v4135, %v2109
      %v4137 = vmul.f32 %v3909, %v3909
      %v4138 = vmul.f32 %v3914, %v3914
      %v4139 = vmul.f32 %v3919, %v3919
      %v4140 = vmul.f32 %v3924, %v3924
      %v4141 = vmul.f32 %v3929, %v3929
      %v4142 = vmul.f32 %v3934, %v3934
      %v4143 = vmul.f32 %v3939, %v3939
      %v4144 = vmul.f32 %v3944, %v3944
      %v4145 = vmul.f32 %v3949, %v3949
      %v4146 = vmul.f32 %v3954, %v3954
      %v4147 = vmul.f32 %v3959, %v3959
      %v4148 = vmul.f32 %v3964, %v3964
      %v4149 = vmul.f32 %v3969, %v3969
      %v4150 = vmul.f32 %v3974, %v3974
      %v4151 = vmul.f32 %v3979, %v3979
      %v4152 = vmul.f32 %v3984, %v3984
      %v4153 = vmul.f32 %v3989, %v3989
      %v4154 = vmul.f32 %v3994, %v3994
      %v4155 = vmul.f32 %v3999, %v3999
      %v4156 = vmul.f32 %v4004, %v4004
      %v4157 = vmul.f32 %v4009, %v4009
      %v4158 = vmul.f32 %v4014, %v4014
      %v4159 = vmul.f32 %v4019, %v4019
      %v4160 = vmul.f32 %v4024, %v4024
      %v4161 = vmul.f32 %v4029, %v4029
      %v4162 = vmul.f32 %v4034, %v4034
      %v4163 = vmul.f32 %v4039, %v4039
      %v4164 = vmul.f32 %v4044, %v4044
      %v4165 = vmul.f32 %v4049, %v4049
      %v4166 = vmul.f32 %v4054, %v4054
      %v4167 = vmul.f32 %v4059, %v4059
      %v4168 = vmul.f32 %v4064, %v4064
      %v4169 = vsel %vm270, %v4137, 0.0
      %v4170 = vsel %vm270, %v4138, 0.0
      %v4171 = vadd.f32 %v4169, %v4170
      %v4172 = vsel %vm270, %v4139, 0.0
      %v4173 = vadd.f32 %v4171, %v4172
      %v4174 = vsel %vm270, %v4140, 0.0
      %v4175 = vadd.f32 %v4173, %v4174
      %v4176 = vsel %vm270, %v4141, 0.0
      %v4177 = vadd.f32 %v4175, %v4176
      %v4178 = vsel %vm270, %v4142, 0.0
      %v4179 = vadd.f32 %v4177, %v4178
      %v4180 = vsel %vm270, %v4143, 0.0
      %v4181 = vadd.f32 %v4179, %v4180
      %v4182 = vsel %vm270, %v4144, 0.0
      %v4183 = vadd.f32 %v4181, %v4182
      %v4184 = vsel %vm270, %v4145, 0.0
      %v4185 = vadd.f32 %v4183, %v4184
      %v4186 = vsel %vm270, %v4146, 0.0
      %v4187 = vadd.f32 %v4185, %v4186
      %v4188 = vsel %vm270, %v4147, 0.0
      %v4189 = vadd.f32 %v4187, %v4188
      %v4190 = vsel %vm270, %v4148, 0.0
      %v4191 = vadd.f32 %v4189, %v4190
      %v4192 = vsel %vm270, %v4149, 0.0
      %v4193 = vadd.f32 %v4191, %v4192
      %v4194 = vsel %vm270, %v4150, 0.0
      %v4195 = vadd.f32 %v4193, %v4194
      %v4196 = vsel %vm270, %v4151, 0.0
      %v4197 = vadd.f32 %v4195, %v4196
      %v4198 = vsel %vm270, %v4152, 0.0
      %v4199 = vadd.f32 %v4197, %v4198
      %v4200 = vsel %vm270, %v4153, 0.0
      %v4201 = vadd.f32 %v4199, %v4200
      %v4202 = vsel %vm270, %v4154, 0.0
      %v4203 = vadd.f32 %v4201, %v4202
      %v4204 = vsel %vm270, %v4155, 0.0
      %v4205 = vadd.f32 %v4203, %v4204
      %v4206 = vsel %vm270, %v4156, 0.0
      %v4207 = vadd.f32 %v4205, %v4206
      %v4208 = vsel %vm270, %v4157, 0.0
      %v4209 = vadd.f32 %v4207, %v4208
      %v4210 = vsel %vm270, %v4158, 0.0
      %v4211 = vadd.f32 %v4209, %v4210
      %v4212 = vsel %vm270, %v4159, 0.0
      %v4213 = vadd.f32 %v4211, %v4212
      %v4214 = vsel %vm270, %v4160, 0.0
      %v4215 = vadd.f32 %v4213, %v4214
      %v4216 = vsel %vm270, %v4161, 0.0
      %v4217 = vadd.f32 %v4215, %v4216
      %v4218 = vsel %vm270, %v4162, 0.0
      %v4219 = vadd.f32 %v4217, %v4218
      %v4220 = vsel %vm270, %v4163, 0.0
      %v4221 = vadd.f32 %v4219, %v4220
      %v4222 = vsel %vm270, %v4164, 0.0
      %v4223 = vadd.f32 %v4221, %v4222
      %v4224 = vsel %vm270, %v4165, 0.0
      %v4225 = vadd.f32 %v4223, %v4224
      %v4226 = vsel %vm270, %v4166, 0.0
      %v4227 = vadd.f32 %v4225, %v4226
      %v4228 = vsel %vm270, %v4167, 0.0
      %v4229 = vadd.f32 %v4227, %v4228
      %v4230 = vsel %vm270, %v4168, 0.0
      %v4231 = vadd.f32 %v4229, %v4230
      %v4232 = vrot.slane %v4231, 4
      %v4233 = vadd.f32 %v4231, %v4232
      %v4234 = vrot.slane %v4233, 2
      %v4235 = vadd.f32 %v4233, %v4234
      %v4236 = vrot.slane %v4235, 1
      %v4237 = vadd.f32 %v4235, %v4236
      %v4238 = vmul.f32 %v4237, %v2109
      %v4239 = vmul.f32 %v4136, %v4136
      %v4240 = vsub.f32 %v4238, %v4239
      %v4241 = vsub.f32 %v3909, %v4136
      %v4242 = vsub.f32 %v3914, %v4136
      %v4243 = vsub.f32 %v3919, %v4136
      %v4244 = vsub.f32 %v3924, %v4136
      %v4245 = vsub.f32 %v3929, %v4136
      %v4246 = vsub.f32 %v3934, %v4136
      %v4247 = vsub.f32 %v3939, %v4136
      %v4248 = vsub.f32 %v3944, %v4136
      %v4249 = vsub.f32 %v3949, %v4136
      %v4250 = vsub.f32 %v3954, %v4136
      %v4251 = vsub.f32 %v3959, %v4136
      %v4252 = vsub.f32 %v3964, %v4136
      %v4253 = vsub.f32 %v3969, %v4136
      %v4254 = vsub.f32 %v3974, %v4136
      %v4255 = vsub.f32 %v3979, %v4136
      %v4256 = vsub.f32 %v3984, %v4136
      %v4257 = vsub.f32 %v3989, %v4136
      %v4258 = vsub.f32 %v3994, %v4136
      %v4259 = vsub.f32 %v3999, %v4136
      %v4260 = vsub.f32 %v4004, %v4136
      %v4261 = vsub.f32 %v4009, %v4136
      %v4262 = vsub.f32 %v4014, %v4136
      %v4263 = vsub.f32 %v4019, %v4136
      %v4264 = vsub.f32 %v4024, %v4136
      %v4265 = vsub.f32 %v4029, %v4136
      %v4266 = vsub.f32 %v4034, %v4136
      %v4267 = vsub.f32 %v4039, %v4136
      %v4268 = vsub.f32 %v4044, %v4136
      %v4269 = vsub.f32 %v4049, %v4136
      %v4270 = vsub.f32 %v4054, %v4136
      %v4271 = vsub.f32 %v4059, %v4136
      %v4272 = vsub.f32 %v4064, %v4136
      %v4273 = vadd.f32 %v4240, 1e-05
      %v4274 = vrsqrt.pop %v4273
      %v4275 = vmul.f32 %v4241, %v4274
      %v4276 = vmul.f32 %v4242, %v4274
      %v4277 = vmul.f32 %v4243, %v4274
      %v4278 = vmul.f32 %v4244, %v4274
      %v4279 = vmul.f32 %v4245, %v4274
      %v4280 = vmul.f32 %v4246, %v4274
      %v4281 = vmul.f32 %v4247, %v4274
      %v4282 = vmul.f32 %v4248, %v4274
      %v4283 = vmul.f32 %v4249, %v4274
      %v4284 = vmul.f32 %v4250, %v4274
      %v4285 = vmul.f32 %v4251, %v4274
      %v4286 = vmul.f32 %v4252, %v4274
      %v4287 = vmul.f32 %v4253, %v4274
      %v4288 = vmul.f32 %v4254, %v4274
      %v4289 = vmul.f32 %v4255, %v4274
      %v4290 = vmul.f32 %v4256, %v4274
      %v4291 = vmul.f32 %v4257, %v4274
      %v4292 = vmul.f32 %v4258, %v4274
      %v4293 = vmul.f32 %v4259, %v4274
      %v4294 = vmul.f32 %v4260, %v4274
      %v4295 = vmul.f32 %v4261, %v4274
      %v4296 = vmul.f32 %v4262, %v4274
      %v4297 = vmul.f32 %v4263, %v4274
      %v4298 = vmul.f32 %v4264, %v4274
      %v4299 = vmul.f32 %v4265, %v4274
      %v4300 = vmul.f32 %v4266, %v4274
      %v4301 = vmul.f32 %v4267, %v4274
      %v4302 = vmul.f32 %v4268, %v4274
      %v4303 = vmul.f32 %v4269, %v4274
      %v4304 = vmul.f32 %v4270, %v4274
      %v4305 = vmul.f32 %v4271, %v4274
      %v4306 = vmul.f32 %v4272, %v4274
      %v4307 = vadd.f32 %v4275, %v225
      %v4308 = vadd.f32 %v4276, %v226
      %v4309 = vadd.f32 %v4277, %v227
      %v4310 = vadd.f32 %v4278, %v228
      %v4311 = vadd.f32 %v4279, %v229
      %v4312 = vadd.f32 %v4280, %v230
      %v4313 = vadd.f32 %v4281, %v231
      %v4314 = vadd.f32 %v4282, %v232
      %v4315 = vadd.f32 %v4283, %v233
      %v4316 = vadd.f32 %v4284, %v234
      %v4317 = vadd.f32 %v4285, %v235
      %v4318 = vadd.f32 %v4286, %v236
      %v4319 = vadd.f32 %v4287, %v237
      %v4320 = vadd.f32 %v4288, %v238
      %v4321 = vadd.f32 %v4289, %v239
      %v4322 = vadd.f32 %v4290, %v240
      %v4323 = vadd.f32 %v4291, %v241
      %v4324 = vadd.f32 %v4292, %v242
      %v4325 = vadd.f32 %v4293, %v243
      %v4326 = vadd.f32 %v4294, %v244
      %v4327 = vadd.f32 %v4295, %v245
      %v4328 = vadd.f32 %v4296, %v246
      %v4329 = vadd.f32 %v4297, %v247
      %v4330 = vadd.f32 %v4298, %v248
      %v4331 = vadd.f32 %v4299, %v249
      %v4332 = vadd.f32 %v4300, %v250
      %v4333 = vadd.f32 %v4301, %v251
      %v4334 = vadd.f32 %v4302, %v252
      %v4335 = vadd.f32 %v4303, %v253
      %v4336 = vadd.f32 %v4304, %v254
      %v4337 = vadd.f32 %v4305, %v255
      %v4338 = vadd.f32 %v4306, %v256
      %4339 = vst.msk [vmem:[%s224] sm:$0xff] %vm270, %v4307
      %4340 = vst.msk [vmem:[%s224 + $0x8] sm:$0xff] %vm270, %v4308
      %4341 = vst.msk [vmem:[%s224 + $0x10] sm:$0xff] %vm270, %v4309
      %4342 = vst.msk [vmem:[%s224 + $0x18] sm:$0xff] %vm270, %v4310
      %4343 = vst.msk [vmem:[%s224 + $0x20] sm:$0xff] %vm270, %v4311
      %4344 = vst.msk [vmem:[%s224 + $0x28] sm:$0xff] %vm270, %v4312
      %4345 = vst.msk [vmem:[%s224 + $0x30] sm:$0xff] %vm270, %v4313
      %4346 = vst.msk [vmem:[%s224 + $0x38] sm:$0xff] %vm270, %v4314
      %4347 = vst.msk [vmem:[%s224 + $0x40] sm:$0xff] %vm270, %v4315
      %4348 = vst.msk [vmem:[%s224 + $0x48] sm:$0xff] %vm270, %v4316
      %4349 = vst.msk [vmem:[%s224 + $0x50] sm:$0xff] %vm270, %v4317
      %4350 = vst.msk [vmem:[%s224 + $0x58] sm:$0xff] %vm270, %v4318
      %4351 = vst.msk [vmem:[%s224 + $0x60] sm:$0xff] %vm270, %v4319
      %4352 = vst.msk [vmem:[%s224 + $0x68] sm:$0xff] %vm270, %v4320
      %4353 = vst.msk [vmem:[%s224 + $0x70] sm:$0xff] %vm270, %v4321
      %4354 = vst.msk [vmem:[%s224 + $0x78] sm:$0xff] %vm270, %v4322
      %4355 = vst.msk [vmem:[%s224 + $0x80] sm:$0xff] %vm270, %v4323
      %4356 = vst.msk [vmem:[%s224 + $0x88] sm:$0xff] %vm270, %v4324
      %4357 = vst.msk [vmem:[%s224 + $0x90] sm:$0xff] %vm270, %v4325
      %4358 = vst.msk [vmem:[%s224 + $0x98] sm:$0xff] %vm270, %v4326
      %4359 = vst.msk [vmem:[%s224 + $0xa0] sm:$0xff] %vm270, %v4327
      %4360 = vst.msk [vmem:[%s224 + $0xa8] sm:$0xff] %vm270, %v4328
      %4361 = vst.msk [vmem:[%s224 + $0xb0] sm:$0xff] %vm270, %v4329
      %4362 = vst.msk [vmem:[%s224 + $0xb8] sm:$0xff] %vm270, %v4330
      %4363 = vst.msk [vmem:[%s224 + $0xc0] sm:$0xff] %vm270, %v4331
      %4364 = vst.msk [vmem:[%s224 + $0xc8] sm:$0xff] %vm270, %v4332
      %4365 = vst.msk [vmem:[%s224 + $0xd0] sm:$0xff] %vm270, %v4333
      %4366 = vst.msk [vmem:[%s224 + $0xd8] sm:$0xff] %vm270, %v4334
      %4367 = vst.msk [vmem:[%s224 + $0xe0] sm:$0xff] %vm270, %v4335
      %4368 = vst.msk [vmem:[%s224 + $0xe8] sm:$0xff] %vm270, %v4336
      %4369 = vst.msk [vmem:[%s224 + $0xf0] sm:$0xff] %vm270, %v4337
      %4370 = vst.msk [vmem:[%s224 + $0xf8] sm:$0xff] %vm270, %v4338
      %p4371 = scmp.lt.s32.totalorder %s16, 1
      %s4372 = scalar_select %p4371, %s16, 1
      %s4373 = smul.addr %s4372, 32
      %s4374 = smul.addr %s4373, 8
      %s4375 = scalar_lea.vmem %s5, %s4374
      // Predicated region
      $region41: #{tpu_custom_call.1} parent=39 // pred_check
        %p4376 = pneg %p144
      $region42: #{tpu_custom_call.1} parent=39 // pred_check_branch
        %4378 = sbr.rel (%p4376) target = $region44
      $region43: #{tpu_custom_call.1} parent=39 // pred_region
        _
      $region44: #{tpu_custom_call.1} parent=39 // pred_fallthru
        _
    $region40: #{tpu_custom_call.1} parent=5 // pred_fallthru
      _
    %p4379 = scmp.le.s32.totalorder 2, %s11
    // Predicated region
    $region45: #{tpu_custom_call.1} parent=5 // pred_check
      %p4380 = pneg %p4379
    $region46: #{tpu_custom_call.1} parent=5 // pred_check_branch
      %4382 = sbr.rel (%p4380) target = $region48
    $region47: #{tpu_custom_call.1} parent=5 // pred_region
      %s4383 = ssub.s32 %s11, 2
      // Predicated region
      $region49: #{tpu_custom_call.1} parent=47 // pred_check
        %p4384 = pneg %p150
      $region50: #{tpu_custom_call.1} parent=47 // pred_check_branch
        %4386 = sbr.rel (%p4384) target = $region52
      $region51: #{tpu_custom_call.1} parent=47 // pred_region
        %p4387 = scmp.lt.s32.totalorder %s17, 1
        %s4388 = scalar_select %p4387, %s17, 1
        %s4389 = smul.addr %s4388, 32
        %s4390 = smul.addr %s4389, 8
        %s4391 = scalar_lea.vmem %s5, %s4390
      $region52: #{tpu_custom_call.1} parent=47 // pred_fallthru
        _
    $region48: #{tpu_custom_call.1} parent=5 // pred_fallthru
      _
  $region6: #{tpu_custom_call.1} parent=0 // loop_footer
    %s15 = sadd.s32 1, %s11
  $region7: #{tpu_custom_call.1} parent=0 // loop_footer_branch
    %10 = sbr.rel target = $region3
  $region8: #{tpu_custom_call.1} parent=0 // loop_exit
    _

</llo_original>
